<compile_context>
chip_gen: v7x
topology: tpu7x:2x2x1
jax: 0.10.0
libtpu: 0.0.40
codegen_flags: <defaults>
</compile_context>

<pallas_src>
import functools

import jax
import jax.numpy as jnp
from jax.experimental import pallas as pl
from jax.experimental.pallas import tpu as pltpu


def opt_attention_kernel(h_ref, wq_ref, wk_ref, wv_ref, wo_ref,
                         bq_ref, bk_ref, bv_ref, bo_ref,
                         out_ref, head_out_ref,
                         k_scr, v_scr,
                         *, num_heads, head_dim, scaling, k_keep,
                         q_tile, kv_chunk, n_kv_chunks, approx_recip):
    H, Dh = num_heads, head_dim
    T = k_scr.shape[1]
    E = H * Dh
    qt = pl.program_id(1)

    # ---- K/V projection: once per batch row, chunked over T, cached head-major
    #      (H, T, Dh) in bf16 VMEM scratch (lane-split relayout done ONCE). ----
    @pl.when(qt == 0)
    def _():
        def project_chunk(c):
            if isinstance(c, int):
                r0 = c * kv_chunk
            else:
                r0 = pl.multiple_of(c * kv_chunk, kv_chunk)
            x_c = h_ref[0, pl.ds(r0, kv_chunk), :]                 # (ck, E) bf16
            k_c = jnp.dot(x_c, wk_ref[...],
                          preferred_element_type=jnp.float32) + bk_ref[...]
            v_c = jnp.dot(x_c, wv_ref[...],
                          preferred_element_type=jnp.float32) + bv_ref[...]
            k_h = k_c.astype(k_scr.dtype).reshape(kv_chunk, H, Dh)
            v_h = v_c.astype(v_scr.dtype).reshape(kv_chunk, H, Dh)
            k_scr[:, pl.ds(r0, kv_chunk), :] = jnp.transpose(k_h, (1, 0, 2))
            v_scr[:, pl.ds(r0, kv_chunk), :] = jnp.transpose(v_h, (1, 0, 2))

        if n_kv_chunks == 1:
            project_chunk(0)
        else:
            def body(c, carry):
                project_chunk(c)
                return carry
            jax.lax.fori_loop(0, n_kv_chunks, body, 0)

    # ---- Q projection for this query tile only. ----
    row0 = pl.multiple_of(qt * q_tile, q_tile)
    xq = h_ref[0, pl.ds(row0, q_tile), :]                          # (tq, E) bf16
    q = (jnp.dot(xq, wq_ref[...], preferred_element_type=jnp.float32)
         + bq_ref[...]) * scaling                                  # (tq, E) f32

    # ---- Head-batched attention (bf16 MXU operands, f32 accumulation). ----
    qh = q.astype(jnp.bfloat16).reshape(q_tile, H, Dh)             # (tq, H, Dh)
    kh = k_scr[...]                                                # (H, T, Dh)
    vh = v_scr[...]                                                # (H, T, Dh)

    s = jnp.einsum('qhd,hkd->hqk', qh, kh,
                   preferred_element_type=jnp.float32)             # (H, tq, T)
    m = jnp.max(s, axis=-1, keepdims=True)                         # (H, tq, 1)
    e = jnp.exp(s - m)                                             # (H, tq, T) f32
    l = jnp.sum(e, axis=-1, keepdims=True)                         # (H, tq, 1) f32

    # PV matmul emits (q, h, d) directly -> no separate f32 accumulator transpose.
    o_u = jnp.einsum('hqk,hkd->qhd', e.astype(jnp.bfloat16), vh,
                     preferred_element_type=jnp.float32)           # (tq, H, Dh)

    l_t = l[:, :, 0].T                                             # (tq, H) f32
    if approx_recip:
        inv_l = pl.reciprocal(l_t, approx=True)                    # EUP slot
    else:
        inv_l = 1.0 / l_t
    o = o_u * inv_l[:, :, None]                                    # (tq, H, Dh)
    head_out_ref[0] = o.reshape(q_tile, E).astype(head_out_ref.dtype)

    # Ranking statistic (squared L2 norms of normalized head outputs); exact
    # divide so the top-k selection matches the reference.
    rank = jnp.sum(o_u * o_u, axis=-1) / (l_t * l_t)               # (tq, H)

    # ---- Per-token top-k head selection (ties broken toward lower head idx). ----
    i_mine = jax.lax.broadcasted_iota(jnp.int32, (H, H), 0)
    i_other = jax.lax.broadcasted_iota(jnp.int32, (H, H), 1)
    other = rank[:, None, :]                                       # (tq, 1, H)
    mine = rank[:, :, None]                                        # (tq, H, 1)
    above = (other > mine) | ((other == mine) & (i_other < i_mine)[None])
    cnt = jnp.sum(above.astype(jnp.float32), axis=-1)              # (tq, H)
    keep = (cnt < float(k_keep)).astype(jnp.float32)               # (tq, H)

    # ---- Slab-wide head mask + out_proj (lane-dense (tq, E)). ----
    masked = (o * keep[:, :, None]).reshape(q_tile, E)             # (tq, E)
    y = jnp.dot(masked.astype(jnp.bfloat16), wo_ref[...],
                preferred_element_type=jnp.float32) + bo_ref[...]
    out_ref[0] = y.astype(out_ref.dtype)


def opt_attention(hidden, wq, wk, wv, wo, bq, bk, bv, bo,
                  *, num_heads, sp_threshold, out_dtype=None,
                  approx_softmax_recip=True):
    B, T, E = hidden.shape
    H = num_heads
    assert E % H == 0
    Dh = E // H
    scaling = Dh ** (-0.5)
    k_keep = max(int(sp_threshold * H), 1)
    out_dtype = hidden.dtype if out_dtype is None else out_dtype
    out_bytes = jnp.dtype(out_dtype).itemsize

    # ---- Query tile: bounded by a VMEM budget for the (H, q_tile, T) f32
    #      score/exp temporaries (~3 live copies), not just divisibility. ----
    score_budget = 16 << 20
    q_cap = max(score_budget // (H * T * 12), 8)
    q_tile = T
    for c in (512, 256, 128, 64, 32, 16, 8):
        if c <= q_cap and T % c == 0:
            q_tile = c
            break
    # TODO(synk): pad T (with key masking) instead of falling back to q_tile == T
    # for sequence lengths that are not a multiple of 8.
    n_qt = T // q_tile

    # ---- K/V projection chunk: bounds the f32 projection intermediates. ----
    kv_chunk = T
    for c in (256, 128, 64, 32, 16, 8):
        if T % c == 0:
            kv_chunk = c
            break
    n_kv_chunks = T // kv_chunk

    # bf16 MXU operands; biases and accumulations stay f32.
    h_b = hidden.astype(jnp.bfloat16)
    wq_b, wk_b, wv_b, wo_b = (w.astype(jnp.bfloat16) for w in (wq, wk, wv, wo))
    bq_f, bk_f, bv_f, bo_f = (b.astype(jnp.float32) for b in (bq, bk, bv, bo))

    kern = functools.partial(
        opt_attention_kernel, num_heads=H, head_dim=Dh, scaling=scaling,
        k_keep=k_keep, q_tile=q_tile, kv_chunk=kv_chunk,
        n_kv_chunks=n_kv_chunks, approx_recip=approx_softmax_recip)

    # Grid-invariant weights/biases: whole operand resident in VMEM, single copy
    # (no double-buffered pipelining of constant blocks).
    vmem_full = pl.BlockSpec(memory_space=pltpu.MemorySpace.VMEM)
    row_spec = pl.BlockSpec((1, q_tile, E), lambda b, q: (b, q, 0))

    # ---- Explicit VMEM budget (weights + KV scratch + score block + I/O). ----
    est = (4 * E * E * 2                       # bf16 weights, single buffered
           + 4 * E * 4                         # f32 biases
           + 2 * T * E * 2                     # hidden row block, double buffered
           + 2 * 2 * q_tile * E * out_bytes    # two outputs, double buffered
           + 2 * H * T * Dh * 2                # bf16 K/V scratch
           + 3 * H * q_tile * T * 4            # s / e / bf16(e) temporaries
           + 6 * q_tile * E * 4)               # q / o / masked temporaries
    vmem_limit = max(min(int(1.5 * est) + (8 << 20), 100 << 20), 32 << 20)

    out, head_slab = pl.pallas_call(
        kern,
        out_shape=(jax.ShapeDtypeStruct((B, T, E), out_dtype),
                   jax.ShapeDtypeStruct((B, T, E), out_dtype)),
        grid=(B, n_qt),
        in_specs=[pl.BlockSpec((1, T, E), lambda b, q: (b, 0, 0)),
                  vmem_full, vmem_full, vmem_full, vmem_full,
                  vmem_full, vmem_full, vmem_full, vmem_full],
        out_specs=(row_spec, row_spec),
        scratch_shapes=[pltpu.VMEM((H, T, Dh), jnp.bfloat16),
                        pltpu.VMEM((H, T, Dh), jnp.bfloat16)],
        compiler_params=pltpu.CompilerParams(
            dimension_semantics=("parallel", "arbitrary"),
            vmem_limit_bytes=vmem_limit),
    )(h_b, wq_b, wk_b, wv_b, wo_b, bq_f, bk_f, bv_f, bo_f)

    # Lane-dense slab -> (B, H, T, Dh) attn_head_output view (wrapper reshape).
    head_out = head_slab.reshape(B, T, H, Dh).transpose(0, 2, 1, 3)
    return out, head_out


def reference(hidden, wq, wk, wv, wo, bq, bk, bv, bo, *, num_heads, sp_threshold):
    """Pure-JAX replica of the PyTorch forward (eval mode, no mask), mirroring the
    kernel's bf16 staging so numerics / top-k selection line up."""
    B, T, E = hidden.shape
    H = num_heads
    Dh = E // H
    scaling = Dh ** (-0.5)
    k_keep = max(int(sp_threshold * H), 1)
    hi = jax.lax.Precision.HIGHEST
    f32, bf16 = jnp.float32, jnp.bfloat16

    x = hidden.astype(bf16).astype(f32)
    wqf, wkf, wvf, wof = (w.astype(bf16).astype(f32) for w in (wq, wk, wv, wo))

    q = (jnp.einsum('bte,ef->btf', x, wqf, precision=hi) + bq[0]) * scaling
    k = jnp.einsum('bte,ef->btf', x, wkf, precision=hi) + bk[0]
    v = jnp.einsum('bte,ef->btf', x, wvf, precision=hi) + bv[0]

    # mirror the kernel's bf16 staging of q and the bf16 K/V scratch cache
    qb = q.astype(bf16).astype(f32)
    kb = k.astype(bf16).astype(f32)
    vb = v.astype(bf16).astype(f32)

    qh = qb.reshape(B, T, H, Dh)
    kh = kb.reshape(B, T, H, Dh)
    vh = vb.reshape(B, T, H, Dh)

    s = jnp.einsum('bqhd,bkhd->bhqk', qh, kh, precision=hi)
    m = jnp.max(s, axis=-1, keepdims=True)
    e = jnp.exp(s - m)
    l = jnp.sum(e, axis=-1, keepdims=True)
    eb = e.astype(bf16).astype(f32)
    o_u = jnp.einsum('bhqk,bkhd->bhqd', eb, vh, precision=hi)
    o = o_u / l                                                   # attn_head_output

    rank = jnp.sum(o_u * o_u, axis=-1) / (l[..., 0] * l[..., 0])  # (B, H, T)
    rperm = rank.transpose(0, 2, 1)                               # (B, T, H)
    _, idx = jax.lax.top_k(rperm, k_keep)
    mask = jnp.zeros_like(rperm).at[
        jnp.arange(B)[:, None, None],
        jnp.arange(T)[None, :, None],
        idx].set(1.0)
    mask = mask.transpose(0, 2, 1)[..., None]                     # (B, H, T, 1)
    om = o * mask
    flat = om.transpose(0, 2, 1, 3).reshape(B, T, E)
    flat_b = flat.astype(bf16).astype(f32)
    y = jnp.einsum('bte,ef->btf', flat_b, wof, precision=hi) + bo[0]
    return y, o


if __name__ == "__main__":
    # Small OPT-like config: hidden=128, heads=4 (head_dim=32), batch=2, seq=8.
    B, T, E, H = 2, 8, 128, 4
    sp_threshold = 0.5   # keeps k = max(int(0.5 * 4), 1) = 2 heads per token

    key = jax.random.PRNGKey(0)
    ks = jax.random.split(key, 9)
    hidden = jax.random.normal(ks[0], (B, T, E), jnp.float32)
    wq = jax.random.normal(ks[1], (E, E), jnp.float32) * 0.02
    wk = jax.random.normal(ks[2], (E, E), jnp.float32) * 0.02
    wv = jax.random.normal(ks[3], (E, E), jnp.float32) * 0.02
    wo = jax.random.normal(ks[4], (E, E), jnp.float32) * 0.02
    bq = jax.random.normal(ks[5], (1, E), jnp.float32) * 0.01
    bk = jax.random.normal(ks[6], (1, E), jnp.float32) * 0.01
    bv = jax.random.normal(ks[7], (1, E), jnp.float32) * 0.01
    bo = jax.random.normal(ks[8], (1, E), jnp.float32) * 0.01

    out, head_out = opt_attention(
        hidden, wq, wk, wv, wo, bq, bk, bv, bo,
        num_heads=H, sp_threshold=sp_threshold)
    jax.block_until_ready((out, head_out))

    ref_out, ref_head_out = reference(
        hidden, wq, wk, wv, wo, bq, bk, bv, bo,
        num_heads=H, sp_threshold=sp_threshold)

    assert out.shape == (B, T, E) and head_out.shape == (B, H, T, E // H)
    assert jnp.allclose(out, ref_out, atol=2e-3, rtol=2e-2), "attn_output mismatch"
    assert jnp.allclose(head_out, ref_head_out, atol=2e-3, rtol=2e-2), \
        "attn_head_output mismatch"

    # TODO(synk): attention_mask / layer_head_mask / kv-cache / dropout branches are
    # no-ops in this eval-mode self-attention configuration and are not implemented.
    print("KERNEL_OK")
</pallas_src>

<mosaic_0001>
module attributes {stable_mosaic.version = 11 : i64} {
  func.func @opt_attention_kernel(%arg0: i32, %arg1: i32, %arg2: memref<1x8x128xbf16, #tpu.memory_space<vmem>>, %arg3: memref<128x128xbf16, #tpu.memory_space<vmem>>, %arg4: memref<128x128xbf16, #tpu.memory_space<vmem>>, %arg5: memref<128x128xbf16, #tpu.memory_space<vmem>>, %arg6: memref<128x128xbf16, #tpu.memory_space<vmem>>, %arg7: memref<1x128xf32, #tpu.memory_space<vmem>>, %arg8: memref<1x128xf32, #tpu.memory_space<vmem>>, %arg9: memref<1x128xf32, #tpu.memory_space<vmem>>, %arg10: memref<1x128xf32, #tpu.memory_space<vmem>>, %arg11: memref<1x8x128xf32, #tpu.memory_space<vmem>>, %arg12: memref<1x8x128xf32, #tpu.memory_space<vmem>>, %arg13: memref<4x8x32xbf16, #tpu.memory_space<vmem>>, %arg14: memref<4x8x32xbf16, #tpu.memory_space<vmem>>) attributes {dimension_semantics = [#tpu.dimension_semantics<parallel>, #tpu.dimension_semantics<arbitrary>], iteration_bounds = array<i64: 2, 1>, scalar_prefetch = 0 : i64, scratch_operands = 2 : i64, tpu.core_type = #tpu.core_type<tc>, window_params = [{transform_indices = @transform_0, window_bounds = array<i64: 1, 8, 128>}, {pipeline_mode = #tpu.pipeline_mode<synchronous>, transform_indices = @transform_1, window_bounds = array<i64: 128, 128>}, {pipeline_mode = #tpu.pipeline_mode<synchronous>, transform_indices = @transform_2, window_bounds = array<i64: 128, 128>}, {pipeline_mode = #tpu.pipeline_mode<synchronous>, transform_indices = @transform_3, window_bounds = array<i64: 128, 128>}, {pipeline_mode = #tpu.pipeline_mode<synchronous>, transform_indices = @transform_4, window_bounds = array<i64: 128, 128>}, {pipeline_mode = #tpu.pipeline_mode<synchronous>, transform_indices = @transform_5, window_bounds = array<i64: 1, 128>}, {pipeline_mode = #tpu.pipeline_mode<synchronous>, transform_indices = @transform_6, window_bounds = array<i64: 1, 128>}, {pipeline_mode = #tpu.pipeline_mode<synchronous>, transform_indices = @transform_7, window_bounds = array<i64: 1, 128>}, {pipeline_mode = #tpu.pipeline_mode<synchronous>, transform_indices = @transform_8, window_bounds = array<i64: 1, 128>}, {transform_indices = @transform_9, window_bounds = array<i64: 1, 8, 128>}, {transform_indices = @transform_10, window_bounds = array<i64: 1, 8, 128>}]} {
    %c0_i32 = arith.constant 0 : i32
    %0 = arith.cmpi eq, %arg1, %c0_i32 : i32
    %1 = arith.extui %0 : i1 to i32
    %c0_i32_0 = arith.constant 0 : i32
    %2 = arith.cmpi ne, %1, %c0_i32_0 : i32
    scf.if %2 {
      %c0_31 = arith.constant 0 : index
      %c0_32 = arith.constant 0 : index
      %c0_33 = arith.constant 0 : index
      %79 = vector.load %arg2[%c0_31, %c0_32, %c0_33] : memref<1x8x128xbf16, #tpu.memory_space<vmem>>, vector<1x8x128xbf16>
      %80 = vector.shape_cast %79 : vector<1x8x128xbf16> to vector<8x128xbf16>
      %c0_34 = arith.constant 0 : index
      %c0_35 = arith.constant 0 : index
      %81 = vector.load %arg4[%c0_34, %c0_35] : memref<128x128xbf16, #tpu.memory_space<vmem>>, vector<128x128xbf16>
      %cst_36 = arith.constant dense<0.000000e+00> : vector<8x128xf32>
      %82 = tpu.matmul %80, %81, %cst_36 {dimension_numbers = #tpu.dot_dimension_numbers<[1], [0], [0], [1], [0, 0, 1, 1], [], []>} : vector<8x128xbf16>, vector<128x128xbf16>, vector<8x128xf32> -> vector<8x128xf32>
      %c0_37 = arith.constant 0 : index
      %c0_38 = arith.constant 0 : index
      %83 = vector.load %arg8[%c0_37, %c0_38] : memref<1x128xf32, #tpu.memory_space<vmem>>, vector<1x128xf32>
      %84 = vector.broadcast %83 : vector<1x128xf32> to vector<8x128xf32>
      %85 = arith.addf %82, %84 : vector<8x128xf32>
      %c0_39 = arith.constant 0 : index
      %c0_40 = arith.constant 0 : index
      %86 = vector.load %arg5[%c0_39, %c0_40] : memref<128x128xbf16, #tpu.memory_space<vmem>>, vector<128x128xbf16>
      %cst_41 = arith.constant dense<0.000000e+00> : vector<8x128xf32>
      %87 = tpu.matmul %80, %86, %cst_41 {dimension_numbers = #tpu.dot_dimension_numbers<[1], [0], [0], [1], [0, 0, 1, 1], [], []>} : vector<8x128xbf16>, vector<128x128xbf16>, vector<8x128xf32> -> vector<8x128xf32>
      %c0_42 = arith.constant 0 : index
      %c0_43 = arith.constant 0 : index
      %88 = vector.load %arg9[%c0_42, %c0_43] : memref<1x128xf32, #tpu.memory_space<vmem>>, vector<1x128xf32>
      %89 = vector.broadcast %88 : vector<1x128xf32> to vector<8x128xf32>
      %90 = arith.addf %87, %89 : vector<8x128xf32>
      %91 = arith.truncf %85 : vector<8x128xf32> to vector<8x128xbf16>
      %92 = vector.shape_cast %91 : vector<8x128xbf16> to vector<8x4x32xbf16>
      %93 = arith.truncf %90 : vector<8x128xf32> to vector<8x128xbf16>
      %94 = vector.shape_cast %93 : vector<8x128xbf16> to vector<8x4x32xbf16>
      %95 = tpu.transpose %92, [1, 0, 2] : vector<8x4x32xbf16> -> vector<4x8x32xbf16>
      %c0_44 = arith.constant 0 : index
      %c0_45 = arith.constant 0 : index
      %c0_46 = arith.constant 0 : index
      %96 = vector.load %arg13[%c0_44, %c0_45, %c0_46] : memref<4x8x32xbf16, #tpu.memory_space<vmem>>, vector<4x8x32xbf16>
      tpu.vector_store %arg13[%c0_44, %c0_45, %c0_46], %95 {strides = array<i32>} : memref<4x8x32xbf16, #tpu.memory_space<vmem>>, vector<4x8x32xbf16>,
      %97 = tpu.transpose %94, [1, 0, 2] : vector<8x4x32xbf16> -> vector<4x8x32xbf16>
      %c0_47 = arith.constant 0 : index
      %c0_48 = arith.constant 0 : index
      %c0_49 = arith.constant 0 : index
      %98 = vector.load %arg14[%c0_47, %c0_48, %c0_49] : memref<4x8x32xbf16, #tpu.memory_space<vmem>>, vector<4x8x32xbf16>
      tpu.vector_store %arg14[%c0_47, %c0_48, %c0_49], %97 {strides = array<i32>} : memref<4x8x32xbf16, #tpu.memory_space<vmem>>, vector<4x8x32xbf16>,
    } else {
    }
    %c8_i32 = arith.constant 8 : i32
    %3 = arith.muli %arg1, %c8_i32 : i32
    %4 = tpu.assume_multiple %3, 8 : i32
    %c0 = arith.constant 0 : index
    %5 = arith.index_cast %4 : i32 to index
    %c0_1 = arith.constant 0 : index
    %6 = vector.load %arg2[%c0, %5, %c0_1] : memref<1x8x128xbf16, #tpu.memory_space<vmem>>, vector<1x8x128xbf16>
    %7 = vector.shape_cast %6 : vector<1x8x128xbf16> to vector<8x128xbf16>
    %c0_2 = arith.constant 0 : index
    %c0_3 = arith.constant 0 : index
    %8 = vector.load %arg3[%c0_2, %c0_3] : memref<128x128xbf16, #tpu.memory_space<vmem>>, vector<128x128xbf16>
    %cst = arith.constant dense<0.000000e+00> : vector<8x128xf32>
    %9 = tpu.matmul %7, %8, %cst {dimension_numbers = #tpu.dot_dimension_numbers<[1], [0], [0], [1], [0, 0, 1, 1], [], []>} : vector<8x128xbf16>, vector<128x128xbf16>, vector<8x128xf32> -> vector<8x128xf32>
    %c0_4 = arith.constant 0 : index
    %c0_5 = arith.constant 0 : index
    %10 = vector.load %arg7[%c0_4, %c0_5] : memref<1x128xf32, #tpu.memory_space<vmem>>, vector<1x128xf32>
    %11 = vector.broadcast %10 : vector<1x128xf32> to vector<8x128xf32>
    %12 = arith.addf %9, %11 : vector<8x128xf32>
    %cst_6 = arith.constant 0.176776692 : f32
    %13 = vector.broadcast %cst_6 : f32 to vector<8x128xf32>
    %14 = arith.mulf %12, %13 : vector<8x128xf32>
    %15 = arith.truncf %14 : vector<8x128xf32> to vector<8x128xbf16>
    %16 = vector.shape_cast %15 : vector<8x128xbf16> to vector<8x4x32xbf16>
    %c0_7 = arith.constant 0 : index
    %c0_8 = arith.constant 0 : index
    %c0_9 = arith.constant 0 : index
    %17 = vector.load %arg13[%c0_7, %c0_8, %c0_9] : memref<4x8x32xbf16, #tpu.memory_space<vmem>>, vector<4x8x32xbf16>
    %c0_10 = arith.constant 0 : index
    %c0_11 = arith.constant 0 : index
    %c0_12 = arith.constant 0 : index
    %18 = vector.load %arg14[%c0_10, %c0_11, %c0_12] : memref<4x8x32xbf16, #tpu.memory_space<vmem>>, vector<4x8x32xbf16>
    "tpu.trace_start"() <{level = 10 : i32, message = "qhd,hkd->hqk"}> : () -> ()
    %cst_13 = arith.constant dense<0.000000e+00> : vector<4x8x8xf32>
    %19 = tpu.matmul %16, %17, %cst_13 {dimension_numbers = #tpu.dot_dimension_numbers<[2], [2], [0], [1], [0, 1, 0, 0, 1, 1], [1], [0]>} : vector<8x4x32xbf16>, vector<4x8x32xbf16>, vector<4x8x8xf32> -> vector<4x8x8xf32>
    "tpu.trace_stop"() : () -> ()
    %cst_14 = arith.constant dense<0xFF800000> : vector<4x8xf32>
    %20 = vector.multi_reduction <maximumf>, %19, %cst_14 [2] : vector<4x8x8xf32> to vector<4x8xf32>
    %21 = vector.shape_cast %20 : vector<4x8xf32> to vector<4x8x1xf32>
    %22 = vector.broadcast %21 : vector<4x8x1xf32> to vector<4x8x8xf32>
    %23 = arith.subf %19, %22 : vector<4x8x8xf32>
    %24 = math.exp %23 : vector<4x8x8xf32>
    %cst_15 = arith.constant dense<0.000000e+00> : vector<4x8xf32>
    %25 = vector.multi_reduction <add>, %24, %cst_15 [2] : vector<4x8x8xf32> to vector<4x8xf32>
    %26 = vector.shape_cast %25 : vector<4x8xf32> to vector<4x8x1xf32>
    %27 = arith.truncf %24 : vector<4x8x8xf32> to vector<4x8x8xbf16>
    "tpu.trace_start"() <{level = 10 : i32, message = "hqk,hkd->qhd"}> : () -> ()
    %cst_16 = arith.constant dense<0.000000e+00> : vector<4x32x8xf32>
    %28 = tpu.matmul %18, %27, %cst_16 {dimension_numbers = #tpu.dot_dimension_numbers<[1], [2], [2], [1], [0, 0, 0, 2, 1, 1], [0], [0]>} : vector<4x8x32xbf16>, vector<4x8x8xbf16>, vector<4x32x8xf32> -> vector<4x32x8xf32>
    %29 = tpu.transpose %28, [2, 0, 1] : vector<4x32x8xf32> -> vector<8x4x32xf32>
    "tpu.trace_stop"() : () -> ()
    %30 = vector.shape_cast %26 : vector<4x8x1xf32> to vector<4x8xf32>
    %31 = tpu.transpose %30, [1, 0] : vector<4x8xf32> -> vector<8x4xf32>
    %32 = tpu.reciprocal %31 {approx = true} : vector<8x4xf32> -> vector<8x4xf32>
    %33 = vector.shape_cast %32 : vector<8x4xf32> to vector<8x4x1xf32>
    %34 = vector.broadcast %33 : vector<8x4x1xf32> to vector<8x4x32xf32>
    %35 = arith.mulf %29, %34 : vector<8x4x32xf32>
    %36 = vector.shape_cast %35 : vector<8x4x32xf32> to vector<8x128xf32>
    %c0_17 = arith.constant 0 : index
    %c0_18 = arith.constant 0 : index
    %c0_19 = arith.constant 0 : index
    %37 = vector.load %arg12[%c0_17, %c0_18, %c0_19] : memref<1x8x128xf32, #tpu.memory_space<vmem>>, vector<1x8x128xf32>
    %38 = vector.shape_cast %37 : vector<1x8x128xf32> to vector<8x128xf32>
    %39 = vector.shape_cast %36 : vector<8x128xf32> to vector<1x8x128xf32>
    tpu.vector_store %arg12[%c0_17, %c0_18, %c0_19], %39 {strides = array<i32>} : memref<1x8x128xf32, #tpu.memory_space<vmem>>, vector<1x8x128xf32>,
    %40 = arith.mulf %29, %29 : vector<8x4x32xf32>
    %cst_20 = arith.constant dense<0.000000e+00> : vector<8x4xf32>
    %41 = vector.multi_reduction <add>, %40, %cst_20 [2] : vector<8x4x32xf32> to vector<8x4xf32>
    %42 = arith.mulf %31, %31 : vector<8x4xf32>
    %43 = arith.divf %41, %42 : vector<8x4xf32>
    %44 = tpu.iota {dimensions = array<i32: 0>} : vector<4x4xi32>
    %45 = tpu.iota {dimensions = array<i32: 1>} : vector<4x4xi32>
    %46 = vector.shape_cast %43 : vector<8x4xf32> to vector<8x1x4xf32>
    %47 = vector.shape_cast %43 : vector<8x4xf32> to vector<8x4x1xf32>
    %48 = vector.broadcast %46 : vector<8x1x4xf32> to vector<8x4x4xf32>
    %49 = vector.broadcast %47 : vector<8x4x1xf32> to vector<8x4x4xf32>
    %50 = arith.cmpf ogt, %48, %49 : vector<8x4x4xf32>
    %51 = vector.broadcast %46 : vector<8x1x4xf32> to vector<8x4x4xf32>
    %52 = vector.broadcast %47 : vector<8x4x1xf32> to vector<8x4x4xf32>
    %53 = arith.cmpf oeq, %51, %52 : vector<8x4x4xf32>
    %54 = arith.cmpi slt, %45, %44 : vector<4x4xi32>
    %55 = vector.shape_cast %54 : vector<4x4xi1> to vector<1x4x4xi1>
    %56 = vector.broadcast %55 : vector<1x4x4xi1> to vector<8x4x4xi1>
    %57 = arith.andi %53, %56 : vector<8x4x4xi1>
    %58 = arith.ori %50, %57 : vector<8x4x4xi1>
    %59 = arith.extui %58 : vector<8x4x4xi1> to vector<8x4x4xi32>
    %60 = arith.sitofp %59 : vector<8x4x4xi32> to vector<8x4x4xf32>
    %cst_21 = arith.constant dense<0.000000e+00> : vector<8x4xf32>
    %61 = vector.multi_reduction <add>, %60, %cst_21 [2] : vector<8x4x4xf32> to vector<8x4xf32>
    %cst_22 = arith.constant 2.000000e+00 : f32
    %62 = vector.broadcast %cst_22 : f32 to vector<8x4xf32>
    %63 = arith.cmpf olt, %61, %62 : vector<8x4xf32>
    %64 = arith.extui %63 : vector<8x4xi1> to vector<8x4xi32>
    %65 = arith.sitofp %64 : vector<8x4xi32> to vector<8x4xf32>
    %66 = vector.shape_cast %65 : vector<8x4xf32> to vector<8x4x1xf32>
    %67 = vector.broadcast %66 : vector<8x4x1xf32> to vector<8x4x32xf32>
    %68 = arith.mulf %35, %67 : vector<8x4x32xf32>
    %69 = vector.shape_cast %68 : vector<8x4x32xf32> to vector<8x128xf32>
    %70 = arith.truncf %69 : vector<8x128xf32> to vector<8x128xbf16>
    %c0_23 = arith.constant 0 : index
    %c0_24 = arith.constant 0 : index
    %71 = vector.load %arg6[%c0_23, %c0_24] : memref<128x128xbf16, #tpu.memory_space<vmem>>, vector<128x128xbf16>
    %cst_25 = arith.constant dense<0.000000e+00> : vector<8x128xf32>
    %72 = tpu.matmul %70, %71, %cst_25 {dimension_numbers = #tpu.dot_dimension_numbers<[1], [0], [0], [1], [0, 0, 1, 1], [], []>} : vector<8x128xbf16>, vector<128x128xbf16>, vector<8x128xf32> -> vector<8x128xf32>
    %c0_26 = arith.constant 0 : index
    %c0_27 = arith.constant 0 : index
    %73 = vector.load %arg10[%c0_26, %c0_27] : memref<1x128xf32, #tpu.memory_space<vmem>>, vector<1x128xf32>
    %74 = vector.broadcast %73 : vector<1x128xf32> to vector<8x128xf32>
    %75 = arith.addf %72, %74 : vector<8x128xf32>
    %c0_28 = arith.constant 0 : index
    %c0_29 = arith.constant 0 : index
    %c0_30 = arith.constant 0 : index
    %76 = vector.load %arg11[%c0_28, %c0_29, %c0_30] : memref<1x8x128xf32, #tpu.memory_space<vmem>>, vector<1x8x128xf32>
    %77 = vector.shape_cast %76 : vector<1x8x128xf32> to vector<8x128xf32>
    %78 = vector.shape_cast %75 : vector<8x128xf32> to vector<1x8x128xf32>
    tpu.vector_store %arg11[%c0_28, %c0_29, %c0_30], %78 {strides = array<i32>} : memref<1x8x128xf32, #tpu.memory_space<vmem>>, vector<1x8x128xf32>,
    return
  }
  func.func @transform_0(%arg0: i32, %arg1: i32) -> (i32, i32, i32) {
    %c0_i32 = arith.constant 0 : i32
    %c0_i32_0 = arith.constant 0 : i32
    %c0_i32_1 = arith.constant 0 : i32
    return %arg0, %c0_i32, %c0_i32_0 : i32, i32, i32
  }
  func.func @transform_1(%arg0: i32, %arg1: i32) -> (i32, i32) {
    %c0_i32 = arith.constant 0 : i32
    %c0_i32_0 = arith.constant 0 : i32
    %c0_i32_1 = arith.constant 0 : i32
    return %c0_i32, %c0_i32_0 : i32, i32
  }
  func.func @transform_2(%arg0: i32, %arg1: i32) -> (i32, i32) {
    %c0_i32 = arith.constant 0 : i32
    %c0_i32_0 = arith.constant 0 : i32
    %c0_i32_1 = arith.constant 0 : i32
    return %c0_i32, %c0_i32_0 : i32, i32
  }
  func.func @transform_3(%arg0: i32, %arg1: i32) -> (i32, i32) {
    %c0_i32 = arith.constant 0 : i32
    %c0_i32_0 = arith.constant 0 : i32
    %c0_i32_1 = arith.constant 0 : i32
    return %c0_i32, %c0_i32_0 : i32, i32
  }
  func.func @transform_4(%arg0: i32, %arg1: i32) -> (i32, i32) {
    %c0_i32 = arith.constant 0 : i32
    %c0_i32_0 = arith.constant 0 : i32
    %c0_i32_1 = arith.constant 0 : i32
    return %c0_i32, %c0_i32_0 : i32, i32
  }
  func.func @transform_5(%arg0: i32, %arg1: i32) -> (i32, i32) {
    %c0_i32 = arith.constant 0 : i32
    %c0_i32_0 = arith.constant 0 : i32
    %c0_i32_1 = arith.constant 0 : i32
    return %c0_i32, %c0_i32_0 : i32, i32
  }
  func.func @transform_6(%arg0: i32, %arg1: i32) -> (i32, i32) {
    %c0_i32 = arith.constant 0 : i32
    %c0_i32_0 = arith.constant 0 : i32
    %c0_i32_1 = arith.constant 0 : i32
    return %c0_i32, %c0_i32_0 : i32, i32
  }
  func.func @transform_7(%arg0: i32, %arg1: i32) -> (i32, i32) {
    %c0_i32 = arith.constant 0 : i32
    %c0_i32_0 = arith.constant 0 : i32
    %c0_i32_1 = arith.constant 0 : i32
    return %c0_i32, %c0_i32_0 : i32, i32
  }
  func.func @transform_8(%arg0: i32, %arg1: i32) -> (i32, i32) {
    %c0_i32 = arith.constant 0 : i32
    %c0_i32_0 = arith.constant 0 : i32
    %c0_i32_1 = arith.constant 0 : i32
    return %c0_i32, %c0_i32_0 : i32, i32
  }
  func.func @transform_9(%arg0: i32, %arg1: i32) -> (i32, i32, i32) {
    %c0_i32 = arith.constant 0 : i32
    %c0_i32_0 = arith.constant 0 : i32
    return %arg0, %arg1, %c0_i32 : i32, i32, i32
  }
  func.func @transform_10(%arg0: i32, %arg1: i32) -> (i32, i32, i32) {
    %c0_i32 = arith.constant 0 : i32
    %c0_i32_0 = arith.constant 0 : i32
    return %arg0, %arg1, %c0_i32 : i32, i32, i32
  }
}

</mosaic_0001>

<llo_original>
// kernel: tpu_custom_call.1
$region0: #{tpu_custom_call.1}
  #allocation0 [shape = 'u32[]', space=smem, size = 0x4, offset = 0x4, fixed_abs, tag = 'smem constant byte address 0x4 - core index']
  #allocation1 [shape = 'u32[144,128]{1,0:T(1,128)}', space=vmem, size = 0x12000, scoped, tag = 'internal scratch']
  #allocation2 [shape = 'bf16[4,8,32]{2,1,0:T(8,128)(2,1)}', space=vmem, size = 0x2000, scoped, tag = 'scratch operand']
  #allocation3 [shape = 'bf16[4,8,32]{2,1,0:T(8,128)(2,1)}', space=vmem, size = 0x2000, scoped, tag = 'scratch operand']
  %s0 = inlined_call_operand.hbm [shape: bf16[2,8,128], index: 0, kind: input, shape index: {}]
  %s1 = inlined_call_operand.hbm [shape: bf16[128,128], index: 1, kind: input, shape index: {}]
  %s2 = inlined_call_operand.hbm [shape: bf16[128,128], index: 2, kind: input, shape index: {}]
  %s3 = inlined_call_operand.hbm [shape: bf16[128,128], index: 3, kind: input, shape index: {}]
  %s4 = inlined_call_operand.hbm [shape: bf16[128,128], index: 4, kind: input, shape index: {}]
  %s5 = inlined_call_operand.vmem [shape: f32[1,128], index: 5, kind: input, shape index: {}]
  %s6 = inlined_call_operand.vmem [shape: f32[1,128], index: 6, kind: input, shape index: {}]
  %s7 = inlined_call_operand.vmem [shape: f32[1,128], index: 7, kind: input, shape index: {}]
  %s8 = inlined_call_operand.vmem [shape: f32[1,128], index: 8, kind: input, shape index: {}]
  %s9 = inlined_call_operand.hbm [shape: f32[2,8,128], index: 9, kind: output, shape index: {0}]
  %s10 = inlined_call_operand.hbm [shape: f32[2,8,128], index: 10, kind: output, shape index: {1}]
  %11 = xla_tuple %s9, %s10
  %s12 = sld [smem:[#allocation0]]
  $region101: #{tpu_custom_call.1} parent=0
    _
  %s14 = ssub.s32 1, %s12
  %s15 = scalar_select 0, %s14, %s12
  $region1: #{tpu_custom_call.1} parent=0
    #allocation4 [shape = 'u8[4096]{0}', space=vmem, size = 0x1000, scoped, tag = 'input window, operand 0']
    #allocation5 [shape = 's32[2]{0}', space=sflag, size = 0x8, scoped, tag = 'scoped memory for tpu_custom_call.1']
    #allocation6 [shape = 's32[2]{0}', space=sflag, size = 0x8, scoped, tag = 'scoped memory for tpu_custom_call.1']
    #allocation7 [shape = 'u8[32768]{0}', space=vmem, size = 0x8000, scoped, tag = 'input window, operand 1, single buffered']
    #allocation8 [shape = 's32[1]{0}', space=sflag, size = 0x4, scoped, tag = 'scoped memory for tpu_custom_call.1']
    #allocation9 [shape = 'u8[32768]{0}', space=vmem, size = 0x8000, scoped, tag = 'input window, operand 2, single buffered']
    #allocation10 [shape = 'u8[32768]{0}', space=vmem, size = 0x8000, scoped, tag = 'input window, operand 3, single buffered']
    #allocation11 [shape = 's32[1]{0}', space=sflag, size = 0x4, scoped, tag = 'scoped memory for tpu_custom_call.1']
    #allocation12 [shape = 'u8[32768]{0}', space=vmem, size = 0x8000, scoped, tag = 'input window, operand 4, single buffered']
    #allocation13 [shape = 'u8[8192]{0}', space=vmem, size = 0x2000, scoped, tag = 'output window, operand 0']
    #allocation14 [shape = 'u8[8192]{0}', space=vmem, size = 0x2000, scoped, tag = 'output window, operand 1']
    #allocation15 [shape = 's32[2]{0}', space=sflag, size = 0x8, scoped, tag = 'scoped memory for tpu_custom_call.1']
    %16 = vsyncpa [#allocation5], 0
    %s17 = scalar_lea.sflag [#allocation5], 1
    %18 = vsyncpa %s17, 0
    %19 = vsyncpa [#allocation8], 0
    %20 = vsyncpa [#allocation11], 0
    %21 = vsyncpa [#allocation6], 0
    %s22 = scalar_lea.sflag [#allocation6], 1
    %23 = vsyncpa %s22, 0
    %24 = vsyncpa [#allocation15], 0
    %s25 = scalar_lea.sflag [#allocation15], 1
    %26 = vsyncpa %s25, 0
    loop: start=0, step=1, limit=4
    $region2: #{tpu_custom_call.1} parent=1 // loop_pre_header
      _
    $region3: #{tpu_custom_call.1} parent=1 // loop_header
      %s28 = sphi 0, %s32
      %p29 = scmp.ge.s32.totalorder %s28, 4
      %s35 = sphi 0, %s47
      %s36 = sphi 0, %s43
      %s37 = sphi 0, %s35
      %s38 = sphi 0, %s36
      %s39 = sphi 0, %s37
      %s40 = sphi 0, %s38
      %s50 = sphi 0, %s52
      %s53 = sphi 0, %s50
      %s54 = sphi 0, %s53
      %s70 = sphi 0, %s54
      %s74 = sphi 0, %s74
      %s76 = sphi 0, %s74
      %s77 = sphi 0, %s76
      %s91 = sphi 0, %s77
      %s95 = sphi 0, %s95
      %s97 = sphi 0, %s95
      %s98 = sphi 0, %s97
      %s112 = sphi 0, %s98
      %s116 = sphi 0, %s116
      %s118 = sphi 0, %s116
      %s119 = sphi 0, %s118
      %s133 = sphi 0, %s119
      %s137 = sphi 0, %s137
      %s139 = sphi 0, %s137
      %s140 = sphi 0, %s139
      %s154 = sphi 0, %s140
      %s158 = sphi 0, %s158
      %s160 = sphi 0, %s158
      %s161 = sphi 0, %s160
      %s175 = sphi 0, %s161
      %s179 = sphi 0, %s179
      %s181 = sphi 0, %s179
      %s182 = sphi 0, %s181
      %s196 = sphi 0, %s182
      %s200 = sphi 0, %s200
      %s202 = sphi 0, %s200
      %s203 = sphi 0, %s202
      %s217 = sphi 0, %s203
      %s221 = sphi 0, %s221
      %s223 = sphi 0, %s221
      %s224 = sphi 0, %s223
      %s238 = sphi 0, %s224
      %s246 = sphi 0, %s248
      %s249 = sphi 0, %s246
      %s250 = sphi 0, %s249
      %s266 = sphi 0, %s250
      %s274 = sphi 0, %s276
      %s277 = sphi 0, %s274
      %s278 = sphi 0, %s277
      %s294 = sphi 0, %s278
    $region4: #{tpu_custom_call.1} parent=1 // loop_header_branch
      %31 = sbr.rel (%p29) target = $region8
    $region5: #{tpu_custom_call.1} parent=1 // loop_body
      %s33 = ssub.s32 %s28, 1
      %s34 = ssub.s32 %s28, 2
      %s41 = sadd.s32 1, %s36
      %p42 = scmp.ge.s32.totalorder %s41, 1
      %s43 = scalar_select %p42, 0, %s41
      %s44 = sadd.s32 1, %s35
      %s45 = scalar_select %p42, %s44, %s35
      %p46 = scmp.ge.s32.totalorder %s45, 2
      %s47 = scalar_select %p46, 0, %s45
      %s48 = ssub.s32 %s35, %s47
      %p49 = scmp.eq.s32.totalorder %s48, 0
      %s51 = sadd.s32 %s50, 1
      %s52 = scalar_select %p49, %s50, %s51
      %p55 = pneg %p49
      %p56 = scmp.eq.s32.totalorder %s28, 1
      %p57 = por %p55, %p56
      %p58 = scmp.ne.s32.totalorder %s50, %s53
      %p59 = scmp.eq.s32.totalorder %s28, 0
      %p60 = por %p58, %p59
      %p61 = scmp.ne.s32.totalorder %s50, %s53
      %p62 = scmp.eq.s32.totalorder %s33, 1
      %p63 = por %p61, %p62
      %p64 = scmp.ne.s32.totalorder %s53, %s54
      %p65 = scmp.eq.s32.totalorder %s33, 0
      %p66 = por %p64, %p65
      %p67 = scmp.ne.s32.totalorder %s53, %s54
      %p68 = scmp.eq.s32.totalorder %s34, 1
      %p69 = por %p67, %p68
      %p71 = scmp.ne.s32.totalorder %s54, %s70
      %p72 = scmp.eq.s32.totalorder %s34, 0
      %p73 = por %p71, %p72
      %s75 = sadd.s32 %s74, 1
      %p78 = scmp.eq.s32.totalorder %s28, 1
      %p79 = scmp.ne.s32.totalorder %s74, %s76
      %p80 = scmp.eq.s32.totalorder %s28, 0
      %p81 = por %p79, %p80
      %p82 = scmp.ne.s32.totalorder %s74, %s76
      %p83 = scmp.eq.s32.totalorder %s33, 1
      %p84 = por %p82, %p83
      %p85 = scmp.ne.s32.totalorder %s76, %s77
      %p86 = scmp.eq.s32.totalorder %s33, 0
      %p87 = por %p85, %p86
      %p88 = scmp.ne.s32.totalorder %s76, %s77
      %p89 = scmp.eq.s32.totalorder %s34, 1
      %p90 = por %p88, %p89
      %p92 = scmp.ne.s32.totalorder %s77, %s91
      %p93 = scmp.eq.s32.totalorder %s34, 0
      %p94 = por %p92, %p93
      %s96 = sadd.s32 %s95, 1
      %p99 = scmp.eq.s32.totalorder %s28, 1
      %p100 = scmp.ne.s32.totalorder %s95, %s97
      %p101 = scmp.eq.s32.totalorder %s28, 0
      %p102 = por %p100, %p101
      %p103 = scmp.ne.s32.totalorder %s95, %s97
      %p104 = scmp.eq.s32.totalorder %s33, 1
      %p105 = por %p103, %p104
      %p106 = scmp.ne.s32.totalorder %s97, %s98
      %p107 = scmp.eq.s32.totalorder %s33, 0
      %p108 = por %p106, %p107
      %p109 = scmp.ne.s32.totalorder %s97, %s98
      %p110 = scmp.eq.s32.totalorder %s34, 1
      %p111 = por %p109, %p110
      %p113 = scmp.ne.s32.totalorder %s98, %s112
      %p114 = scmp.eq.s32.totalorder %s34, 0
      %p115 = por %p113, %p114
      %s117 = sadd.s32 %s116, 1
      %p120 = scmp.eq.s32.totalorder %s28, 1
      %p121 = scmp.ne.s32.totalorder %s116, %s118
      %p122 = scmp.eq.s32.totalorder %s28, 0
      %p123 = por %p121, %p122
      %p124 = scmp.ne.s32.totalorder %s116, %s118
      %p125 = scmp.eq.s32.totalorder %s33, 1
      %p126 = por %p124, %p125
      %p127 = scmp.ne.s32.totalorder %s118, %s119
      %p128 = scmp.eq.s32.totalorder %s33, 0
      %p129 = por %p127, %p128
      %p130 = scmp.ne.s32.totalorder %s118, %s119
      %p131 = scmp.eq.s32.totalorder %s34, 1
      %p132 = por %p130, %p131
      %p134 = scmp.ne.s32.totalorder %s119, %s133
      %p135 = scmp.eq.s32.totalorder %s34, 0
      %p136 = por %p134, %p135
      %s138 = sadd.s32 %s137, 1
      %p141 = scmp.eq.s32.totalorder %s28, 1
      %p142 = scmp.ne.s32.totalorder %s137, %s139
      %p143 = scmp.eq.s32.totalorder %s28, 0
      %p144 = por %p142, %p143
      %p145 = scmp.ne.s32.totalorder %s137, %s139
      %p146 = scmp.eq.s32.totalorder %s33, 1
      %p147 = por %p145, %p146
      %p148 = scmp.ne.s32.totalorder %s139, %s140
      %p149 = scmp.eq.s32.totalorder %s33, 0
      %p150 = por %p148, %p149
      %p151 = scmp.ne.s32.totalorder %s139, %s140
      %p152 = scmp.eq.s32.totalorder %s34, 1
      %p153 = por %p151, %p152
      %p155 = scmp.ne.s32.totalorder %s140, %s154
      %p156 = scmp.eq.s32.totalorder %s34, 0
      %p157 = por %p155, %p156
      %s159 = sadd.s32 %s158, 1
      %p162 = scmp.eq.s32.totalorder %s28, 1
      %p163 = scmp.ne.s32.totalorder %s158, %s160
      %p164 = scmp.eq.s32.totalorder %s28, 0
      %p165 = por %p163, %p164
      %p166 = scmp.ne.s32.totalorder %s158, %s160
      %p167 = scmp.eq.s32.totalorder %s33, 1
      %p168 = por %p166, %p167
      %p169 = scmp.ne.s32.totalorder %s160, %s161
      %p170 = scmp.eq.s32.totalorder %s33, 0
      %p171 = por %p169, %p170
      %p172 = scmp.ne.s32.totalorder %s160, %s161
      %p173 = scmp.eq.s32.totalorder %s34, 1
      %p174 = por %p172, %p173
      %p176 = scmp.ne.s32.totalorder %s161, %s175
      %p177 = scmp.eq.s32.totalorder %s34, 0
      %p178 = por %p176, %p177
      %s180 = sadd.s32 %s179, 1
      %p183 = scmp.eq.s32.totalorder %s28, 1
      %p184 = scmp.ne.s32.totalorder %s179, %s181
      %p185 = scmp.eq.s32.totalorder %s28, 0
      %p186 = por %p184, %p185
      %p187 = scmp.ne.s32.totalorder %s179, %s181
      %p188 = scmp.eq.s32.totalorder %s33, 1
      %p189 = por %p187, %p188
      %p190 = scmp.ne.s32.totalorder %s181, %s182
      %p191 = scmp.eq.s32.totalorder %s33, 0
      %p192 = por %p190, %p191
      %p193 = scmp.ne.s32.totalorder %s181, %s182
      %p194 = scmp.eq.s32.totalorder %s34, 1
      %p195 = por %p193, %p194
      %p197 = scmp.ne.s32.totalorder %s182, %s196
      %p198 = scmp.eq.s32.totalorder %s34, 0
      %p199 = por %p197, %p198
      %s201 = sadd.s32 %s200, 1
      %p204 = scmp.eq.s32.totalorder %s28, 1
      %p205 = scmp.ne.s32.totalorder %s200, %s202
      %p206 = scmp.eq.s32.totalorder %s28, 0
      %p207 = por %p205, %p206
      %p208 = scmp.ne.s32.totalorder %s200, %s202
      %p209 = scmp.eq.s32.totalorder %s33, 1
      %p210 = por %p208, %p209
      %p211 = scmp.ne.s32.totalorder %s202, %s203
      %p212 = scmp.eq.s32.totalorder %s33, 0
      %p213 = por %p211, %p212
      %p214 = scmp.ne.s32.totalorder %s202, %s203
      %p215 = scmp.eq.s32.totalorder %s34, 1
      %p216 = por %p214, %p215
      %p218 = scmp.ne.s32.totalorder %s203, %s217
      %p219 = scmp.eq.s32.totalorder %s34, 0
      %p220 = por %p218, %p219
      %s222 = sadd.s32 %s221, 1
      %p225 = scmp.eq.s32.totalorder %s28, 1
      %p226 = scmp.ne.s32.totalorder %s221, %s223
      %p227 = scmp.eq.s32.totalorder %s28, 0
      %p228 = por %p226, %p227
      %p229 = scmp.ne.s32.totalorder %s221, %s223
      %p230 = scmp.eq.s32.totalorder %s33, 1
      %p231 = por %p229, %p230
      %p232 = scmp.ne.s32.totalorder %s223, %s224
      %p233 = scmp.eq.s32.totalorder %s33, 0
      %p234 = por %p232, %p233
      %p235 = scmp.ne.s32.totalorder %s223, %s224
      %p236 = scmp.eq.s32.totalorder %s34, 1
      %p237 = por %p235, %p236
      %p239 = scmp.ne.s32.totalorder %s224, %s238
      %p240 = scmp.eq.s32.totalorder %s34, 0
      %p241 = por %p239, %p240
      %s242 = ssub.s32 %s35, %s47
      %s243 = ssub.s32 %s36, %s43
      %s244 = sor.u32 %s242, %s243
      %p245 = scmp.eq.s32.totalorder %s244, 0
      %s247 = sadd.s32 %s246, 1
      %s248 = scalar_select %p245, %s246, %s247
      %p251 = pneg %p245
      %p252 = scmp.eq.s32.totalorder %s28, 1
      %p253 = por %p251, %p252
      %p254 = scmp.ne.s32.totalorder %s246, %s249
      %p255 = scmp.eq.s32.totalorder %s28, 0
      %p256 = por %p254, %p255
      %p257 = scmp.ne.s32.totalorder %s246, %s249
      %p258 = scmp.eq.s32.totalorder %s33, 1
      %p259 = por %p257, %p258
      %p260 = scmp.ne.s32.totalorder %s249, %s250
      %p261 = scmp.eq.s32.totalorder %s33, 0
      %p262 = por %p260, %p261
      %p263 = scmp.ne.s32.totalorder %s249, %s250
      %p264 = scmp.eq.s32.totalorder %s34, 1
      %p265 = por %p263, %p264
      %p267 = scmp.ne.s32.totalorder %s250, %s266
      %p268 = scmp.eq.s32.totalorder %s34, 0
      %p269 = por %p267, %p268
      %s270 = ssub.s32 %s35, %s47
      %s271 = ssub.s32 %s36, %s43
      %s272 = sor.u32 %s270, %s271
      %p273 = scmp.eq.s32.totalorder %s272, 0
      %s275 = sadd.s32 %s274, 1
      %s276 = scalar_select %p273, %s274, %s275
      %p279 = pneg %p273
      %p280 = scmp.eq.s32.totalorder %s28, 1
      %p281 = por %p279, %p280
      %p282 = scmp.ne.s32.totalorder %s274, %s277
      %p283 = scmp.eq.s32.totalorder %s28, 0
      %p284 = por %p282, %p283
      %p285 = scmp.ne.s32.totalorder %s274, %s277
      %p286 = scmp.eq.s32.totalorder %s33, 1
      %p287 = por %p285, %p286
      %p288 = scmp.ne.s32.totalorder %s277, %s278
      %p289 = scmp.eq.s32.totalorder %s33, 0
      %p290 = por %p288, %p289
      %p291 = scmp.ne.s32.totalorder %s277, %s278
      %p292 = scmp.eq.s32.totalorder %s34, 1
      %p293 = por %p291, %p292
      %p295 = scmp.ne.s32.totalorder %s278, %s294
      %p296 = scmp.eq.s32.totalorder %s34, 0
      %p297 = por %p295, %p296
      %p298 = scmp.le.s32.totalorder 1, %s28
      %p299 = scmp.lt.s32.totalorder %s28, 3
      %p300 = pnand %p298, %p299
      %p301 = pneg %p300
      // Predicated region
      $region9: #{tpu_custom_call.1} parent=5 // pred_check
        _
      $region10: #{tpu_custom_call.1} parent=5 // pred_check_branch
        %303 = sbr.rel (%p300) target = $region12
      $region11: #{tpu_custom_call.1} parent=5 // pred_region
        %s304 = ssub.s32 %s28, 1
        // Predicated region
        $region13: #{tpu_custom_call.1} parent=11 // pred_check
          %p305 = pneg %p87
        $region14: #{tpu_custom_call.1} parent=11 // pred_check_branch
          %307 = sbr.rel (%p305) target = $region16
        $region15: #{tpu_custom_call.1} parent=11 // pred_region
          %s309 = ssub.s32 1024, 1024
          %310 = vsyncadd [#allocation8], %s309
          %s311 = sshll.u32 [#allocation7], 4
          %s312 = int_to_ptr.vmem [resolvable:$true] %s311
          %317 = dma.hbm_to_vmem [thread:$0]  %s1, 1024, %s312, [#allocation8], 64, 64, 4
        $region16: #{tpu_custom_call.1} parent=11 // pred_fallthru
          _
        // Predicated region
        $region17: #{tpu_custom_call.1} parent=11 // pred_check
          %p318 = pneg %p108
        $region18: #{tpu_custom_call.1} parent=11 // pred_check_branch
          %320 = sbr.rel (%p318) target = $region20
        $region19: #{tpu_custom_call.1} parent=11 // pred_region
          %s322 = ssub.s32 1024, 1024
          %323 = vsyncadd [#allocation8], %s322
          %s324 = sshll.u32 [#allocation9], 4
          %s325 = int_to_ptr.vmem [resolvable:$true] %s324
          %330 = dma.hbm_to_vmem [thread:$0]  %s2, 1024, %s325, [#allocation8], 64, 64, 4
        $region20: #{tpu_custom_call.1} parent=11 // pred_fallthru
          _
        // Predicated region
        $region21: #{tpu_custom_call.1} parent=11 // pred_check
          %p331 = pneg %p129
        $region22: #{tpu_custom_call.1} parent=11 // pred_check_branch
          %333 = sbr.rel (%p331) target = $region24
        $region23: #{tpu_custom_call.1} parent=11 // pred_region
          %s335 = ssub.s32 1024, 1024
          %336 = vsyncadd [#allocation11], %s335
          %s337 = sshll.u32 [#allocation10], 4
          %s338 = int_to_ptr.vmem [resolvable:$true] %s337
          %343 = dma.hbm_to_vmem [thread:$0]  %s3, 1024, %s338, [#allocation11], 64, 64, 4
        $region24: #{tpu_custom_call.1} parent=11 // pred_fallthru
          _
        // Predicated region
        $region25: #{tpu_custom_call.1} parent=11 // pred_check
          %p344 = pneg %p150
        $region26: #{tpu_custom_call.1} parent=11 // pred_check_branch
          %346 = sbr.rel (%p344) target = $region28
        $region27: #{tpu_custom_call.1} parent=11 // pred_region
          %s348 = ssub.s32 1024, 1024
          %349 = vsyncadd [#allocation11], %s348
          %s350 = sshll.u32 [#allocation12], 4
          %s351 = int_to_ptr.vmem [resolvable:$true] %s350
          %356 = dma.hbm_to_vmem [thread:$0]  %s4, 1024, %s351, [#allocation11], 64, 64, 4
        $region28: #{tpu_custom_call.1} parent=11 // pred_fallthru
          _
        // Predicated region
        $region29: #{tpu_custom_call.1} parent=11 // pred_check
          %p357 = pneg %p171
        $region30: #{tpu_custom_call.1} parent=11 // pred_check_branch
          %359 = sbr.rel (%p357) target = $region32
        $region31: #{tpu_custom_call.1} parent=11 // pred_region
          _
        $region32: #{tpu_custom_call.1} parent=11 // pred_fallthru
          _
        // Predicated region
        $region33: #{tpu_custom_call.1} parent=11 // pred_check
          %p360 = pneg %p192
        $region34: #{tpu_custom_call.1} parent=11 // pred_check_branch
          %362 = sbr.rel (%p360) target = $region36
        $region35: #{tpu_custom_call.1} parent=11 // pred_region
          _
        $region36: #{tpu_custom_call.1} parent=11 // pred_fallthru
          _
        // Predicated region
        $region37: #{tpu_custom_call.1} parent=11 // pred_check
          %p363 = pneg %p213
        $region38: #{tpu_custom_call.1} parent=11 // pred_check_branch
          %365 = sbr.rel (%p363) target = $region40
        $region39: #{tpu_custom_call.1} parent=11 // pred_region
          _
        $region40: #{tpu_custom_call.1} parent=11 // pred_fallthru
          _
        // Predicated region
        $region41: #{tpu_custom_call.1} parent=11 // pred_check
          %p366 = pneg %p234
        $region42: #{tpu_custom_call.1} parent=11 // pred_check_branch
          %368 = sbr.rel (%p366) target = $region44
        $region43: #{tpu_custom_call.1} parent=11 // pred_region
          _
        $region44: #{tpu_custom_call.1} parent=11 // pred_fallthru
          _
      $region12: #{tpu_custom_call.1} parent=5 // pred_fallthru
        _
      %p369 = scmp.lt.s32.totalorder %s28, 2
      // Predicated region
      $region45: #{tpu_custom_call.1} parent=5 // pred_check
        %p370 = pneg %p369
      $region46: #{tpu_custom_call.1} parent=5 // pred_check_branch
        %372 = sbr.rel (%p370) target = $region48
      $region47: #{tpu_custom_call.1} parent=5 // pred_region
        // Predicated region
        $region49: #{tpu_custom_call.1} parent=47 // pred_check
          %p373 = pneg %p60
        $region50: #{tpu_custom_call.1} parent=47 // pred_check_branch
          %375 = sbr.rel (%p373) target = $region52
        $region51: #{tpu_custom_call.1} parent=47 // pred_region
          %s376 = sand.u32 %s50, 1
          %s377 = scalar_lea.sflag [#allocation5], %s376
          %s378 = sand.u32 %s50, 1
          %s379 = smul.addr %s378, 4
          %s380 = scalar_lea.vmem [#allocation4], %s379
          %s382 = ssub.s32 64, 64
          %383 = vsyncadd %s377, %s382
          %s384 = smul.addr %s35, 64
          %s385 = scalar_lea.hbm %s0, %s384
          %s387 = sshll.u32 %s380, 4
          %s388 = int_to_ptr.vmem [resolvable:$true] %s387
          %390 = dma.hbm_to_vmem [thread:$0]  %s385, 64, %s388, %s377
        $region52: #{tpu_custom_call.1} parent=47 // pred_fallthru
          _
      $region48: #{tpu_custom_call.1} parent=5 // pred_fallthru
        _
      %p391 = scmp.le.s32.totalorder 1, %s28
      %p392 = scmp.lt.s32.totalorder %s28, 3
      %p393 = pnand %p391, %p392
      %p394 = pneg %p393
      // Predicated region
      $region53: #{tpu_custom_call.1} parent=5 // pred_check
        _
      $region54: #{tpu_custom_call.1} parent=5 // pred_check_branch
        %396 = sbr.rel (%p393) target = $region56
      $region55: #{tpu_custom_call.1} parent=5 // pred_region
        %s397 = ssub.s32 %s28, 1
        %s398 = sand.u32 %s53, 1
        %s399 = scalar_lea.sflag [#allocation5], %s398
        %s400 = sand.u32 %s53, 1
        %s401 = smul.addr %s400, 4
        %s402 = scalar_lea.vmem [#allocation4], %s401
        // Predicated region
        $region57: #{tpu_custom_call.1} parent=55 // pred_check
          %p403 = pneg %p66
        $region58: #{tpu_custom_call.1} parent=55 // pred_check_branch
          %405 = sbr.rel (%p403) target = $region60
        $region59: #{tpu_custom_call.1} parent=55 // pred_region
          %406 = dma.done %s399, 64
        $region60: #{tpu_custom_call.1} parent=55 // pred_fallthru
          _
        // Predicated region
        $region61: #{tpu_custom_call.1} parent=55 // pred_check
          %p407 = pneg %p87
        $region62: #{tpu_custom_call.1} parent=55 // pred_check_branch
          %409 = sbr.rel (%p407) target = $region64
        $region63: #{tpu_custom_call.1} parent=55 // pred_region
          %410 = dma.done [#allocation8], 1024
        $region64: #{tpu_custom_call.1} parent=55 // pred_fallthru
          _
        // Predicated region
        $region65: #{tpu_custom_call.1} parent=55 // pred_check
          %p411 = pneg %p108
        $region66: #{tpu_custom_call.1} parent=55 // pred_check_branch
          %413 = sbr.rel (%p411) target = $region68
        $region67: #{tpu_custom_call.1} parent=55 // pred_region
          %414 = dma.done [#allocation8], 1024
        $region68: #{tpu_custom_call.1} parent=55 // pred_fallthru
          _
        // Predicated region
        $region69: #{tpu_custom_call.1} parent=55 // pred_check
          %p415 = pneg %p129
        $region70: #{tpu_custom_call.1} parent=55 // pred_check_branch
          %417 = sbr.rel (%p415) target = $region72
        $region71: #{tpu_custom_call.1} parent=55 // pred_region
          %418 = dma.done [#allocation11], 1024
        $region72: #{tpu_custom_call.1} parent=55 // pred_fallthru
          _
        // Predicated region
        $region73: #{tpu_custom_call.1} parent=55 // pred_check
          %p419 = pneg %p150
        $region74: #{tpu_custom_call.1} parent=55 // pred_check_branch
          %421 = sbr.rel (%p419) target = $region76
        $region75: #{tpu_custom_call.1} parent=55 // pred_region
          %422 = dma.done [#allocation11], 1024
        $region76: #{tpu_custom_call.1} parent=55 // pred_fallthru
          _
        %s423 = sand.u32 %s53, 1
        %s424 = scalar_lea.sflag [#allocation5], %s423
        %s425 = sand.u32 %s53, 1
        %s426 = smul.addr %s425, 4
        %s427 = scalar_lea.vmem [#allocation4], %s426
        %p428 = pneg %p66
        %p429 = pneg %p63
        %p430 = pneg %p87
        %p431 = pneg %p84
        %p432 = pneg %p108
        %p433 = pneg %p105
        %p434 = pneg %p129
        %p435 = pneg %p126
        %p436 = pneg %p150
        %p437 = pneg %p147
        %p438 = pneg %p171
        %p439 = pneg %p168
        %p440 = pneg %p192
        %p441 = pneg %p189
        %p442 = pneg %p213
        %p443 = pneg %p210
        %p444 = pneg %p234
        %p445 = pneg %p231
        %p446 = pneg %p262
        %p447 = pneg %p259
        %s448 = sand.u32 %s249, 1
        %s449 = scalar_lea.sflag [#allocation6], %s448
        %s450 = sand.u32 %s249, 1
        %s451 = smul.addr %s450, 8
        %s452 = scalar_lea.vmem [#allocation13], %s451
        %p453 = pneg %p290
        %p454 = pneg %p287
        %s455 = sand.u32 %s277, 1
        %s456 = scalar_lea.sflag [#allocation15], %s455
        %s457 = sand.u32 %s277, 1
        %s458 = smul.addr %s457, 8
        %s459 = scalar_lea.vmem [#allocation14], %s458
        %p461 = scmp.eq.s32.totalorder %s38, 0
        // Predicated region
        $region77: #{tpu_custom_call.1} parent=55 // pred_check
          %p462 = pneg %p461
        $region78: #{tpu_custom_call.1} parent=55 // pred_check_branch
          %464 = sbr.rel (%p462) target = $region80
        $region79: #{tpu_custom_call.1} parent=55 // pred_region
          %v465 = vld [vmem:[%s402] sm:$0xf]
          %v466 = vld [vmem:[#allocation9] sm:$0xf]
          %v467 = vld [vmem:[#allocation9 + $0x4] sm:$0xf]
          %v468 = vld [vmem:[#allocation9 + $0x8] sm:$0xf]
          %v469 = vld [vmem:[#allocation9 + $0xc] sm:$0xf]
          %v470 = vld [vmem:[#allocation9 + $0x10] sm:$0xf]
          %v471 = vld [vmem:[#allocation9 + $0x14] sm:$0xf]
          %v472 = vld [vmem:[#allocation9 + $0x18] sm:$0xf]
          %v473 = vld [vmem:[#allocation9 + $0x1c] sm:$0xf]
          %v474 = vld [vmem:[#allocation9 + $0x20] sm:$0xf]
          %v475 = vld [vmem:[#allocation9 + $0x24] sm:$0xf]
          %v476 = vld [vmem:[#allocation9 + $0x28] sm:$0xf]
          %v477 = vld [vmem:[#allocation9 + $0x2c] sm:$0xf]
          %v478 = vld [vmem:[#allocation9 + $0x30] sm:$0xf]
          %v479 = vld [vmem:[#allocation9 + $0x34] sm:$0xf]
          %v480 = vld [vmem:[#allocation9 + $0x38] sm:$0xf]
          %v481 = vld [vmem:[#allocation9 + $0x3c] sm:$0xf]
          %v482 = vld [vmem:[%s6] sm:$0x1]
          %v484 = vlaneseq
          %v485 = vshrl.u32 %v484, 7
          %v486 = vsub.s32 0, %v485
          %v487 = vrot.slane %v482, %v486
          %v505 = vunpack.c.l.b16 %v466
          %v506 = vunpack.c.l.b16 %v467
          %v507 = vunpack.c.l.b16 %v468
          %v508 = vunpack.c.l.b16 %v469
          %v509 = vunpack.c.l.b16 %v470
          %v510 = vunpack.c.l.b16 %v471
          %v511 = vunpack.c.l.b16 %v472
          %v512 = vunpack.c.l.b16 %v473
          %v513 = vunpack.c.l.b16 %v474
          %v514 = vunpack.c.l.b16 %v475
          %v515 = vunpack.c.l.b16 %v476
          %v516 = vunpack.c.l.b16 %v477
          %v517 = vunpack.c.l.b16 %v478
          %v518 = vunpack.c.l.b16 %v479
          %v519 = vunpack.c.l.b16 %v480
          %v520 = vunpack.c.l.b16 %v481
          %v521 = vpack.c.b16 %v506, %v505
          %v522 = vpack.c.b16 %v508, %v507
          %v523 = vpack.c.b16 %v510, %v509
          %v524 = vpack.c.b16 %v512, %v511
          %v525 = vpack.c.b16 %v514, %v513
          %v526 = vpack.c.b16 %v516, %v515
          %v527 = vpack.c.b16 %v518, %v517
          %v528 = vpack.c.b16 %v520, %v519
          %537 = vmatprep.subr.bf16.mxu0 0
          %538 = vmatpush1.bf16.msra.mxu0 %v521
          %539 = vmatprep.subr.bf16.mxu0 0
          %540 = vmatpush1.bf16.msra.mxu0 %v522
          %541 = vmatprep.subr.bf16.mxu0 0
          %542 = vmatpush1.bf16.msra.mxu0 %v523
          %543 = vmatprep.subr.bf16.mxu0 0
          %544 = vmatpush1.bf16.msra.mxu0 %v524
          %545 = vmatprep.subr.bf16.mxu0 0
          %546 = vmatpush1.bf16.msra.mxu0 %v525
          %547 = vmatprep.subr.bf16.mxu0 0
          %548 = vmatpush1.bf16.msra.mxu0 %v526
          %549 = vmatprep.subr.bf16.mxu0 0
          %550 = vmatpush1.bf16.msra.mxu0 %v527
          %551 = vmatprep.subr.bf16.mxu0 0
          %552 = vmatpush1.bf16.msra.mxu0 %v528
          %553 = vmatprep.subr.bf16.mxu0 0
          %554 = vmatpush1.bf16.msra.mxu0 0
          %555 = vmatprep.subr.bf16.mxu0 0
          %556 = vmatpush1.bf16.msra.mxu0 0
          %557 = vmatprep.subr.bf16.mxu0 0
          %558 = vmatpush1.bf16.msra.mxu0 0
          %559 = vmatprep.subr.bf16.mxu0 0
          %560 = vmatpush1.bf16.msra.mxu0 0
          %561 = vmatprep.subr.bf16.mxu0 0
          %562 = vmatpush1.bf16.msra.mxu0 0
          %563 = vmatprep.subr.bf16.mxu0 0
          %564 = vmatpush1.bf16.msra.mxu0 0
          %565 = vmatprep.subr.bf16.mxu0 0
          %566 = vmatpush1.bf16.msra.mxu0 0
          %567 = vmatprep.subr.bf16.mxu0 0
          %568 = vmatpush1.bf16.msra.mxu0 0
          %569 = vmatprep.mubr.bf16.mxu0 0
          %570 = vmatmul.mubr.bf16.gmra.mrb[0].mxu0 %v465
          %v571 = vpop.f32.mrb[0].mxu0
          %v572 = vadd.f32 %v487, %v571
          %v573 = vpop.f32.mrb[0].mxu0
          %v574 = vpop.f32.mrb[0].mxu0
          %v575 = vpop.f32.mrb[0].mxu0
          %576 = vdwg.mxu0
          %v577 = vld [vmem:[#allocation10] sm:$0xf]
          %v578 = vld [vmem:[#allocation10 + $0x4] sm:$0xf]
          %v579 = vld [vmem:[#allocation10 + $0x8] sm:$0xf]
          %v580 = vld [vmem:[#allocation10 + $0xc] sm:$0xf]
          %v581 = vld [vmem:[#allocation10 + $0x10] sm:$0xf]
          %v582 = vld [vmem:[#allocation10 + $0x14] sm:$0xf]
          %v583 = vld [vmem:[#allocation10 + $0x18] sm:$0xf]
          %v584 = vld [vmem:[#allocation10 + $0x1c] sm:$0xf]
          %v585 = vld [vmem:[#allocation10 + $0x20] sm:$0xf]
          %v586 = vld [vmem:[#allocation10 + $0x24] sm:$0xf]
          %v587 = vld [vmem:[#allocation10 + $0x28] sm:$0xf]
          %v588 = vld [vmem:[#allocation10 + $0x2c] sm:$0xf]
          %v589 = vld [vmem:[#allocation10 + $0x30] sm:$0xf]
          %v590 = vld [vmem:[#allocation10 + $0x34] sm:$0xf]
          %v591 = vld [vmem:[#allocation10 + $0x38] sm:$0xf]
          %v592 = vld [vmem:[#allocation10 + $0x3c] sm:$0xf]
          %v593 = vld [vmem:[%s7] sm:$0x1]
          %v595 = vlaneseq
          %v596 = vshrl.u32 %v595, 7
          %v597 = vsub.s32 0, %v596
          %v598 = vrot.slane %v593, %v597
          %v616 = vunpack.c.l.b16 %v577
          %v617 = vunpack.c.l.b16 %v578
          %v618 = vunpack.c.l.b16 %v579
          %v619 = vunpack.c.l.b16 %v580
          %v620 = vunpack.c.l.b16 %v581
          %v621 = vunpack.c.l.b16 %v582
          %v622 = vunpack.c.l.b16 %v583
          %v623 = vunpack.c.l.b16 %v584
          %v624 = vunpack.c.l.b16 %v585
          %v625 = vunpack.c.l.b16 %v586
          %v626 = vunpack.c.l.b16 %v587
          %v627 = vunpack.c.l.b16 %v588
          %v628 = vunpack.c.l.b16 %v589
          %v629 = vunpack.c.l.b16 %v590
          %v630 = vunpack.c.l.b16 %v591
          %v631 = vunpack.c.l.b16 %v592
          %v632 = vpack.c.b16 %v617, %v616
          %v633 = vpack.c.b16 %v619, %v618
          %v634 = vpack.c.b16 %v621, %v620
          %v635 = vpack.c.b16 %v623, %v622
          %v636 = vpack.c.b16 %v625, %v624
          %v637 = vpack.c.b16 %v627, %v626
          %v638 = vpack.c.b16 %v629, %v628
          %v639 = vpack.c.b16 %v631, %v630
          %648 = vmatprep.subr.bf16.mxu0 0
          %649 = vmatpush1.bf16.msra.mxu0 %v632
          %650 = vmatprep.subr.bf16.mxu0 0
          %651 = vmatpush1.bf16.msra.mxu0 %v633
          %652 = vmatprep.subr.bf16.mxu0 0
          %653 = vmatpush1.bf16.msra.mxu0 %v634
          %654 = vmatprep.subr.bf16.mxu0 0
          %655 = vmatpush1.bf16.msra.mxu0 %v635
          %656 = vmatprep.subr.bf16.mxu0 0
          %657 = vmatpush1.bf16.msra.mxu0 %v636
          %658 = vmatprep.subr.bf16.mxu0 0
          %659 = vmatpush1.bf16.msra.mxu0 %v637
          %660 = vmatprep.subr.bf16.mxu0 0
          %661 = vmatpush1.bf16.msra.mxu0 %v638
          %662 = vmatprep.subr.bf16.mxu0 0
          %663 = vmatpush1.bf16.msra.mxu0 %v639
          %664 = vmatprep.subr.bf16.mxu0 0
          %665 = vmatpush1.bf16.msra.mxu0 0
          %666 = vmatprep.subr.bf16.mxu0 0
          %667 = vmatpush1.bf16.msra.mxu0 0
          %668 = vmatprep.subr.bf16.mxu0 0
          %669 = vmatpush1.bf16.msra.mxu0 0
          %670 = vmatprep.subr.bf16.mxu0 0
          %671 = vmatpush1.bf16.msra.mxu0 0
          %672 = vmatprep.subr.bf16.mxu0 0
          %673 = vmatpush1.bf16.msra.mxu0 0
          %674 = vmatprep.subr.bf16.mxu0 0
          %675 = vmatpush1.bf16.msra.mxu0 0
          %676 = vmatprep.subr.bf16.mxu0 0
          %677 = vmatpush1.bf16.msra.mxu0 0
          %678 = vmatprep.subr.bf16.mxu0 0
          %679 = vmatpush1.bf16.msra.mxu0 0
          %680 = vmatprep.mubr.bf16.mxu0 0
          %681 = vmatmul.mubr.bf16.gmra.mrb[0].mxu0 %v465
          %v682 = vpop.f32.mrb[0].mxu0
          %v683 = vadd.f32 %v598, %v682
          %v684 = vpop.f32.mrb[0].mxu0
          %v685 = vpop.f32.mrb[0].mxu0
          %v686 = vpop.f32.mrb[0].mxu0
          %687 = vdwg.mxu0
          %v688 = vpack.c.bf16 %v572, %v572
          %690 = vrot.lane.b32.xlu0 %v688, 96
          %v691 = vpop.permute.xlu0 %690
          %692 = vrot.lane.b32.xlu0 %v688, 64
          %v693 = vpop.permute.xlu0 %692
          %694 = vrot.lane.b32.xlu0 %v688, 32
          %v695 = vpop.permute.xlu0 %694
          %v697 = vunpack.c.l.s4 1983009808
          %v698 = vunpack.c.0.s8 %v697
          %v699 = vlaneseq
          %v700 = vshrl.u32 %v699, 7
          %v701 = vsub.s32 %v698, %v700
          %v702 = vrot.slane %v688, %v701
          %v705 = vunpack.c.l.s4 1983009808
          %v706 = vunpack.c.0.s8 %v705
          %v707 = vlaneseq
          %v708 = vshrl.u32 %v707, 7
          %v709 = vsub.s32 %v706, %v708
          %v710 = vrot.slane %v693, %v709
          %v711 = vcombine.low %v702, %v710
          %v712 = vcombine.high %v702, %v710
          %v714 = vunpack.c.l.s4 1934713408
          %v715 = vunpack.c.0.s8 %v714
          %v716 = vlaneseq
          %v717 = vshrl.u32 %v716, 7
          %v718 = vsub.s32 %v715, %v717
          %v719 = vrot.slane %v711, %v718
          %v721 = vunpack.c.l.s4 1934713408
          %v722 = vunpack.c.0.s8 %v721
          %v723 = vlaneseq
          %v724 = vshrl.u32 %v723, 7
          %v725 = vsub.s32 %v722, %v724
          %v726 = vrot.slane %v712, %v725
          %v727 = vcombine.high %v719, 0
          %v728 = vcombine.high %v726, 0
          %v731 = vunpack.c.l.s4 1983009808
          %v732 = vunpack.c.0.s8 %v731
          %v733 = vlaneseq
          %v734 = vshrl.u32 %v733, 7
          %v735 = vsub.s32 %v732, %v734
          %v736 = vrot.slane %v691, %v735
          %v739 = vunpack.c.l.s4 1983009808
          %v740 = vunpack.c.0.s8 %v739
          %v741 = vlaneseq
          %v742 = vshrl.u32 %v741, 7
          %v743 = vsub.s32 %v740, %v742
          %v744 = vrot.slane %v695, %v743
          %v745 = vcombine.low %v736, %v744
          %v746 = vcombine.high %v736, %v744
          %v748 = vunpack.c.l.s4 1934713408
          %v749 = vunpack.c.0.s8 %v748
          %v750 = vlaneseq
          %v751 = vshrl.u32 %v750, 7
          %v752 = vsub.s32 %v749, %v751
          %v753 = vrot.slane %v745, %v752
          %v755 = vunpack.c.l.s4 1934713408
          %v756 = vunpack.c.0.s8 %v755
          %v757 = vlaneseq
          %v758 = vshrl.u32 %v757, 7
          %v759 = vsub.s32 %v756, %v758
          %v760 = vrot.slane %v746, %v759
          %v761 = vcombine.high %v753, 0
          %v762 = vcombine.high %v760, 0
          %v765 = vpack.i.b16 %v753, %v719
          %v767 = vshrl.u32 %v719, 16
          %v768 = vshrl.u32 %v753, 16
          %v769 = vpack.i.b16 %v768, %v767
          %v773 = vpack.i.b16 %v761, %v727
          %v775 = vshrl.u32 %v727, 16
          %v776 = vshrl.u32 %v761, 16
          %v777 = vpack.i.b16 %v776, %v775
          %v781 = vpack.i.b16 %v760, %v726
          %v783 = vshrl.u32 %v726, 16
          %v784 = vshrl.u32 %v760, 16
          %v785 = vpack.i.b16 %v784, %v783
          %v789 = vpack.i.b16 %v762, %v728
          %v791 = vshrl.u32 %v728, 16
          %v792 = vshrl.u32 %v762, 16
          %v793 = vpack.i.b16 %v792, %v791
          %v795 = vpack.c.bf16 %v683, %v683
          %797 = vrot.lane.b32.xlu0 %v795, 96
          %v798 = vpop.permute.xlu0 %797
          %799 = vrot.lane.b32.xlu0 %v795, 64
          %v800 = vpop.permute.xlu0 %799
          %801 = vrot.lane.b32.xlu0 %v795, 32
          %v802 = vpop.permute.xlu0 %801
          %v804 = vunpack.c.l.s4 1983009808
          %v805 = vunpack.c.0.s8 %v804
          %v806 = vlaneseq
          %v807 = vshrl.u32 %v806, 7
          %v808 = vsub.s32 %v805, %v807
          %v809 = vrot.slane %v795, %v808
          %v812 = vunpack.c.l.s4 1983009808
          %v813 = vunpack.c.0.s8 %v812
          %v814 = vlaneseq
          %v815 = vshrl.u32 %v814, 7
          %v816 = vsub.s32 %v813, %v815
          %v817 = vrot.slane %v800, %v816
          %v818 = vcombine.low %v809, %v817
          %v819 = vcombine.high %v809, %v817
          %v821 = vunpack.c.l.s4 1934713408
          %v822 = vunpack.c.0.s8 %v821
          %v823 = vlaneseq
          %v824 = vshrl.u32 %v823, 7
          %v825 = vsub.s32 %v822, %v824
          %v826 = vrot.slane %v818, %v825
          %v828 = vunpack.c.l.s4 1934713408
          %v829 = vunpack.c.0.s8 %v828
          %v830 = vlaneseq
          %v831 = vshrl.u32 %v830, 7
          %v832 = vsub.s32 %v829, %v831
          %v833 = vrot.slane %v819, %v832
          %v834 = vcombine.high %v826, 0
          %v835 = vcombine.high %v833, 0
          %v838 = vunpack.c.l.s4 1983009808
          %v839 = vunpack.c.0.s8 %v838
          %v840 = vlaneseq
          %v841 = vshrl.u32 %v840, 7
          %v842 = vsub.s32 %v839, %v841
          %v843 = vrot.slane %v798, %v842
          %v846 = vunpack.c.l.s4 1983009808
          %v847 = vunpack.c.0.s8 %v846
          %v848 = vlaneseq
          %v849 = vshrl.u32 %v848, 7
          %v850 = vsub.s32 %v847, %v849
          %v851 = vrot.slane %v802, %v850
          %v852 = vcombine.low %v843, %v851
          %v853 = vcombine.high %v843, %v851
          %v855 = vunpack.c.l.s4 1934713408
          %v856 = vunpack.c.0.s8 %v855
          %v857 = vlaneseq
          %v858 = vshrl.u32 %v857, 7
          %v859 = vsub.s32 %v856, %v858
          %v860 = vrot.slane %v852, %v859
          %v862 = vunpack.c.l.s4 1934713408
          %v863 = vunpack.c.0.s8 %v862
          %v864 = vlaneseq
          %v865 = vshrl.u32 %v864, 7
          %v866 = vsub.s32 %v863, %v865
          %v867 = vrot.slane %v853, %v866
          %v868 = vcombine.high %v860, 0
          %v869 = vcombine.high %v867, 0
          %v872 = vpack.i.b16 %v860, %v826
          %v874 = vshrl.u32 %v826, 16
          %v875 = vshrl.u32 %v860, 16
          %v876 = vpack.i.b16 %v875, %v874
          %v880 = vpack.i.b16 %v868, %v834
          %v882 = vshrl.u32 %v834, 16
          %v883 = vshrl.u32 %v868, 16
          %v884 = vpack.i.b16 %v883, %v882
          %v888 = vpack.i.b16 %v867, %v833
          %v890 = vshrl.u32 %v833, 16
          %v891 = vshrl.u32 %v867, 16
          %v892 = vpack.i.b16 %v891, %v890
          %v896 = vpack.i.b16 %v869, %v835
          %v898 = vshrl.u32 %v835, 16
          %v899 = vshrl.u32 %v869, 16
          %v900 = vpack.i.b16 %v899, %v898
          %v902 = vcombine.low %v765, %v781
          %v904 = vunpack.c.l.s4 1983009808
          %v905 = vunpack.c.0.s8 %v904
          %v906 = vlaneseq
          %v907 = vshrl.u32 %v906, 7
          %v908 = vsub.s32 %v905, %v907
          %v909 = vrot.slane %v902, %v908
          %v910 = vcombine.low %v773, %v789
          %v912 = vunpack.c.l.s4 1983009808
          %v913 = vunpack.c.0.s8 %v912
          %v914 = vlaneseq
          %v915 = vshrl.u32 %v914, 7
          %v916 = vsub.s32 %v913, %v915
          %v917 = vrot.slane %v910, %v916
          %v918 = vcombine.low %v909, %v917
          %v920 = vunpack.c.l.s4 1934713408
          %v921 = vunpack.c.0.s8 %v920
          %v922 = vlaneseq
          %v923 = vshrl.u32 %v922, 7
          %v924 = vsub.s32 %v921, %v923
          %v925 = vrot.slane %v918, %v924
          %v926 = vcombine.high %v925, 0
          %v927 = vcombine.low %v769, %v785
          %v929 = vunpack.c.l.s4 1983009808
          %v930 = vunpack.c.0.s8 %v929
          %v931 = vlaneseq
          %v932 = vshrl.u32 %v931, 7
          %v933 = vsub.s32 %v930, %v932
          %v934 = vrot.slane %v927, %v933
          %v935 = vcombine.low %v777, %v793
          %v937 = vunpack.c.l.s4 1983009808
          %v938 = vunpack.c.0.s8 %v937
          %v939 = vlaneseq
          %v940 = vshrl.u32 %v939, 7
          %v941 = vsub.s32 %v938, %v940
          %v942 = vrot.slane %v935, %v941
          %v943 = vcombine.low %v934, %v942
          %v945 = vunpack.c.l.s4 1934713408
          %v946 = vunpack.c.0.s8 %v945
          %v947 = vlaneseq
          %v948 = vshrl.u32 %v947, 7
          %v949 = vsub.s32 %v946, %v948
          %v950 = vrot.slane %v943, %v949
          %v951 = vcombine.high %v950, 0
          %v954 = vpack.i.b16 %v950, %v925
          %v956 = vshrl.u32 %v925, 16
          %v957 = vshrl.u32 %v950, 16
          %v958 = vpack.i.b16 %v957, %v956
          %v962 = vpack.i.b16 %v951, %v926
          %v964 = vshrl.u32 %v926, 16
          %v965 = vshrl.u32 %v951, 16
          %v966 = vpack.i.b16 %v965, %v964
          %vm968 = vcmask 257024
          %969 = vst.msk [vmem:[#allocation2] sm:$0xf] %vm968, %v954
          %970 = vst.msk [vmem:[#allocation2 + $0x4] sm:$0xf] %vm968, %v958
          %971 = vst.msk [vmem:[#allocation2 + $0x8] sm:$0xf] %vm968, %v962
          %972 = vst.msk [vmem:[#allocation2 + $0xc] sm:$0xf] %vm968, %v966
          %v973 = vcombine.low %v872, %v888
          %v975 = vunpack.c.l.s4 1983009808
          %v976 = vunpack.c.0.s8 %v975
          %v977 = vlaneseq
          %v978 = vshrl.u32 %v977, 7
          %v979 = vsub.s32 %v976, %v978
          %v980 = vrot.slane %v973, %v979
          %v981 = vcombine.low %v880, %v896
          %v983 = vunpack.c.l.s4 1983009808
          %v984 = vunpack.c.0.s8 %v983
          %v985 = vlaneseq
          %v986 = vshrl.u32 %v985, 7
          %v987 = vsub.s32 %v984, %v986
          %v988 = vrot.slane %v981, %v987
          %v989 = vcombine.low %v980, %v988
          %v991 = vunpack.c.l.s4 1934713408
          %v992 = vunpack.c.0.s8 %v991
          %v993 = vlaneseq
          %v994 = vshrl.u32 %v993, 7
          %v995 = vsub.s32 %v992, %v994
          %v996 = vrot.slane %v989, %v995
          %v997 = vcombine.high %v996, 0
          %v998 = vcombine.low %v876, %v892
          %v1000 = vunpack.c.l.s4 1983009808
          %v1001 = vunpack.c.0.s8 %v1000
          %v1002 = vlaneseq
          %v1003 = vshrl.u32 %v1002, 7
          %v1004 = vsub.s32 %v1001, %v1003
          %v1005 = vrot.slane %v998, %v1004
          %v1006 = vcombine.low %v884, %v900
          %v1008 = vunpack.c.l.s4 1983009808
          %v1009 = vunpack.c.0.s8 %v1008
          %v1010 = vlaneseq
          %v1011 = vshrl.u32 %v1010, 7
          %v1012 = vsub.s32 %v1009, %v1011
          %v1013 = vrot.slane %v1006, %v1012
          %v1014 = vcombine.low %v1005, %v1013
          %v1016 = vunpack.c.l.s4 1934713408
          %v1017 = vunpack.c.0.s8 %v1016
          %v1018 = vlaneseq
          %v1019 = vshrl.u32 %v1018, 7
          %v1020 = vsub.s32 %v1017, %v1019
          %v1021 = vrot.slane %v1014, %v1020
          %v1022 = vcombine.high %v1021, 0
          %v1025 = vpack.i.b16 %v1021, %v996
          %v1027 = vshrl.u32 %v996, 16
          %v1028 = vshrl.u32 %v1021, 16
          %v1029 = vpack.i.b16 %v1028, %v1027
          %v1033 = vpack.i.b16 %v1022, %v997
          %v1035 = vshrl.u32 %v997, 16
          %v1036 = vshrl.u32 %v1022, 16
          %v1037 = vpack.i.b16 %v1036, %v1035
          %1039 = vst.msk [vmem:[#allocation3] sm:$0xf] %vm968, %v1025
          %1040 = vst.msk [vmem:[#allocation3 + $0x4] sm:$0xf] %vm968, %v1029
          %1041 = vst.msk [vmem:[#allocation3 + $0x8] sm:$0xf] %vm968, %v1033
          %1042 = vst.msk [vmem:[#allocation3 + $0xc] sm:$0xf] %vm968, %v1037
        $region80: #{tpu_custom_call.1} parent=55 // pred_fallthru
          _
        %s1043 = smul.u32 %s38, 8
        %s1044 = sshra.s32 %s1043, 3
        %s1045 = sand.u32 %s1043, 7
        %s1046 = smul.addr %s1044, 4
        %s1047 = scalar_lea.vmem %s402, %s1046 [#allocation4]
        %v1048 = vld [vmem:[%s1047] sm:$0xf]
        %v1049 = vld [vmem:[#allocation7] sm:$0xf]
        %v1050 = vld [vmem:[#allocation7 + $0x4] sm:$0xf]
        %v1051 = vld [vmem:[#allocation7 + $0x8] sm:$0xf]
        %v1052 = vld [vmem:[#allocation7 + $0xc] sm:$0xf]
        %v1053 = vld [vmem:[#allocation7 + $0x10] sm:$0xf]
        %v1054 = vld [vmem:[#allocation7 + $0x14] sm:$0xf]
        %v1055 = vld [vmem:[#allocation7 + $0x18] sm:$0xf]
        %v1056 = vld [vmem:[#allocation7 + $0x1c] sm:$0xf]
        %v1057 = vld [vmem:[#allocation7 + $0x20] sm:$0xf]
        %v1058 = vld [vmem:[#allocation7 + $0x24] sm:$0xf]
        %v1059 = vld [vmem:[#allocation7 + $0x28] sm:$0xf]
        %v1060 = vld [vmem:[#allocation7 + $0x2c] sm:$0xf]
        %v1061 = vld [vmem:[#allocation7 + $0x30] sm:$0xf]
        %v1062 = vld [vmem:[#allocation7 + $0x34] sm:$0xf]
        %v1063 = vld [vmem:[#allocation7 + $0x38] sm:$0xf]
        %v1064 = vld [vmem:[#allocation7 + $0x3c] sm:$0xf]
        %v1065 = vld [vmem:[%s5] sm:$0x1]
        %v1067 = vlaneseq
        %v1068 = vshrl.u32 %v1067, 7
        %v1069 = vsub.s32 0, %v1068
        %v1070 = vrot.slane %v1065, %v1069
        %v1088 = vunpack.c.l.b16 %v1049
        %v1089 = vunpack.c.l.b16 %v1050
        %v1090 = vunpack.c.l.b16 %v1051
        %v1091 = vunpack.c.l.b16 %v1052
        %v1092 = vunpack.c.l.b16 %v1053
        %v1093 = vunpack.c.l.b16 %v1054
        %v1094 = vunpack.c.l.b16 %v1055
        %v1095 = vunpack.c.l.b16 %v1056
        %v1096 = vunpack.c.l.b16 %v1057
        %v1097 = vunpack.c.l.b16 %v1058
        %v1098 = vunpack.c.l.b16 %v1059
        %v1099 = vunpack.c.l.b16 %v1060
        %v1100 = vunpack.c.l.b16 %v1061
        %v1101 = vunpack.c.l.b16 %v1062
        %v1102 = vunpack.c.l.b16 %v1063
        %v1103 = vunpack.c.l.b16 %v1064
        %v1104 = vpack.c.b16 %v1089, %v1088
        %v1105 = vpack.c.b16 %v1091, %v1090
        %v1106 = vpack.c.b16 %v1093, %v1092
        %v1107 = vpack.c.b16 %v1095, %v1094
        %v1108 = vpack.c.b16 %v1097, %v1096
        %v1109 = vpack.c.b16 %v1099, %v1098
        %v1110 = vpack.c.b16 %v1101, %v1100
        %v1111 = vpack.c.b16 %v1103, %v1102
        %1120 = vmatprep.subr.bf16.mxu0 0
        %1121 = vmatpush1.bf16.msra.mxu0 %v1104
        %1122 = vmatprep.subr.bf16.mxu0 0
        %1123 = vmatpush1.bf16.msra.mxu0 %v1105
        %1124 = vmatprep.subr.bf16.mxu0 0
        %1125 = vmatpush1.bf16.msra.mxu0 %v1106
        %1126 = vmatprep.subr.bf16.mxu0 0
        %1127 = vmatpush1.bf16.msra.mxu0 %v1107
        %1128 = vmatprep.subr.bf16.mxu0 0
        %1129 = vmatpush1.bf16.msra.mxu0 %v1108
        %1130 = vmatprep.subr.bf16.mxu0 0
        %1131 = vmatpush1.bf16.msra.mxu0 %v1109
        %1132 = vmatprep.subr.bf16.mxu0 0
        %1133 = vmatpush1.bf16.msra.mxu0 %v1110
        %1134 = vmatprep.subr.bf16.mxu0 0
        %1135 = vmatpush1.bf16.msra.mxu0 %v1111
        %1136 = vmatprep.subr.bf16.mxu0 0
        %1137 = vmatpush1.bf16.msra.mxu0 0
        %1138 = vmatprep.subr.bf16.mxu0 0
        %1139 = vmatpush1.bf16.msra.mxu0 0
        %1140 = vmatprep.subr.bf16.mxu0 0
        %1141 = vmatpush1.bf16.msra.mxu0 0
        %1142 = vmatprep.subr.bf16.mxu0 0
        %1143 = vmatpush1.bf16.msra.mxu0 0
        %1144 = vmatprep.subr.bf16.mxu0 0
        %1145 = vmatpush1.bf16.msra.mxu0 0
        %1146 = vmatprep.subr.bf16.mxu0 0
        %1147 = vmatpush1.bf16.msra.mxu0 0
        %1148 = vmatprep.subr.bf16.mxu0 0
        %1149 = vmatpush1.bf16.msra.mxu0 0
        %1150 = vmatprep.subr.bf16.mxu0 0
        %1151 = vmatpush1.bf16.msra.mxu0 0
        %1152 = vmatprep.mubr.bf16.mxu0 0
        %1153 = vmatmul.mubr.bf16.gmra.mrb[0].mxu0 %v1048
        %v1154 = vpop.f32.mrb[0].mxu0
        %v1155 = vadd.f32 %v1070, %v1154
        %v1156 = vpop.f32.mrb[0].mxu0
        %v1157 = vpop.f32.mrb[0].mxu0
        %v1158 = vpop.f32.mrb[0].mxu0
        %1159 = vdwg.mxu0
        %v1160 = vmul.f32 %v1155, 0.17677669
        %v1161 = vpack.c.bf16 %v1160, %v1160
        %1163 = vrot.lane.b32.xlu0 %v1161, 96
        %v1164 = vpop.permute.xlu0 %1163
        %1165 = vrot.lane.b32.xlu0 %v1161, 64
        %v1166 = vpop.permute.xlu0 %1165
        %1167 = vrot.lane.b32.xlu0 %v1161, 32
        %v1168 = vpop.permute.xlu0 %1167
        %v1169 = vld [vmem:[#allocation2] sm:$0xf]
        %v1170 = vld [vmem:[#allocation2 + $0x4] sm:$0xf]
        %v1171 = vld [vmem:[#allocation2 + $0x8] sm:$0xf]
        %v1172 = vld [vmem:[#allocation2 + $0xc] sm:$0xf]
        %v1173 = vld [vmem:[#allocation3] sm:$0xf]
        %v1174 = vld [vmem:[#allocation3 + $0x4] sm:$0xf]
        %v1175 = vld [vmem:[#allocation3 + $0x8] sm:$0xf]
        %v1176 = vld [vmem:[#allocation3 + $0xc] sm:$0xf]
        %vm1177 = vcmask 261120
        %v1179 = vsel %vm1177, %v1161, 0
        %v1182 = vsel %vm1177, %v1169, 0
        %1184 = vmatprep.subr.bf16.mxu0 0
        %1185 = vmatpush1.bf16.xpose.msra.mxu0 %v1182
        %1186 = vmatprep.subr.bf16.mxu0 0
        %1187 = vmatpush1.bf16.xpose.msra.mxu0 0
        %1188 = vmatprep.subr.bf16.mxu0 0
        %1189 = vmatpush1.bf16.xpose.msra.mxu0 0
        %1190 = vmatprep.subr.bf16.mxu0 0
        %1191 = vmatpush1.bf16.xpose.msra.mxu0 0
        %1192 = vmatprep.subr.bf16.mxu0 0
        %1193 = vmatpush1.bf16.xpose.msra.mxu0 0
        %1194 = vmatprep.subr.bf16.mxu0 0
        %1195 = vmatpush1.bf16.xpose.msra.mxu0 0
        %1196 = vmatprep.subr.bf16.mxu0 0
        %1197 = vmatpush1.bf16.xpose.msra.mxu0 0
        %1198 = vmatprep.subr.bf16.mxu0 0
        %1199 = vmatpush1.bf16.xpose.msra.mxu0 0
        %1200 = vmatprep.subr.bf16.mxu0 0
        %1201 = vmatpush1.bf16.xpose.msra.mxu0 0
        %1202 = vmatprep.subr.bf16.mxu0 0
        %1203 = vmatpush1.bf16.xpose.msra.mxu0 0
        %1204 = vmatprep.subr.bf16.mxu0 0
        %1205 = vmatpush1.bf16.xpose.msra.mxu0 0
        %1206 = vmatprep.subr.bf16.mxu0 0
        %1207 = vmatpush1.bf16.xpose.msra.mxu0 0
        %1208 = vmatprep.subr.bf16.mxu0 0
        %1209 = vmatpush1.bf16.xpose.msra.mxu0 0
        %1210 = vmatprep.subr.bf16.mxu0 0
        %1211 = vmatpush1.bf16.xpose.msra.mxu0 0
        %1212 = vmatprep.subr.bf16.mxu0 0
        %1213 = vmatpush1.bf16.xpose.msra.mxu0 0
        %1214 = vmatprep.subr.bf16.mxu0 0
        %1215 = vmatpush1.bf16.xpose.msra.mxu0 0
        %1216 = vmatprep.mubr.bf16.mxu0 0
        %1217 = vmatmul.mubr.bf16.gmra.mrb[0].mxu0 %v1179
        %v1218 = vpop.f32.mrb[0].mxu0
        %v1219 = vadd.f32 0.0, %v1218
        %v1220 = vpop.f32.mrb[0].mxu0
        %v1221 = vpop.f32.mrb[0].mxu0
        %v1222 = vpop.f32.mrb[0].mxu0
        %1223 = vdwg.mxu0
        %v1225 = vsel %vm1177, %v1164, 0
        %v1228 = vsel %vm1177, %v1170, 0
        %1230 = vmatprep.subr.bf16.mxu0 0
        %1231 = vmatpush1.bf16.xpose.msra.mxu0 %v1228
        %1232 = vmatprep.subr.bf16.mxu0 0
        %1233 = vmatpush1.bf16.xpose.msra.mxu0 0
        %1234 = vmatprep.subr.bf16.mxu0 0
        %1235 = vmatpush1.bf16.xpose.msra.mxu0 0
        %1236 = vmatprep.subr.bf16.mxu0 0
        %1237 = vmatpush1.bf16.xpose.msra.mxu0 0
        %1238 = vmatprep.subr.bf16.mxu0 0
        %1239 = vmatpush1.bf16.xpose.msra.mxu0 0
        %1240 = vmatprep.subr.bf16.mxu0 0
        %1241 = vmatpush1.bf16.xpose.msra.mxu0 0
        %1242 = vmatprep.subr.bf16.mxu0 0
        %1243 = vmatpush1.bf16.xpose.msra.mxu0 0
        %1244 = vmatprep.subr.bf16.mxu0 0
        %1245 = vmatpush1.bf16.xpose.msra.mxu0 0
        %1246 = vmatprep.subr.bf16.mxu0 0
        %1247 = vmatpush1.bf16.xpose.msra.mxu0 0
        %1248 = vmatprep.subr.bf16.mxu0 0
        %1249 = vmatpush1.bf16.xpose.msra.mxu0 0
        %1250 = vmatprep.subr.bf16.mxu0 0
        %1251 = vmatpush1.bf16.xpose.msra.mxu0 0
        %1252 = vmatprep.subr.bf16.mxu0 0
        %1253 = vmatpush1.bf16.xpose.msra.mxu0 0
        %1254 = vmatprep.subr.bf16.mxu0 0
        %1255 = vmatpush1.bf16.xpose.msra.mxu0 0
        %1256 = vmatprep.subr.bf16.mxu0 0
        %1257 = vmatpush1.bf16.xpose.msra.mxu0 0
        %1258 = vmatprep.subr.bf16.mxu0 0
        %1259 = vmatpush1.bf16.xpose.msra.mxu0 0
        %1260 = vmatprep.subr.bf16.mxu0 0
        %1261 = vmatpush1.bf16.xpose.msra.mxu0 0
        %1262 = vmatprep.mubr.bf16.mxu0 0
        %1263 = vmatmul.mubr.bf16.gmra.mrb[0].mxu0 %v1225
        %v1264 = vpop.f32.mrb[0].mxu0
        %v1265 = vadd.f32 0.0, %v1264
        %v1266 = vpop.f32.mrb[0].mxu0
        %v1267 = vpop.f32.mrb[0].mxu0
        %v1268 = vpop.f32.mrb[0].mxu0
        %1269 = vdwg.mxu0
        %v1271 = vsel %vm1177, %v1166, 0
        %v1274 = vsel %vm1177, %v1171, 0
        %1276 = vmatprep.subr.bf16.mxu0 0
        %1277 = vmatpush1.bf16.xpose.msra.mxu0 %v1274
        %1278 = vmatprep.subr.bf16.mxu0 0
        %1279 = vmatpush1.bf16.xpose.msra.mxu0 0
        %1280 = vmatprep.subr.bf16.mxu0 0
        %1281 = vmatpush1.bf16.xpose.msra.mxu0 0
        %1282 = vmatprep.subr.bf16.mxu0 0
        %1283 = vmatpush1.bf16.xpose.msra.mxu0 0
        %1284 = vmatprep.subr.bf16.mxu0 0
        %1285 = vmatpush1.bf16.xpose.msra.mxu0 0
        %1286 = vmatprep.subr.bf16.mxu0 0
        %1287 = vmatpush1.bf16.xpose.msra.mxu0 0
        %1288 = vmatprep.subr.bf16.mxu0 0
        %1289 = vmatpush1.bf16.xpose.msra.mxu0 0
        %1290 = vmatprep.subr.bf16.mxu0 0
        %1291 = vmatpush1.bf16.xpose.msra.mxu0 0
        %1292 = vmatprep.subr.bf16.mxu0 0
        %1293 = vmatpush1.bf16.xpose.msra.mxu0 0
        %1294 = vmatprep.subr.bf16.mxu0 0
        %1295 = vmatpush1.bf16.xpose.msra.mxu0 0
        %1296 = vmatprep.subr.bf16.mxu0 0
        %1297 = vmatpush1.bf16.xpose.msra.mxu0 0
        %1298 = vmatprep.subr.bf16.mxu0 0
        %1299 = vmatpush1.bf16.xpose.msra.mxu0 0
        %1300 = vmatprep.subr.bf16.mxu0 0
        %1301 = vmatpush1.bf16.xpose.msra.mxu0 0
        %1302 = vmatprep.subr.bf16.mxu0 0
        %1303 = vmatpush1.bf16.xpose.msra.mxu0 0
        %1304 = vmatprep.subr.bf16.mxu0 0
        %1305 = vmatpush1.bf16.xpose.msra.mxu0 0
        %1306 = vmatprep.subr.bf16.mxu0 0
        %1307 = vmatpush1.bf16.xpose.msra.mxu0 0
        %1308 = vmatprep.mubr.bf16.mxu0 0
        %1309 = vmatmul.mubr.bf16.gmra.mrb[0].mxu0 %v1271
        %v1310 = vpop.f32.mrb[0].mxu0
        %v1311 = vadd.f32 0.0, %v1310
        %v1312 = vpop.f32.mrb[0].mxu0
        %v1313 = vpop.f32.mrb[0].mxu0
        %v1314 = vpop.f32.mrb[0].mxu0
        %1315 = vdwg.mxu0
        %v1317 = vsel %vm1177, %v1168, 0
        %v1320 = vsel %vm1177, %v1172, 0
        %1322 = vmatprep.subr.bf16.mxu0 0
        %1323 = vmatpush1.bf16.xpose.msra.mxu0 %v1320
        %1324 = vmatprep.subr.bf16.mxu0 0
        %1325 = vmatpush1.bf16.xpose.msra.mxu0 0
        %1326 = vmatprep.subr.bf16.mxu0 0
        %1327 = vmatpush1.bf16.xpose.msra.mxu0 0
        %1328 = vmatprep.subr.bf16.mxu0 0
        %1329 = vmatpush1.bf16.xpose.msra.mxu0 0
        %1330 = vmatprep.subr.bf16.mxu0 0
        %1331 = vmatpush1.bf16.xpose.msra.mxu0 0
        %1332 = vmatprep.subr.bf16.mxu0 0
        %1333 = vmatpush1.bf16.xpose.msra.mxu0 0
        %1334 = vmatprep.subr.bf16.mxu0 0
        %1335 = vmatpush1.bf16.xpose.msra.mxu0 0
        %1336 = vmatprep.subr.bf16.mxu0 0
        %1337 = vmatpush1.bf16.xpose.msra.mxu0 0
        %1338 = vmatprep.subr.bf16.mxu0 0
        %1339 = vmatpush1.bf16.xpose.msra.mxu0 0
        %1340 = vmatprep.subr.bf16.mxu0 0
        %1341 = vmatpush1.bf16.xpose.msra.mxu0 0
        %1342 = vmatprep.subr.bf16.mxu0 0
        %1343 = vmatpush1.bf16.xpose.msra.mxu0 0
        %1344 = vmatprep.subr.bf16.mxu0 0
        %1345 = vmatpush1.bf16.xpose.msra.mxu0 0
        %1346 = vmatprep.subr.bf16.mxu0 0
        %1347 = vmatpush1.bf16.xpose.msra.mxu0 0
        %1348 = vmatprep.subr.bf16.mxu0 0
        %1349 = vmatpush1.bf16.xpose.msra.mxu0 0
        %1350 = vmatprep.subr.bf16.mxu0 0
        %1351 = vmatpush1.bf16.xpose.msra.mxu0 0
        %1352 = vmatprep.subr.bf16.mxu0 0
        %1353 = vmatpush1.bf16.xpose.msra.mxu0 0
        %1354 = vmatprep.mubr.bf16.mxu0 0
        %1355 = vmatmul.mubr.bf16.gmra.mrb[0].mxu0 %v1317
        %v1356 = vpop.f32.mrb[0].mxu0
        %v1357 = vadd.f32 0.0, %v1356
        %v1358 = vpop.f32.mrb[0].mxu0
        %v1359 = vpop.f32.mrb[0].mxu0
        %v1360 = vpop.f32.mrb[0].mxu0
        %1361 = vdwg.mxu0
        %vm1362 = vcmask 64512
        %v1363 = vsel %vm1362, %v1219, -inf
        %1364 = vmax.xlane.f32.xlu0 %v1363
        %v1365 = vpop.xlane.xlu0 %1364
        %v1366 = vsel %vm1362, %v1265, -inf
        %1367 = vmax.xlane.f32.xlu0 %v1366
        %v1368 = vpop.xlane.xlu0 %1367
        %v1369 = vsel %vm1362, %v1311, -inf
        %1370 = vmax.xlane.f32.xlu0 %v1369
        %v1371 = vpop.xlane.xlu0 %1370
        %v1372 = vsel %vm1362, %v1357, -inf
        %1373 = vmax.xlane.f32.xlu0 %v1372
        %v1374 = vpop.xlane.xlu0 %1373
        %v1375 = vsub.f32 %v1219, %v1365
        %v1376 = vsub.f32 %v1265, %v1368
        %v1377 = vsub.f32 %v1311, %v1371
        %v1378 = vsub.f32 %v1357, %v1374
        %v1379 = vmul.f32 %v1375, 1.442695
        %v1380 = vpow.pop %v1379
        %v1381 = vmul.f32 %v1376, 1.442695
        %v1382 = vpow.pop %v1381
        %v1383 = vmul.f32 %v1377, 1.442695
        %v1384 = vpow.pop %v1383
        %v1385 = vmul.f32 %v1378, 1.442695
        %v1386 = vpow.pop %v1385
        %v1387 = vsel %vm1362, %v1380, 0.0
        %1388 = vadd.xlane.f32.xlu0 %v1387
        %v1389 = vpop.xlane.xlu0 %1388
        %v1390 = vsel %vm1362, %v1382, 0.0
        %1391 = vadd.xlane.f32.xlu0 %v1390
        %v1392 = vpop.xlane.xlu0 %1391
        %v1393 = vsel %vm1362, %v1384, 0.0
        %1394 = vadd.xlane.f32.xlu0 %v1393
        %v1395 = vpop.xlane.xlu0 %1394
        %v1396 = vsel %vm1362, %v1386, 0.0
        %1397 = vadd.xlane.f32.xlu0 %v1396
        %v1398 = vpop.xlane.xlu0 %1397
        %v1399 = vpack.c.bf16 %v1380, %v1380
        %v1400 = vpack.c.bf16 %v1382, %v1382
        %v1401 = vpack.c.bf16 %v1384, %v1384
        %v1402 = vpack.c.bf16 %v1386, %v1386
        %1403 = vxpose.xlu0.c.b16.start [1/8] %v1173, 128
        %1404 = vxpose.xlu0.c.b16.cont [2/8] 0, 128
        %1405 = vxpose.xlu0.c.b16.cont [3/8] 0, 128
        %1406 = vxpose.xlu0.c.b16.cont [4/8] 0, 128
        %1407 = vxpose.xlu0.c.b16.cont [5/8] 0, 128
        %1408 = vxpose.xlu0.c.b16.cont [6/8] 0, 128
        %1409 = vxpose.xlu0.c.b16.cont [7/8] 0, 128
        %1410 = vxpose.xlu0.c.b16.end [8/8] 0, 128
        %v1411 = vpop.trf.xlu0
        %v1412 = vpop.trf.xlu0
        %v1413 = vpop.trf.xlu0
        %v1414 = vpop.trf.xlu0
        %v1415 = vpop.trf.xlu0
        %v1416 = vpop.trf.xlu0
        %v1417 = vpop.trf.xlu0
        %v1418 = vpop.trf.xlu0
        %v1420 = vsel %vm1362, %v1411, 0
        %v1423 = vsel %vm1362, %v1412, 0
        %v1426 = vsel %vm1362, %v1399, 0
        %1428 = vmatprep.subr.bf16.mxu0 0
        %1429 = vmatpush1.bf16.xpose.msra.mxu0 %v1426
        %1430 = vmatprep.subr.bf16.mxu0 0
        %1431 = vmatpush1.bf16.xpose.msra.mxu0 0
        %1432 = vmatprep.subr.bf16.mxu0 0
        %1433 = vmatpush1.bf16.xpose.msra.mxu0 0
        %1434 = vmatprep.subr.bf16.mxu0 0
        %1435 = vmatpush1.bf16.xpose.msra.mxu0 0
        %1436 = vmatprep.subr.bf16.mxu0 0
        %1437 = vmatpush1.bf16.xpose.msra.mxu0 0
        %1438 = vmatprep.subr.bf16.mxu0 0
        %1439 = vmatpush1.bf16.xpose.msra.mxu0 0
        %1440 = vmatprep.subr.bf16.mxu0 0
        %1441 = vmatpush1.bf16.xpose.msra.mxu0 0
        %1442 = vmatprep.subr.bf16.mxu0 0
        %1443 = vmatpush1.bf16.xpose.msra.mxu0 0
        %1444 = vmatprep.subr.bf16.mxu0 0
        %1445 = vmatpush1.bf16.xpose.msra.mxu0 0
        %1446 = vmatprep.subr.bf16.mxu0 0
        %1447 = vmatpush1.bf16.xpose.msra.mxu0 0
        %1448 = vmatprep.subr.bf16.mxu0 0
        %1449 = vmatpush1.bf16.xpose.msra.mxu0 0
        %1450 = vmatprep.subr.bf16.mxu0 0
        %1451 = vmatpush1.bf16.xpose.msra.mxu0 0
        %1452 = vmatprep.subr.bf16.mxu0 0
        %1453 = vmatpush1.bf16.xpose.msra.mxu0 0
        %1454 = vmatprep.subr.bf16.mxu0 0
        %1455 = vmatpush1.bf16.xpose.msra.mxu0 0
        %1456 = vmatprep.subr.bf16.mxu0 0
        %1457 = vmatpush1.bf16.xpose.msra.mxu0 0
        %1458 = vmatprep.subr.bf16.mxu0 0
        %1459 = vmatpush1.bf16.xpose.msra.mxu0 0
        %1460 = vmatprep.mubr.bf16.mxu0 0
        %1461 = vmatmul.mubr.bf16.gmra.mrb[0].mxu0 %v1420
        %v1462 = vpop.f32.mrb[0].mxu0
        %v1463 = vadd.f32 0.0, %v1462
        %v1464 = vpop.f32.mrb[0].mxu0
        %v1465 = vpop.f32.mrb[0].mxu0
        %v1466 = vadd.f32 0.0, %v1465
        %v1467 = vpop.f32.mrb[0].mxu0
        %1468 = vmatprep.mubr.bf16.mxu0 0
        %1469 = vmatmul.mubr.bf16.gmra.mrb[0].mxu0 %v1423
        %v1470 = vpop.f32.mrb[0].mxu0
        %v1471 = vadd.f32 0.0, %v1470
        %v1472 = vpop.f32.mrb[0].mxu0
        %v1473 = vpop.f32.mrb[0].mxu0
        %v1474 = vadd.f32 0.0, %v1473
        %v1475 = vpop.f32.mrb[0].mxu0
        %1476 = vdwg.mxu0
        %1477 = vxpose.xlu0.c.b16.start [1/8] %v1174, 128
        %1478 = vxpose.xlu0.c.b16.cont [2/8] 0, 128
        %1479 = vxpose.xlu0.c.b16.cont [3/8] 0, 128
        %1480 = vxpose.xlu0.c.b16.cont [4/8] 0, 128
        %1481 = vxpose.xlu0.c.b16.cont [5/8] 0, 128
        %1482 = vxpose.xlu0.c.b16.cont [6/8] 0, 128
        %1483 = vxpose.xlu0.c.b16.cont [7/8] 0, 128
        %1484 = vxpose.xlu0.c.b16.end [8/8] 0, 128
        %v1485 = vpop.trf.xlu0
        %v1486 = vpop.trf.xlu0
        %v1487 = vpop.trf.xlu0
        %v1488 = vpop.trf.xlu0
        %v1489 = vpop.trf.xlu0
        %v1490 = vpop.trf.xlu0
        %v1491 = vpop.trf.xlu0
        %v1492 = vpop.trf.xlu0
        %v1494 = vsel %vm1362, %v1485, 0
        %v1497 = vsel %vm1362, %v1486, 0
        %v1500 = vsel %vm1362, %v1400, 0
        %1502 = vmatprep.subr.bf16.mxu0 0
        %1503 = vmatpush1.bf16.xpose.msra.mxu0 %v1500
        %1504 = vmatprep.subr.bf16.mxu0 0
        %1505 = vmatpush1.bf16.xpose.msra.mxu0 0
        %1506 = vmatprep.subr.bf16.mxu0 0
        %1507 = vmatpush1.bf16.xpose.msra.mxu0 0
        %1508 = vmatprep.subr.bf16.mxu0 0
        %1509 = vmatpush1.bf16.xpose.msra.mxu0 0
        %1510 = vmatprep.subr.bf16.mxu0 0
        %1511 = vmatpush1.bf16.xpose.msra.mxu0 0
        %1512 = vmatprep.subr.bf16.mxu0 0
        %1513 = vmatpush1.bf16.xpose.msra.mxu0 0
        %1514 = vmatprep.subr.bf16.mxu0 0
        %1515 = vmatpush1.bf16.xpose.msra.mxu0 0
        %1516 = vmatprep.subr.bf16.mxu0 0
        %1517 = vmatpush1.bf16.xpose.msra.mxu0 0
        %1518 = vmatprep.subr.bf16.mxu0 0
        %1519 = vmatpush1.bf16.xpose.msra.mxu0 0
        %1520 = vmatprep.subr.bf16.mxu0 0
        %1521 = vmatpush1.bf16.xpose.msra.mxu0 0
        %1522 = vmatprep.subr.bf16.mxu0 0
        %1523 = vmatpush1.bf16.xpose.msra.mxu0 0
        %1524 = vmatprep.subr.bf16.mxu0 0
        %1525 = vmatpush1.bf16.xpose.msra.mxu0 0
        %1526 = vmatprep.subr.bf16.mxu0 0
        %1527 = vmatpush1.bf16.xpose.msra.mxu0 0
        %1528 = vmatprep.subr.bf16.mxu0 0
        %1529 = vmatpush1.bf16.xpose.msra.mxu0 0
        %1530 = vmatprep.subr.bf16.mxu0 0
        %1531 = vmatpush1.bf16.xpose.msra.mxu0 0
        %1532 = vmatprep.subr.bf16.mxu0 0
        %1533 = vmatpush1.bf16.xpose.msra.mxu0 0
        %1534 = vmatprep.mubr.bf16.mxu0 0
        %1535 = vmatmul.mubr.bf16.gmra.mrb[0].mxu0 %v1494
        %v1536 = vpop.f32.mrb[0].mxu0
        %v1537 = vadd.f32 0.0, %v1536
        %v1538 = vpop.f32.mrb[0].mxu0
        %v1539 = vpop.f32.mrb[0].mxu0
        %v1540 = vadd.f32 0.0, %v1539
        %v1541 = vpop.f32.mrb[0].mxu0
        %1542 = vmatprep.mubr.bf16.mxu0 0
        %1543 = vmatmul.mubr.bf16.gmra.mrb[0].mxu0 %v1497
        %v1544 = vpop.f32.mrb[0].mxu0
        %v1545 = vadd.f32 0.0, %v1544
        %v1546 = vpop.f32.mrb[0].mxu0
        %v1547 = vpop.f32.mrb[0].mxu0
        %v1548 = vadd.f32 0.0, %v1547
        %v1549 = vpop.f32.mrb[0].mxu0
        %1550 = vdwg.mxu0
        %1551 = vxpose.xlu0.c.b16.start [1/8] %v1175, 128
        %1552 = vxpose.xlu0.c.b16.cont [2/8] 0, 128
        %1553 = vxpose.xlu0.c.b16.cont [3/8] 0, 128
        %1554 = vxpose.xlu0.c.b16.cont [4/8] 0, 128
        %1555 = vxpose.xlu0.c.b16.cont [5/8] 0, 128
        %1556 = vxpose.xlu0.c.b16.cont [6/8] 0, 128
        %1557 = vxpose.xlu0.c.b16.cont [7/8] 0, 128
        %1558 = vxpose.xlu0.c.b16.end [8/8] 0, 128
        %v1559 = vpop.trf.xlu0
        %v1560 = vpop.trf.xlu0
        %v1561 = vpop.trf.xlu0
        %v1562 = vpop.trf.xlu0
        %v1563 = vpop.trf.xlu0
        %v1564 = vpop.trf.xlu0
        %v1565 = vpop.trf.xlu0
        %v1566 = vpop.trf.xlu0
        %v1568 = vsel %vm1362, %v1559, 0
        %v1571 = vsel %vm1362, %v1560, 0
        %v1574 = vsel %vm1362, %v1401, 0
        %1576 = vmatprep.subr.bf16.mxu0 0
        %1577 = vmatpush1.bf16.xpose.msra.mxu0 %v1574
        %1578 = vmatprep.subr.bf16.mxu0 0
        %1579 = vmatpush1.bf16.xpose.msra.mxu0 0
        %1580 = vmatprep.subr.bf16.mxu0 0
        %1581 = vmatpush1.bf16.xpose.msra.mxu0 0
        %1582 = vmatprep.subr.bf16.mxu0 0
        %1583 = vmatpush1.bf16.xpose.msra.mxu0 0
        %1584 = vmatprep.subr.bf16.mxu0 0
        %1585 = vmatpush1.bf16.xpose.msra.mxu0 0
        %1586 = vmatprep.subr.bf16.mxu0 0
        %1587 = vmatpush1.bf16.xpose.msra.mxu0 0
        %1588 = vmatprep.subr.bf16.mxu0 0
        %1589 = vmatpush1.bf16.xpose.msra.mxu0 0
        %1590 = vmatprep.subr.bf16.mxu0 0
        %1591 = vmatpush1.bf16.xpose.msra.mxu0 0
        %1592 = vmatprep.subr.bf16.mxu0 0
        %1593 = vmatpush1.bf16.xpose.msra.mxu0 0
        %1594 = vmatprep.subr.bf16.mxu0 0
        %1595 = vmatpush1.bf16.xpose.msra.mxu0 0
        %1596 = vmatprep.subr.bf16.mxu0 0
        %1597 = vmatpush1.bf16.xpose.msra.mxu0 0
        %1598 = vmatprep.subr.bf16.mxu0 0
        %1599 = vmatpush1.bf16.xpose.msra.mxu0 0
        %1600 = vmatprep.subr.bf16.mxu0 0
        %1601 = vmatpush1.bf16.xpose.msra.mxu0 0
        %1602 = vmatprep.subr.bf16.mxu0 0
        %1603 = vmatpush1.bf16.xpose.msra.mxu0 0
        %1604 = vmatprep.subr.bf16.mxu0 0
        %1605 = vmatpush1.bf16.xpose.msra.mxu0 0
        %1606 = vmatprep.subr.bf16.mxu0 0
        %1607 = vmatpush1.bf16.xpose.msra.mxu0 0
        %1608 = vmatprep.mubr.bf16.mxu0 0
        %1609 = vmatmul.mubr.bf16.gmra.mrb[0].mxu0 %v1568
        %v1610 = vpop.f32.mrb[0].mxu0
        %v1611 = vadd.f32 0.0, %v1610
        %v1612 = vpop.f32.mrb[0].mxu0
        %v1613 = vpop.f32.mrb[0].mxu0
        %v1614 = vadd.f32 0.0, %v1613
        %v1615 = vpop.f32.mrb[0].mxu0
        %1616 = vmatprep.mubr.bf16.mxu0 0
        %1617 = vmatmul.mubr.bf16.gmra.mrb[0].mxu0 %v1571
        %v1618 = vpop.f32.mrb[0].mxu0
        %v1619 = vadd.f32 0.0, %v1618
        %v1620 = vpop.f32.mrb[0].mxu0
        %v1621 = vpop.f32.mrb[0].mxu0
        %v1622 = vadd.f32 0.0, %v1621
        %v1623 = vpop.f32.mrb[0].mxu0
        %1624 = vdwg.mxu0
        %1625 = vxpose.xlu0.c.b16.start [1/8] %v1176, 128
        %1626 = vxpose.xlu0.c.b16.cont [2/8] 0, 128
        %1627 = vxpose.xlu0.c.b16.cont [3/8] 0, 128
        %1628 = vxpose.xlu0.c.b16.cont [4/8] 0, 128
        %1629 = vxpose.xlu0.c.b16.cont [5/8] 0, 128
        %1630 = vxpose.xlu0.c.b16.cont [6/8] 0, 128
        %1631 = vxpose.xlu0.c.b16.cont [7/8] 0, 128
        %1632 = vxpose.xlu0.c.b16.end [8/8] 0, 128
        %v1633 = vpop.trf.xlu0
        %v1634 = vpop.trf.xlu0
        %v1635 = vpop.trf.xlu0
        %v1636 = vpop.trf.xlu0
        %v1637 = vpop.trf.xlu0
        %v1638 = vpop.trf.xlu0
        %v1639 = vpop.trf.xlu0
        %v1640 = vpop.trf.xlu0
        %v1642 = vsel %vm1362, %v1633, 0
        %v1645 = vsel %vm1362, %v1634, 0
        %v1648 = vsel %vm1362, %v1402, 0
        %1650 = vmatprep.subr.bf16.mxu0 0
        %1651 = vmatpush1.bf16.xpose.msra.mxu0 %v1648
        %1652 = vmatprep.subr.bf16.mxu0 0
        %1653 = vmatpush1.bf16.xpose.msra.mxu0 0
        %1654 = vmatprep.subr.bf16.mxu0 0
        %1655 = vmatpush1.bf16.xpose.msra.mxu0 0
        %1656 = vmatprep.subr.bf16.mxu0 0
        %1657 = vmatpush1.bf16.xpose.msra.mxu0 0
        %1658 = vmatprep.subr.bf16.mxu0 0
        %1659 = vmatpush1.bf16.xpose.msra.mxu0 0
        %1660 = vmatprep.subr.bf16.mxu0 0
        %1661 = vmatpush1.bf16.xpose.msra.mxu0 0
        %1662 = vmatprep.subr.bf16.mxu0 0
        %1663 = vmatpush1.bf16.xpose.msra.mxu0 0
        %1664 = vmatprep.subr.bf16.mxu0 0
        %1665 = vmatpush1.bf16.xpose.msra.mxu0 0
        %1666 = vmatprep.subr.bf16.mxu0 0
        %1667 = vmatpush1.bf16.xpose.msra.mxu0 0
        %1668 = vmatprep.subr.bf16.mxu0 0
        %1669 = vmatpush1.bf16.xpose.msra.mxu0 0
        %1670 = vmatprep.subr.bf16.mxu0 0
        %1671 = vmatpush1.bf16.xpose.msra.mxu0 0
        %1672 = vmatprep.subr.bf16.mxu0 0
        %1673 = vmatpush1.bf16.xpose.msra.mxu0 0
        %1674 = vmatprep.subr.bf16.mxu0 0
        %1675 = vmatpush1.bf16.xpose.msra.mxu0 0
        %1676 = vmatprep.subr.bf16.mxu0 0
        %1677 = vmatpush1.bf16.xpose.msra.mxu0 0
        %1678 = vmatprep.subr.bf16.mxu0 0
        %1679 = vmatpush1.bf16.xpose.msra.mxu0 0
        %1680 = vmatprep.subr.bf16.mxu0 0
        %1681 = vmatpush1.bf16.xpose.msra.mxu0 0
        %1682 = vmatprep.mubr.bf16.mxu0 0
        %1683 = vmatmul.mubr.bf16.gmra.mrb[0].mxu0 %v1642
        %v1684 = vpop.f32.mrb[0].mxu0
        %v1685 = vadd.f32 0.0, %v1684
        %v1686 = vpop.f32.mrb[0].mxu0
        %v1687 = vpop.f32.mrb[0].mxu0
        %v1688 = vadd.f32 0.0, %v1687
        %v1689 = vpop.f32.mrb[0].mxu0
        %1690 = vmatprep.mubr.bf16.mxu0 0
        %1691 = vmatmul.mubr.bf16.gmra.mrb[0].mxu0 %v1645
        %v1692 = vpop.f32.mrb[0].mxu0
        %v1693 = vadd.f32 0.0, %v1692
        %v1694 = vpop.f32.mrb[0].mxu0
        %v1695 = vpop.f32.mrb[0].mxu0
        %v1696 = vadd.f32 0.0, %v1695
        %v1697 = vpop.f32.mrb[0].mxu0
        %1698 = vdwg.mxu0
        %1699 = vxpose.xlu0.b32.start [1/16] %v1463, 128
        %1700 = vxpose.xlu0.b32.cont [2/16] %v1466, 128
        %1701 = vxpose.xlu0.b32.cont [3/16] %v1471, 128
        %1702 = vxpose.xlu0.b32.cont [4/16] %v1474, 128
        %1703 = vxpose.xlu0.b32.cont [5/16] 0.0, 128
        %1704 = vxpose.xlu0.b32.cont [6/16] 0.0, 128
        %1705 = vxpose.xlu0.b32.cont [7/16] 0.0, 128
        %1706 = vxpose.xlu0.b32.cont [8/16] 0.0, 128
        %1707 = vxpose.xlu0.b32.cont [9/16] 0.0, 128
        %1708 = vxpose.xlu0.b32.cont [10/16] 0.0, 128
        %1709 = vxpose.xlu0.b32.cont [11/16] 0.0, 128
        %1710 = vxpose.xlu0.b32.cont [12/16] 0.0, 128
        %1711 = vxpose.xlu0.b32.cont [13/16] 0.0, 128
        %1712 = vxpose.xlu0.b32.cont [14/16] 0.0, 128
        %1713 = vxpose.xlu0.b32.cont [15/16] 0.0, 128
        %1714 = vxpose.xlu0.b32.end [16/16] 0.0, 128
        %v1715 = vpop.trf.xlu0
        %v1716 = vpop.trf.xlu0
        %v1717 = vpop.trf.xlu0
        %v1718 = vpop.trf.xlu0
        %v1719 = vpop.trf.xlu0
        %v1720 = vpop.trf.xlu0
        %v1721 = vpop.trf.xlu0
        %v1722 = vpop.trf.xlu0
        %v1723 = vpop.trf.xlu0
        %v1724 = vpop.trf.xlu0
        %v1725 = vpop.trf.xlu0
        %v1726 = vpop.trf.xlu0
        %v1727 = vpop.trf.xlu0
        %v1728 = vpop.trf.xlu0
        %v1729 = vpop.trf.xlu0
        %v1730 = vpop.trf.xlu0
        %1731 = vxpose.xlu0.b32.start [1/16] %v1537, 128
        %1732 = vxpose.xlu0.b32.cont [2/16] %v1540, 128
        %1733 = vxpose.xlu0.b32.cont [3/16] %v1545, 128
        %1734 = vxpose.xlu0.b32.cont [4/16] %v1548, 128
        %1735 = vxpose.xlu0.b32.cont [5/16] 0.0, 128
        %1736 = vxpose.xlu0.b32.cont [6/16] 0.0, 128
        %1737 = vxpose.xlu0.b32.cont [7/16] 0.0, 128
        %1738 = vxpose.xlu0.b32.cont [8/16] 0.0, 128
        %1739 = vxpose.xlu0.b32.cont [9/16] 0.0, 128
        %1740 = vxpose.xlu0.b32.cont [10/16] 0.0, 128
        %1741 = vxpose.xlu0.b32.cont [11/16] 0.0, 128
        %1742 = vxpose.xlu0.b32.cont [12/16] 0.0, 128
        %1743 = vxpose.xlu0.b32.cont [13/16] 0.0, 128
        %1744 = vxpose.xlu0.b32.cont [14/16] 0.0, 128
        %1745 = vxpose.xlu0.b32.cont [15/16] 0.0, 128
        %1746 = vxpose.xlu0.b32.end [16/16] 0.0, 128
        %v1747 = vpop.trf.xlu0
        %v1748 = vpop.trf.xlu0
        %v1749 = vpop.trf.xlu0
        %v1750 = vpop.trf.xlu0
        %v1751 = vpop.trf.xlu0
        %v1752 = vpop.trf.xlu0
        %v1753 = vpop.trf.xlu0
        %v1754 = vpop.trf.xlu0
        %v1755 = vpop.trf.xlu0
        %v1756 = vpop.trf.xlu0
        %v1757 = vpop.trf.xlu0
        %v1758 = vpop.trf.xlu0
        %v1759 = vpop.trf.xlu0
        %v1760 = vpop.trf.xlu0
        %v1761 = vpop.trf.xlu0
        %v1762 = vpop.trf.xlu0
        %1763 = vxpose.xlu0.b32.start [1/16] %v1611, 128
        %1764 = vxpose.xlu0.b32.cont [2/16] %v1614, 128
        %1765 = vxpose.xlu0.b32.cont [3/16] %v1619, 128
        %1766 = vxpose.xlu0.b32.cont [4/16] %v1622, 128
        %1767 = vxpose.xlu0.b32.cont [5/16] 0.0, 128
        %1768 = vxpose.xlu0.b32.cont [6/16] 0.0, 128
        %1769 = vxpose.xlu0.b32.cont [7/16] 0.0, 128
        %1770 = vxpose.xlu0.b32.cont [8/16] 0.0, 128
        %1771 = vxpose.xlu0.b32.cont [9/16] 0.0, 128
        %1772 = vxpose.xlu0.b32.cont [10/16] 0.0, 128
        %1773 = vxpose.xlu0.b32.cont [11/16] 0.0, 128
        %1774 = vxpose.xlu0.b32.cont [12/16] 0.0, 128
        %1775 = vxpose.xlu0.b32.cont [13/16] 0.0, 128
        %1776 = vxpose.xlu0.b32.cont [14/16] 0.0, 128
        %1777 = vxpose.xlu0.b32.cont [15/16] 0.0, 128
        %1778 = vxpose.xlu0.b32.end [16/16] 0.0, 128
        %v1779 = vpop.trf.xlu0
        %v1780 = vpop.trf.xlu0
        %v1781 = vpop.trf.xlu0
        %v1782 = vpop.trf.xlu0
        %v1783 = vpop.trf.xlu0
        %v1784 = vpop.trf.xlu0
        %v1785 = vpop.trf.xlu0
        %v1786 = vpop.trf.xlu0
        %v1787 = vpop.trf.xlu0
        %v1788 = vpop.trf.xlu0
        %v1789 = vpop.trf.xlu0
        %v1790 = vpop.trf.xlu0
        %v1791 = vpop.trf.xlu0
        %v1792 = vpop.trf.xlu0
        %v1793 = vpop.trf.xlu0
        %v1794 = vpop.trf.xlu0
        %1795 = vxpose.xlu0.b32.start [1/16] %v1685, 128
        %1796 = vxpose.xlu0.b32.cont [2/16] %v1688, 128
        %1797 = vxpose.xlu0.b32.cont [3/16] %v1693, 128
        %1798 = vxpose.xlu0.b32.cont [4/16] %v1696, 128
        %1799 = vxpose.xlu0.b32.cont [5/16] 0.0, 128
        %1800 = vxpose.xlu0.b32.cont [6/16] 0.0, 128
        %1801 = vxpose.xlu0.b32.cont [7/16] 0.0, 128
        %1802 = vxpose.xlu0.b32.cont [8/16] 0.0, 128
        %1803 = vxpose.xlu0.b32.cont [9/16] 0.0, 128
        %1804 = vxpose.xlu0.b32.cont [10/16] 0.0, 128
        %1805 = vxpose.xlu0.b32.cont [11/16] 0.0, 128
        %1806 = vxpose.xlu0.b32.cont [12/16] 0.0, 128
        %1807 = vxpose.xlu0.b32.cont [13/16] 0.0, 128
        %1808 = vxpose.xlu0.b32.cont [14/16] 0.0, 128
        %1809 = vxpose.xlu0.b32.cont [15/16] 0.0, 128
        %1810 = vxpose.xlu0.b32.end [16/16] 0.0, 128
        %v1811 = vpop.trf.xlu0
        %v1812 = vpop.trf.xlu0
        %v1813 = vpop.trf.xlu0
        %v1814 = vpop.trf.xlu0
        %v1815 = vpop.trf.xlu0
        %v1816 = vpop.trf.xlu0
        %v1817 = vpop.trf.xlu0
        %v1818 = vpop.trf.xlu0
        %v1819 = vpop.trf.xlu0
        %v1820 = vpop.trf.xlu0
        %v1821 = vpop.trf.xlu0
        %v1822 = vpop.trf.xlu0
        %v1823 = vpop.trf.xlu0
        %v1824 = vpop.trf.xlu0
        %v1825 = vpop.trf.xlu0
        %v1826 = vpop.trf.xlu0
        %v1827 = vcombine.low %v1715, %v1779
        %v1828 = vcombine.high %v1715, %v1779
        %v1830 = vunpack.c.l.s4 1983009808
        %v1831 = vunpack.c.0.s8 %v1830
        %v1832 = vlaneseq
        %v1833 = vshrl.u32 %v1832, 7
        %v1834 = vsub.s32 %v1831, %v1833
        %v1835 = vrot.slane %v1827, %v1834
        %v1837 = vunpack.c.l.s4 1983009808
        %v1838 = vunpack.c.0.s8 %v1837
        %v1839 = vlaneseq
        %v1840 = vshrl.u32 %v1839, 7
        %v1841 = vsub.s32 %v1838, %v1840
        %v1842 = vrot.slane %v1828, %v1841
        %v1843 = vcombine.low %v1747, %v1811
        %v1844 = vcombine.high %v1747, %v1811
        %v1846 = vunpack.c.l.s4 1983009808
        %v1847 = vunpack.c.0.s8 %v1846
        %v1848 = vlaneseq
        %v1849 = vshrl.u32 %v1848, 7
        %v1850 = vsub.s32 %v1847, %v1849
        %v1851 = vrot.slane %v1843, %v1850
        %v1853 = vunpack.c.l.s4 1983009808
        %v1854 = vunpack.c.0.s8 %v1853
        %v1855 = vlaneseq
        %v1856 = vshrl.u32 %v1855, 7
        %v1857 = vsub.s32 %v1854, %v1856
        %v1858 = vrot.slane %v1844, %v1857
        %v1859 = vcombine.low %v1835, %v1851
        %v1860 = vcombine.high %v1835, %v1851
        %v1862 = vunpack.c.l.s4 1934713408
        %v1863 = vunpack.c.0.s8 %v1862
        %v1864 = vlaneseq
        %v1865 = vshrl.u32 %v1864, 7
        %v1866 = vsub.s32 %v1863, %v1865
        %v1867 = vrot.slane %v1859, %v1866
        %v1869 = vunpack.c.l.s4 1934713408
        %v1870 = vunpack.c.0.s8 %v1869
        %v1871 = vlaneseq
        %v1872 = vshrl.u32 %v1871, 7
        %v1873 = vsub.s32 %v1870, %v1872
        %v1874 = vrot.slane %v1860, %v1873
        %v1875 = vcombine.low %v1842, %v1858
        %v1876 = vcombine.high %v1842, %v1858
        %v1878 = vunpack.c.l.s4 1934713408
        %v1879 = vunpack.c.0.s8 %v1878
        %v1880 = vlaneseq
        %v1881 = vshrl.u32 %v1880, 7
        %v1882 = vsub.s32 %v1879, %v1881
        %v1883 = vrot.slane %v1875, %v1882
        %v1885 = vunpack.c.l.s4 1934713408
        %v1886 = vunpack.c.0.s8 %v1885
        %v1887 = vlaneseq
        %v1888 = vshrl.u32 %v1887, 7
        %v1889 = vsub.s32 %v1886, %v1888
        %v1890 = vrot.slane %v1876, %v1889
        %v1891 = vcombine.high %v1867, 0.0
        %v1892 = vcombine.high %v1874, 0.0
        %v1893 = vcombine.high %v1883, 0.0
        %v1894 = vcombine.high %v1890, 0.0
        %v1899 = vlaneseq
        %v1900 = vand.u32 %v1899, 127
        %v1901 = vlaneseq
        %v1902 = vshrl.u32 %v1901, 7
        %v1903 = vsub.s32 %v1900, %v1902
        %v1904 = vrot.slane %v1389, %v1903
        %v1905 = vlaneseq
        %v1906 = vshrl.u32 %v1905, 7
        %v1907 = vsub.s32 %v1900, %v1906
        %v1908 = vrot.slane %v1392, %v1907
        %v1909 = vlaneseq
        %v1910 = vshrl.u32 %v1909, 7
        %v1911 = vsub.s32 %v1900, %v1910
        %v1912 = vrot.slane %v1395, %v1911
        %v1913 = vlaneseq
        %v1914 = vshrl.u32 %v1913, 7
        %v1915 = vsub.s32 %v1900, %v1914
        %v1916 = vrot.slane %v1398, %v1915
        %vm1917 = vcmask 1041409
        %v1918 = vsel %vm1917, %v1908, %v1904
        %vm1919 = vcmask 1042434
        %v1920 = vsel %vm1919, %v1912, %v1918
        %vm1921 = vcmask 1043459
        %v1922 = vsel %vm1921, %v1916, %v1920
        %1924 = vxpose.xlu0.b32.start [1/16] %v1922, 128
        %1925 = vxpose.xlu0.b32.cont [2/16] 0.0, 128
        %1926 = vxpose.xlu0.b32.cont [3/16] 0.0, 128
        %1927 = vxpose.xlu0.b32.cont [4/16] 0.0, 128
        %1928 = vxpose.xlu0.b32.cont [5/16] 0.0, 128
        %1929 = vxpose.xlu0.b32.cont [6/16] 0.0, 128
        %1930 = vxpose.xlu0.b32.cont [7/16] 0.0, 128
        %1931 = vxpose.xlu0.b32.cont [8/16] 0.0, 128
        %1932 = vxpose.xlu0.b32.cont [9/16] 0.0, 128
        %1933 = vxpose.xlu0.b32.cont [10/16] 0.0, 128
        %1934 = vxpose.xlu0.b32.cont [11/16] 0.0, 128
        %1935 = vxpose.xlu0.b32.cont [12/16] 0.0, 128
        %1936 = vxpose.xlu0.b32.cont [13/16] 0.0, 128
        %1937 = vxpose.xlu0.b32.cont [14/16] 0.0, 128
        %1938 = vxpose.xlu0.b32.cont [15/16] 0.0, 128
        %1939 = vxpose.xlu0.b32.end [16/16] 0.0, 128
        %v1940 = vpop.trf.xlu0
        %v1941 = vpop.trf.xlu0
        %v1942 = vpop.trf.xlu0
        %v1943 = vpop.trf.xlu0
        %v1944 = vpop.trf.xlu0
        %v1945 = vpop.trf.xlu0
        %v1946 = vpop.trf.xlu0
        %v1947 = vpop.trf.xlu0
        %v1948 = vpop.trf.xlu0
        %v1949 = vpop.trf.xlu0
        %v1950 = vpop.trf.xlu0
        %v1951 = vpop.trf.xlu0
        %v1952 = vpop.trf.xlu0
        %v1953 = vpop.trf.xlu0
        %v1954 = vpop.trf.xlu0
        %v1955 = vpop.trf.xlu0
        %v1956 = vrcp.pop %v1940
        %v1957 = vlaneseq
        %v1958 = vshrl.u32 %v1957, 7
        %v1959 = vsub.s32 0, %v1958
        %v1960 = vrot.slane %v1956, %v1959
        %1962 = vbcast.lane.b32.xlu0 %v1960, 256
        %v1963 = vpop.permute.xlu0 %1962
        %v1964 = vlaneseq
        %v1965 = vshrl.u32 %v1964, 7
        %v1966 = vsub.s32 1, %v1965
        %v1967 = vrot.slane %v1956, %v1966
        %1969 = vbcast.lane.b32.xlu0 %v1967, 256
        %v1970 = vpop.permute.xlu0 %1969
        %v1971 = vlaneseq
        %v1972 = vshrl.u32 %v1971, 7
        %v1973 = vsub.s32 2, %v1972
        %v1974 = vrot.slane %v1956, %v1973
        %1976 = vbcast.lane.b32.xlu0 %v1974, 256
        %v1977 = vpop.permute.xlu0 %1976
        %v1978 = vlaneseq
        %v1979 = vshrl.u32 %v1978, 7
        %v1980 = vsub.s32 3, %v1979
        %v1981 = vrot.slane %v1956, %v1980
        %1983 = vbcast.lane.b32.xlu0 %v1981, 256
        %v1984 = vpop.permute.xlu0 %1983
        %v1985 = vlaneseq
        %v1986 = vshrl.u32 %v1985, 7
        %v1987 = vsub.s32 4, %v1986
        %v1988 = vrot.slane %v1956, %v1987
        %1990 = vbcast.lane.b32.xlu0 %v1988, 256
        %v1991 = vpop.permute.xlu0 %1990
        %v1992 = vlaneseq
        %v1993 = vshrl.u32 %v1992, 7
        %v1994 = vsub.s32 5, %v1993
        %v1995 = vrot.slane %v1956, %v1994
        %1997 = vbcast.lane.b32.xlu0 %v1995, 256
        %v1998 = vpop.permute.xlu0 %1997
        %v1999 = vlaneseq
        %v2000 = vshrl.u32 %v1999, 7
        %v2001 = vsub.s32 6, %v2000
        %v2002 = vrot.slane %v1956, %v2001
        %2004 = vbcast.lane.b32.xlu0 %v2002, 256
        %v2005 = vpop.permute.xlu0 %2004
        %v2006 = vlaneseq
        %v2007 = vshrl.u32 %v2006, 7
        %v2008 = vsub.s32 7, %v2007
        %v2009 = vrot.slane %v1956, %v2008
        %2011 = vbcast.lane.b32.xlu0 %v2009, 256
        %v2012 = vpop.permute.xlu0 %2011
        %v2013 = vmul.f32 %v1867, %v1963
        %v2014 = vmul.f32 %v1891, %v1970
        %v2015 = vmul.f32 %v1874, %v1977
        %v2016 = vmul.f32 %v1892, %v1984
        %v2017 = vmul.f32 %v1883, %v1991
        %v2018 = vmul.f32 %v1893, %v1998
        %v2019 = vmul.f32 %v1890, %v2005
        %v2020 = vmul.f32 %v1894, %v2012
        %v2021 = vcombine.low %v2013, %v2015
        %v2023 = vunpack.c.l.s4 1983009808
        %v2024 = vunpack.c.0.s8 %v2023
        %v2025 = vlaneseq
        %v2026 = vshrl.u32 %v2025, 7
        %v2027 = vsub.s32 %v2024, %v2026
        %v2028 = vrot.slane %v2021, %v2027
        %v2029 = vcombine.low %v2014, %v2016
        %v2031 = vunpack.c.l.s4 1983009808
        %v2032 = vunpack.c.0.s8 %v2031
        %v2033 = vlaneseq
        %v2034 = vshrl.u32 %v2033, 7
        %v2035 = vsub.s32 %v2032, %v2034
        %v2036 = vrot.slane %v2029, %v2035
        %v2037 = vcombine.low %v2017, %v2019
        %v2039 = vunpack.c.l.s4 1983009808
        %v2040 = vunpack.c.0.s8 %v2039
        %v2041 = vlaneseq
        %v2042 = vshrl.u32 %v2041, 7
        %v2043 = vsub.s32 %v2040, %v2042
        %v2044 = vrot.slane %v2037, %v2043
        %v2045 = vcombine.low %v2018, %v2020
        %v2047 = vunpack.c.l.s4 1983009808
        %v2048 = vunpack.c.0.s8 %v2047
        %v2049 = vlaneseq
        %v2050 = vshrl.u32 %v2049, 7
        %v2051 = vsub.s32 %v2048, %v2050
        %v2052 = vrot.slane %v2045, %v2051
        %v2053 = vcombine.low %v2028, %v2036
        %v2054 = vcombine.high %v2028, %v2036
        %v2056 = vunpack.c.l.s4 1934713408
        %v2057 = vunpack.c.0.s8 %v2056
        %v2058 = vlaneseq
        %v2059 = vshrl.u32 %v2058, 7
        %v2060 = vsub.s32 %v2057, %v2059
        %v2061 = vrot.slane %v2053, %v2060
        %v2063 = vunpack.c.l.s4 1934713408
        %v2064 = vunpack.c.0.s8 %v2063
        %v2065 = vlaneseq
        %v2066 = vshrl.u32 %v2065, 7
        %v2067 = vsub.s32 %v2064, %v2066
        %v2068 = vrot.slane %v2054, %v2067
        %v2069 = vcombine.low %v2044, %v2052
        %v2070 = vcombine.high %v2044, %v2052
        %v2072 = vunpack.c.l.s4 1934713408
        %v2073 = vunpack.c.0.s8 %v2072
        %v2074 = vlaneseq
        %v2075 = vshrl.u32 %v2074, 7
        %v2076 = vsub.s32 %v2073, %v2075
        %v2077 = vrot.slane %v2069, %v2076
        %v2079 = vunpack.c.l.s4 1934713408
        %v2080 = vunpack.c.0.s8 %v2079
        %v2081 = vlaneseq
        %v2082 = vshrl.u32 %v2081, 7
        %v2083 = vsub.s32 %v2080, %v2082
        %v2084 = vrot.slane %v2070, %v2083
        %v2085 = vcombine.low %v2061, %v2077
        %v2086 = vcombine.high %v2061, %v2077
        %v2087 = vcombine.low %v2068, %v2084
        %v2088 = vcombine.high %v2068, %v2084
        %2090 = vrot.lane.b32.xlu0 %v2086, 32
        %v2091 = vpop.permute.xlu0 %2090
        %2094 = vrot.lane.b32.xlu0 %v2087, 64
        %v2095 = vpop.permute.xlu0 %2094
        %2098 = vrot.lane.b32.xlu0 %v2088, 96
        %v2099 = vpop.permute.xlu0 %2098
        %v2101 = vsel %vm1177, %v2085, %v2091
        %vm2102 = vcmask 523264
        %v2103 = vsel %vm2102, %v2101, %v2095
        %vm2104 = vcmask 785408
        %v2105 = vsel %vm2104, %v2103, %v2099
        %2106 = vst [vmem:[%s459] sm:$0xff] %v2105
        %v2107 = vmul.f32 %v1867, %v1867
        %v2108 = vmul.f32 %v1891, %v1891
        %v2109 = vmul.f32 %v1874, %v1874
        %v2110 = vmul.f32 %v1892, %v1892
        %v2111 = vmul.f32 %v1883, %v1883
        %v2112 = vmul.f32 %v1893, %v1893
        %v2113 = vmul.f32 %v1890, %v1890
        %v2114 = vmul.f32 %v1894, %v1894
        %vm2115 = vcmask 257024
        %v2116 = vsel %vm2115, %v2107, 0.0
        %2117 = vadd.xlane.f32.xlu0 %v2116
        %v2118 = vpop.xlane.xlu0 %2117
        %v2119 = vsel %vm2115, %v2108, 0.0
        %2120 = vadd.xlane.f32.xlu0 %v2119
        %v2121 = vpop.xlane.xlu0 %2120
        %v2122 = vsel %vm2115, %v2109, 0.0
        %2123 = vadd.xlane.f32.xlu0 %v2122
        %v2124 = vpop.xlane.xlu0 %2123
        %v2125 = vsel %vm2115, %v2110, 0.0
        %2126 = vadd.xlane.f32.xlu0 %v2125
        %v2127 = vpop.xlane.xlu0 %2126
        %v2128 = vsel %vm2115, %v2111, 0.0
        %2129 = vadd.xlane.f32.xlu0 %v2128
        %v2130 = vpop.xlane.xlu0 %2129
        %v2131 = vsel %vm2115, %v2112, 0.0
        %2132 = vadd.xlane.f32.xlu0 %v2131
        %v2133 = vpop.xlane.xlu0 %2132
        %v2134 = vsel %vm2115, %v2113, 0.0
        %2135 = vadd.xlane.f32.xlu0 %v2134
        %v2136 = vpop.xlane.xlu0 %2135
        %v2137 = vsel %vm2115, %v2114, 0.0
        %2138 = vadd.xlane.f32.xlu0 %v2137
        %v2139 = vpop.xlane.xlu0 %2138
        %v2140 = vmul.f32 %v1940, %v1940
        %v2142 = vlaneseq
        %v2143 = vshrl.u32 %v2142, 7
        %v2144 = vsub.s32 0, %v2143
        %v2145 = vrot.slane %v2140, %v2144
        %2147 = vbcast.lane.b32.xlu0 %v2145, 256
        %v2148 = vpop.permute.xlu0 %2147
        %v2149 = vlaneseq
        %v2150 = vshrl.u32 %v2149, 7
        %v2151 = vsub.s32 1, %v2150
        %v2152 = vrot.slane %v2140, %v2151
        %2154 = vbcast.lane.b32.xlu0 %v2152, 256
        %v2155 = vpop.permute.xlu0 %2154
        %v2156 = vlaneseq
        %v2157 = vshrl.u32 %v2156, 7
        %v2158 = vsub.s32 2, %v2157
        %v2159 = vrot.slane %v2140, %v2158
        %2161 = vbcast.lane.b32.xlu0 %v2159, 256
        %v2162 = vpop.permute.xlu0 %2161
        %v2163 = vlaneseq
        %v2164 = vshrl.u32 %v2163, 7
        %v2165 = vsub.s32 3, %v2164
        %v2166 = vrot.slane %v2140, %v2165
        %2168 = vbcast.lane.b32.xlu0 %v2166, 256
        %v2169 = vpop.permute.xlu0 %2168
        %v2170 = vlaneseq
        %v2171 = vshrl.u32 %v2170, 7
        %v2172 = vsub.s32 4, %v2171
        %v2173 = vrot.slane %v2140, %v2172
        %2175 = vbcast.lane.b32.xlu0 %v2173, 256
        %v2176 = vpop.permute.xlu0 %2175
        %v2177 = vlaneseq
        %v2178 = vshrl.u32 %v2177, 7
        %v2179 = vsub.s32 5, %v2178
        %v2180 = vrot.slane %v2140, %v2179
        %2182 = vbcast.lane.b32.xlu0 %v2180, 256
        %v2183 = vpop.permute.xlu0 %2182
        %v2184 = vlaneseq
        %v2185 = vshrl.u32 %v2184, 7
        %v2186 = vsub.s32 6, %v2185
        %v2187 = vrot.slane %v2140, %v2186
        %2189 = vbcast.lane.b32.xlu0 %v2187, 256
        %v2190 = vpop.permute.xlu0 %2189
        %v2191 = vlaneseq
        %v2192 = vshrl.u32 %v2191, 7
        %v2193 = vsub.s32 7, %v2192
        %v2194 = vrot.slane %v2140, %v2193
        %2196 = vbcast.lane.b32.xlu0 %v2194, 256
        %v2197 = vpop.permute.xlu0 %2196
        %v2206 = vrcp.pop %v2148
        %v2207 = vmul.f32 %v2118, %v2206
        %v2208 = vrcp.pop %v2155
        %v2209 = vmul.f32 %v2121, %v2208
        %v2210 = vrcp.pop %v2162
        %v2211 = vmul.f32 %v2124, %v2210
        %v2212 = vrcp.pop %v2169
        %v2213 = vmul.f32 %v2127, %v2212
        %v2214 = vrcp.pop %v2176
        %v2215 = vmul.f32 %v2130, %v2214
        %v2216 = vrcp.pop %v2183
        %v2217 = vmul.f32 %v2133, %v2216
        %v2218 = vrcp.pop %v2190
        %v2219 = vmul.f32 %v2136, %v2218
        %v2220 = vrcp.pop %v2197
        %v2221 = vmul.f32 %v2139, %v2220
        %v2222 = vlaneseq
        %v2223 = vshrl.u32 %v2222, 7
        %2225 = vset.pattern.permute.xlu0 0
        %2226 = vperm.xlu0 %2225, %v2207
        %v2227 = vpop.permute.xlu0 %2226
        %2229 = vset.pattern.permute.xlu0 0
        %2230 = vperm.xlu0 %2229, %v2209
        %v2231 = vpop.permute.xlu0 %2230
        %2233 = vset.pattern.permute.xlu0 0
        %2234 = vperm.xlu0 %2233, %v2211
        %v2235 = vpop.permute.xlu0 %2234
        %2237 = vset.pattern.permute.xlu0 0
        %2238 = vperm.xlu0 %2237, %v2213
        %v2239 = vpop.permute.xlu0 %2238
        %2241 = vset.pattern.permute.xlu0 0
        %2242 = vperm.xlu0 %2241, %v2215
        %v2243 = vpop.permute.xlu0 %2242
        %2245 = vset.pattern.permute.xlu0 0
        %2246 = vperm.xlu0 %2245, %v2217
        %v2247 = vpop.permute.xlu0 %2246
        %2249 = vset.pattern.permute.xlu0 0
        %2250 = vperm.xlu0 %2249, %v2219
        %v2251 = vpop.permute.xlu0 %2250
        %2253 = vset.pattern.permute.xlu0 0
        %2254 = vperm.xlu0 %2253, %v2221
        %v2255 = vpop.permute.xlu0 %2254
        %v2256 = vlaneseq
        %v2257 = vshrl.u32 %v2256, 7
        %v2258 = vsub.s32 0, %v2257
        %v2259 = vrot.slane %v2227, %v2258
        %v2260 = vlaneseq
        %v2261 = vshrl.u32 %v2260, 7
        %v2262 = vsub.s32 1, %v2261
        %v2263 = vrot.slane %v2227, %v2262
        %v2264 = vlaneseq
        %v2265 = vshrl.u32 %v2264, 7
        %v2266 = vsub.s32 2, %v2265
        %v2267 = vrot.slane %v2227, %v2266
        %v2268 = vlaneseq
        %v2269 = vshrl.u32 %v2268, 7
        %v2270 = vsub.s32 3, %v2269
        %v2271 = vrot.slane %v2227, %v2270
        %v2272 = vlaneseq
        %v2273 = vshrl.u32 %v2272, 7
        %v2274 = vsub.s32 0, %v2273
        %v2275 = vrot.slane %v2231, %v2274
        %v2276 = vlaneseq
        %v2277 = vshrl.u32 %v2276, 7
        %v2278 = vsub.s32 1, %v2277
        %v2279 = vrot.slane %v2231, %v2278
        %v2280 = vlaneseq
        %v2281 = vshrl.u32 %v2280, 7
        %v2282 = vsub.s32 2, %v2281
        %v2283 = vrot.slane %v2231, %v2282
        %v2284 = vlaneseq
        %v2285 = vshrl.u32 %v2284, 7
        %v2286 = vsub.s32 3, %v2285
        %v2287 = vrot.slane %v2231, %v2286
        %v2288 = vlaneseq
        %v2289 = vshrl.u32 %v2288, 7
        %v2290 = vsub.s32 0, %v2289
        %v2291 = vrot.slane %v2235, %v2290
        %v2292 = vlaneseq
        %v2293 = vshrl.u32 %v2292, 7
        %v2294 = vsub.s32 1, %v2293
        %v2295 = vrot.slane %v2235, %v2294
        %v2296 = vlaneseq
        %v2297 = vshrl.u32 %v2296, 7
        %v2298 = vsub.s32 2, %v2297
        %v2299 = vrot.slane %v2235, %v2298
        %v2300 = vlaneseq
        %v2301 = vshrl.u32 %v2300, 7
        %v2302 = vsub.s32 3, %v2301
        %v2303 = vrot.slane %v2235, %v2302
        %v2304 = vlaneseq
        %v2305 = vshrl.u32 %v2304, 7
        %v2306 = vsub.s32 0, %v2305
        %v2307 = vrot.slane %v2239, %v2306
        %v2308 = vlaneseq
        %v2309 = vshrl.u32 %v2308, 7
        %v2310 = vsub.s32 1, %v2309
        %v2311 = vrot.slane %v2239, %v2310
        %v2312 = vlaneseq
        %v2313 = vshrl.u32 %v2312, 7
        %v2314 = vsub.s32 2, %v2313
        %v2315 = vrot.slane %v2239, %v2314
        %v2316 = vlaneseq
        %v2317 = vshrl.u32 %v2316, 7
        %v2318 = vsub.s32 3, %v2317
        %v2319 = vrot.slane %v2239, %v2318
        %v2320 = vlaneseq
        %v2321 = vshrl.u32 %v2320, 7
        %v2322 = vsub.s32 0, %v2321
        %v2323 = vrot.slane %v2243, %v2322
        %v2324 = vlaneseq
        %v2325 = vshrl.u32 %v2324, 7
        %v2326 = vsub.s32 1, %v2325
        %v2327 = vrot.slane %v2243, %v2326
        %v2328 = vlaneseq
        %v2329 = vshrl.u32 %v2328, 7
        %v2330 = vsub.s32 2, %v2329
        %v2331 = vrot.slane %v2243, %v2330
        %v2332 = vlaneseq
        %v2333 = vshrl.u32 %v2332, 7
        %v2334 = vsub.s32 3, %v2333
        %v2335 = vrot.slane %v2243, %v2334
        %v2336 = vlaneseq
        %v2337 = vshrl.u32 %v2336, 7
        %v2338 = vsub.s32 0, %v2337
        %v2339 = vrot.slane %v2247, %v2338
        %v2340 = vlaneseq
        %v2341 = vshrl.u32 %v2340, 7
        %v2342 = vsub.s32 1, %v2341
        %v2343 = vrot.slane %v2247, %v2342
        %v2344 = vlaneseq
        %v2345 = vshrl.u32 %v2344, 7
        %v2346 = vsub.s32 2, %v2345
        %v2347 = vrot.slane %v2247, %v2346
        %v2348 = vlaneseq
        %v2349 = vshrl.u32 %v2348, 7
        %v2350 = vsub.s32 3, %v2349
        %v2351 = vrot.slane %v2247, %v2350
        %v2352 = vlaneseq
        %v2353 = vshrl.u32 %v2352, 7
        %v2354 = vsub.s32 0, %v2353
        %v2355 = vrot.slane %v2251, %v2354
        %v2356 = vlaneseq
        %v2357 = vshrl.u32 %v2356, 7
        %v2358 = vsub.s32 1, %v2357
        %v2359 = vrot.slane %v2251, %v2358
        %v2360 = vlaneseq
        %v2361 = vshrl.u32 %v2360, 7
        %v2362 = vsub.s32 2, %v2361
        %v2363 = vrot.slane %v2251, %v2362
        %v2364 = vlaneseq
        %v2365 = vshrl.u32 %v2364, 7
        %v2366 = vsub.s32 3, %v2365
        %v2367 = vrot.slane %v2251, %v2366
        %v2368 = vlaneseq
        %v2369 = vshrl.u32 %v2368, 7
        %v2370 = vsub.s32 0, %v2369
        %v2371 = vrot.slane %v2255, %v2370
        %v2372 = vlaneseq
        %v2373 = vshrl.u32 %v2372, 7
        %v2374 = vsub.s32 1, %v2373
        %v2375 = vrot.slane %v2255, %v2374
        %v2376 = vlaneseq
        %v2377 = vshrl.u32 %v2376, 7
        %v2378 = vsub.s32 2, %v2377
        %v2379 = vrot.slane %v2255, %v2378
        %v2380 = vlaneseq
        %v2381 = vshrl.u32 %v2380, 7
        %v2382 = vsub.s32 3, %v2381
        %v2383 = vrot.slane %v2255, %v2382
        %vm2416 = vcmp.gt.f32.partialorder %v2207, %v2259
        %vm2417 = vcmp.gt.f32.partialorder %v2207, %v2263
        %vm2418 = vcmp.gt.f32.partialorder %v2207, %v2267
        %vm2419 = vcmp.gt.f32.partialorder %v2207, %v2271
        %vm2420 = vcmp.gt.f32.partialorder %v2209, %v2275
        %vm2421 = vcmp.gt.f32.partialorder %v2209, %v2279
        %vm2422 = vcmp.gt.f32.partialorder %v2209, %v2283
        %vm2423 = vcmp.gt.f32.partialorder %v2209, %v2287
        %vm2424 = vcmp.gt.f32.partialorder %v2211, %v2291
        %vm2425 = vcmp.gt.f32.partialorder %v2211, %v2295
        %vm2426 = vcmp.gt.f32.partialorder %v2211, %v2299
        %vm2427 = vcmp.gt.f32.partialorder %v2211, %v2303
        %vm2428 = vcmp.gt.f32.partialorder %v2213, %v2307
        %vm2429 = vcmp.gt.f32.partialorder %v2213, %v2311
        %vm2430 = vcmp.gt.f32.partialorder %v2213, %v2315
        %vm2431 = vcmp.gt.f32.partialorder %v2213, %v2319
        %vm2432 = vcmp.gt.f32.partialorder %v2215, %v2323
        %vm2433 = vcmp.gt.f32.partialorder %v2215, %v2327
        %vm2434 = vcmp.gt.f32.partialorder %v2215, %v2331
        %vm2435 = vcmp.gt.f32.partialorder %v2215, %v2335
        %vm2436 = vcmp.gt.f32.partialorder %v2217, %v2339
        %vm2437 = vcmp.gt.f32.partialorder %v2217, %v2343
        %vm2438 = vcmp.gt.f32.partialorder %v2217, %v2347
        %vm2439 = vcmp.gt.f32.partialorder %v2217, %v2351
        %vm2440 = vcmp.gt.f32.partialorder %v2219, %v2355
        %vm2441 = vcmp.gt.f32.partialorder %v2219, %v2359
        %vm2442 = vcmp.gt.f32.partialorder %v2219, %v2363
        %vm2443 = vcmp.gt.f32.partialorder %v2219, %v2367
        %vm2444 = vcmp.gt.f32.partialorder %v2221, %v2371
        %vm2445 = vcmp.gt.f32.partialorder %v2221, %v2375
        %vm2446 = vcmp.gt.f32.partialorder %v2221, %v2379
        %vm2447 = vcmp.gt.f32.partialorder %v2221, %v2383
        %vm2448 = vcmp.eq.f32.partialorder %v2207, %v2259
        %vm2449 = vcmp.eq.f32.partialorder %v2207, %v2263
        %vm2450 = vcmp.eq.f32.partialorder %v2207, %v2267
        %vm2451 = vcmp.eq.f32.partialorder %v2207, %v2271
        %vm2452 = vcmp.eq.f32.partialorder %v2209, %v2275
        %vm2453 = vcmp.eq.f32.partialorder %v2209, %v2279
        %vm2454 = vcmp.eq.f32.partialorder %v2209, %v2283
        %vm2455 = vcmp.eq.f32.partialorder %v2209, %v2287
        %vm2456 = vcmp.eq.f32.partialorder %v2211, %v2291
        %vm2457 = vcmp.eq.f32.partialorder %v2211, %v2295
        %vm2458 = vcmp.eq.f32.partialorder %v2211, %v2299
        %vm2459 = vcmp.eq.f32.partialorder %v2211, %v2303
        %vm2460 = vcmp.eq.f32.partialorder %v2213, %v2307
        %vm2461 = vcmp.eq.f32.partialorder %v2213, %v2311
        %vm2462 = vcmp.eq.f32.partialorder %v2213, %v2315
        %vm2463 = vcmp.eq.f32.partialorder %v2213, %v2319
        %vm2464 = vcmp.eq.f32.partialorder %v2215, %v2323
        %vm2465 = vcmp.eq.f32.partialorder %v2215, %v2327
        %vm2466 = vcmp.eq.f32.partialorder %v2215, %v2331
        %vm2467 = vcmp.eq.f32.partialorder %v2215, %v2335
        %vm2468 = vcmp.eq.f32.partialorder %v2217, %v2339
        %vm2469 = vcmp.eq.f32.partialorder %v2217, %v2343
        %vm2470 = vcmp.eq.f32.partialorder %v2217, %v2347
        %vm2471 = vcmp.eq.f32.partialorder %v2217, %v2351
        %vm2472 = vcmp.eq.f32.partialorder %v2219, %v2355
        %vm2473 = vcmp.eq.f32.partialorder %v2219, %v2359
        %vm2474 = vcmp.eq.f32.partialorder %v2219, %v2363
        %vm2475 = vcmp.eq.f32.partialorder %v2219, %v2367
        %vm2476 = vcmp.eq.f32.partialorder %v2221, %v2371
        %vm2477 = vcmp.eq.f32.partialorder %v2221, %v2375
        %vm2478 = vcmp.eq.f32.partialorder %v2221, %v2379
        %vm2479 = vcmp.eq.f32.partialorder %v2221, %v2383
        %vm2480 = vcmp.lt.s32.totalorder %v1900, %v2223
        %v2481 = vsel %vm2480, 1, 0
        %vm2482 = vcmp.eq.s32.totalorder %v2481, 1
        %v2483 = vsel %vm2482, 1, 0
        %v2484 = vlaneseq
        %v2485 = vshrl.u32 %v2484, 7
        %v2486 = vsub.s32 0, %v2485
        %v2487 = vrot.slane %v2483, %v2486
        %2489 = vbcast.lane.b32.xlu0 %v2487, 256
        %v2490 = vpop.permute.xlu0 %2489
        %v2491 = vlaneseq
        %v2492 = vshrl.u32 %v2491, 7
        %v2493 = vsub.s32 1, %v2492
        %v2494 = vrot.slane %v2483, %v2493
        %2496 = vbcast.lane.b32.xlu0 %v2494, 256
        %v2497 = vpop.permute.xlu0 %2496
        %v2498 = vlaneseq
        %v2499 = vshrl.u32 %v2498, 7
        %v2500 = vsub.s32 2, %v2499
        %v2501 = vrot.slane %v2483, %v2500
        %2503 = vbcast.lane.b32.xlu0 %v2501, 256
        %v2504 = vpop.permute.xlu0 %2503
        %v2505 = vlaneseq
        %v2506 = vshrl.u32 %v2505, 7
        %v2507 = vsub.s32 3, %v2506
        %v2508 = vrot.slane %v2483, %v2507
        %2510 = vbcast.lane.b32.xlu0 %v2508, 256
        %v2511 = vpop.permute.xlu0 %2510
        %vm2512 = vcmp.ne.s32.totalorder %v2490, 0
        %vm2513 = vcmp.ne.s32.totalorder %v2497, 0
        %vm2514 = vcmp.ne.s32.totalorder %v2504, 0
        %vm2515 = vcmp.ne.s32.totalorder %v2511, 0
        %vm2516 = vmand %vm2448, %vm2512
        %vm2517 = vmand %vm2449, %vm2513
        %vm2518 = vmand %vm2450, %vm2514
        %vm2519 = vmand %vm2451, %vm2515
        %vm2520 = vmand %vm2452, %vm2512
        %vm2521 = vmand %vm2453, %vm2513
        %vm2522 = vmand %vm2454, %vm2514
        %vm2523 = vmand %vm2455, %vm2515
        %vm2524 = vmand %vm2456, %vm2512
        %vm2525 = vmand %vm2457, %vm2513
        %vm2526 = vmand %vm2458, %vm2514
        %vm2527 = vmand %vm2459, %vm2515
        %vm2528 = vmand %vm2460, %vm2512
        %vm2529 = vmand %vm2461, %vm2513
        %vm2530 = vmand %vm2462, %vm2514
        %vm2531 = vmand %vm2463, %vm2515
        %vm2532 = vmand %vm2464, %vm2512
        %vm2533 = vmand %vm2465, %vm2513
        %vm2534 = vmand %vm2466, %vm2514
        %vm2535 = vmand %vm2467, %vm2515
        %vm2536 = vmand %vm2468, %vm2512
        %vm2537 = vmand %vm2469, %vm2513
        %vm2538 = vmand %vm2470, %vm2514
        %vm2539 = vmand %vm2471, %vm2515
        %vm2540 = vmand %vm2472, %vm2512
        %vm2541 = vmand %vm2473, %vm2513
        %vm2542 = vmand %vm2474, %vm2514
        %vm2543 = vmand %vm2475, %vm2515
        %vm2544 = vmand %vm2476, %vm2512
        %vm2545 = vmand %vm2477, %vm2513
        %vm2546 = vmand %vm2478, %vm2514
        %vm2547 = vmand %vm2479, %vm2515
        %vm2548 = vmor %vm2416, %vm2516
        %vm2549 = vmor %vm2417, %vm2517
        %vm2550 = vmor %vm2418, %vm2518
        %vm2551 = vmor %vm2419, %vm2519
        %vm2552 = vmor %vm2420, %vm2520
        %vm2553 = vmor %vm2421, %vm2521
        %vm2554 = vmor %vm2422, %vm2522
        %vm2555 = vmor %vm2423, %vm2523
        %vm2556 = vmor %vm2424, %vm2524
        %vm2557 = vmor %vm2425, %vm2525
        %vm2558 = vmor %vm2426, %vm2526
        %vm2559 = vmor %vm2427, %vm2527
        %vm2560 = vmor %vm2428, %vm2528
        %vm2561 = vmor %vm2429, %vm2529
        %vm2562 = vmor %vm2430, %vm2530
        %vm2563 = vmor %vm2431, %vm2531
        %vm2564 = vmor %vm2432, %vm2532
        %vm2565 = vmor %vm2433, %vm2533
        %vm2566 = vmor %vm2434, %vm2534
        %vm2567 = vmor %vm2435, %vm2535
        %vm2568 = vmor %vm2436, %vm2536
        %vm2569 = vmor %vm2437, %vm2537
        %vm2570 = vmor %vm2438, %vm2538
        %vm2571 = vmor %vm2439, %vm2539
        %vm2572 = vmor %vm2440, %vm2540
        %vm2573 = vmor %vm2441, %vm2541
        %vm2574 = vmor %vm2442, %vm2542
        %vm2575 = vmor %vm2443, %vm2543
        %vm2576 = vmor %vm2444, %vm2544
        %vm2577 = vmor %vm2445, %vm2545
        %vm2578 = vmor %vm2446, %vm2546
        %vm2579 = vmor %vm2447, %vm2547
        %v2580 = vsel %vm2548, 1, 0
        %v2581 = vsel %vm2549, 1, 0
        %v2582 = vsel %vm2550, 1, 0
        %v2583 = vsel %vm2551, 1, 0
        %v2584 = vsel %vm2552, 1, 0
        %v2585 = vsel %vm2553, 1, 0
        %v2586 = vsel %vm2554, 1, 0
        %v2587 = vsel %vm2555, 1, 0
        %v2588 = vsel %vm2556, 1, 0
        %v2589 = vsel %vm2557, 1, 0
        %v2590 = vsel %vm2558, 1, 0
        %v2591 = vsel %vm2559, 1, 0
        %v2592 = vsel %vm2560, 1, 0
        %v2593 = vsel %vm2561, 1, 0
        %v2594 = vsel %vm2562, 1, 0
        %v2595 = vsel %vm2563, 1, 0
        %v2596 = vsel %vm2564, 1, 0
        %v2597 = vsel %vm2565, 1, 0
        %v2598 = vsel %vm2566, 1, 0
        %v2599 = vsel %vm2567, 1, 0
        %v2600 = vsel %vm2568, 1, 0
        %v2601 = vsel %vm2569, 1, 0
        %v2602 = vsel %vm2570, 1, 0
        %v2603 = vsel %vm2571, 1, 0
        %v2604 = vsel %vm2572, 1, 0
        %v2605 = vsel %vm2573, 1, 0
        %v2606 = vsel %vm2574, 1, 0
        %v2607 = vsel %vm2575, 1, 0
        %v2608 = vsel %vm2576, 1, 0
        %v2609 = vsel %vm2577, 1, 0
        %v2610 = vsel %vm2578, 1, 0
        %v2611 = vsel %vm2579, 1, 0
        %v2612 = vcvt.s32.f32 %v2580
        %v2613 = vcvt.s32.f32 %v2581
        %v2614 = vcvt.s32.f32 %v2582
        %v2615 = vcvt.s32.f32 %v2583
        %v2616 = vcvt.s32.f32 %v2584
        %v2617 = vcvt.s32.f32 %v2585
        %v2618 = vcvt.s32.f32 %v2586
        %v2619 = vcvt.s32.f32 %v2587
        %v2620 = vcvt.s32.f32 %v2588
        %v2621 = vcvt.s32.f32 %v2589
        %v2622 = vcvt.s32.f32 %v2590
        %v2623 = vcvt.s32.f32 %v2591
        %v2624 = vcvt.s32.f32 %v2592
        %v2625 = vcvt.s32.f32 %v2593
        %v2626 = vcvt.s32.f32 %v2594
        %v2627 = vcvt.s32.f32 %v2595
        %v2628 = vcvt.s32.f32 %v2596
        %v2629 = vcvt.s32.f32 %v2597
        %v2630 = vcvt.s32.f32 %v2598
        %v2631 = vcvt.s32.f32 %v2599
        %v2632 = vcvt.s32.f32 %v2600
        %v2633 = vcvt.s32.f32 %v2601
        %v2634 = vcvt.s32.f32 %v2602
        %v2635 = vcvt.s32.f32 %v2603
        %v2636 = vcvt.s32.f32 %v2604
        %v2637 = vcvt.s32.f32 %v2605
        %v2638 = vcvt.s32.f32 %v2606
        %v2639 = vcvt.s32.f32 %v2607
        %v2640 = vcvt.s32.f32 %v2608
        %v2641 = vcvt.s32.f32 %v2609
        %v2642 = vcvt.s32.f32 %v2610
        %v2643 = vcvt.s32.f32 %v2611
        %2676 = vset.pattern.permute.xlu0 0
        %2677 = vperm.xlu0 %2676, %v2612
        %v2678 = vpop.permute.xlu0 %2677
        %2679 = vset.pattern.permute.xlu0 0
        %2680 = vperm.xlu0 %2679, %v2613
        %v2681 = vpop.permute.xlu0 %2680
        %2682 = vset.pattern.permute.xlu0 0
        %2683 = vperm.xlu0 %2682, %v2614
        %v2684 = vpop.permute.xlu0 %2683
        %2685 = vset.pattern.permute.xlu0 0
        %2686 = vperm.xlu0 %2685, %v2615
        %v2687 = vpop.permute.xlu0 %2686
        %2688 = vset.pattern.permute.xlu0 0
        %2689 = vperm.xlu0 %2688, %v2616
        %v2690 = vpop.permute.xlu0 %2689
        %2691 = vset.pattern.permute.xlu0 0
        %2692 = vperm.xlu0 %2691, %v2617
        %v2693 = vpop.permute.xlu0 %2692
        %2694 = vset.pattern.permute.xlu0 0
        %2695 = vperm.xlu0 %2694, %v2618
        %v2696 = vpop.permute.xlu0 %2695
        %2697 = vset.pattern.permute.xlu0 0
        %2698 = vperm.xlu0 %2697, %v2619
        %v2699 = vpop.permute.xlu0 %2698
        %2700 = vset.pattern.permute.xlu0 0
        %2701 = vperm.xlu0 %2700, %v2620
        %v2702 = vpop.permute.xlu0 %2701
        %2703 = vset.pattern.permute.xlu0 0
        %2704 = vperm.xlu0 %2703, %v2621
        %v2705 = vpop.permute.xlu0 %2704
        %2706 = vset.pattern.permute.xlu0 0
        %2707 = vperm.xlu0 %2706, %v2622
        %v2708 = vpop.permute.xlu0 %2707
        %2709 = vset.pattern.permute.xlu0 0
        %2710 = vperm.xlu0 %2709, %v2623
        %v2711 = vpop.permute.xlu0 %2710
        %2712 = vset.pattern.permute.xlu0 0
        %2713 = vperm.xlu0 %2712, %v2624
        %v2714 = vpop.permute.xlu0 %2713
        %2715 = vset.pattern.permute.xlu0 0
        %2716 = vperm.xlu0 %2715, %v2625
        %v2717 = vpop.permute.xlu0 %2716
        %2718 = vset.pattern.permute.xlu0 0
        %2719 = vperm.xlu0 %2718, %v2626
        %v2720 = vpop.permute.xlu0 %2719
        %2721 = vset.pattern.permute.xlu0 0
        %2722 = vperm.xlu0 %2721, %v2627
        %v2723 = vpop.permute.xlu0 %2722
        %2724 = vset.pattern.permute.xlu0 0
        %2725 = vperm.xlu0 %2724, %v2628
        %v2726 = vpop.permute.xlu0 %2725
        %2727 = vset.pattern.permute.xlu0 0
        %2728 = vperm.xlu0 %2727, %v2629
        %v2729 = vpop.permute.xlu0 %2728
        %2730 = vset.pattern.permute.xlu0 0
        %2731 = vperm.xlu0 %2730, %v2630
        %v2732 = vpop.permute.xlu0 %2731
        %2733 = vset.pattern.permute.xlu0 0
        %2734 = vperm.xlu0 %2733, %v2631
        %v2735 = vpop.permute.xlu0 %2734
        %2736 = vset.pattern.permute.xlu0 0
        %2737 = vperm.xlu0 %2736, %v2632
        %v2738 = vpop.permute.xlu0 %2737
        %2739 = vset.pattern.permute.xlu0 0
        %2740 = vperm.xlu0 %2739, %v2633
        %v2741 = vpop.permute.xlu0 %2740
        %2742 = vset.pattern.permute.xlu0 0
        %2743 = vperm.xlu0 %2742, %v2634
        %v2744 = vpop.permute.xlu0 %2743
        %2745 = vset.pattern.permute.xlu0 0
        %2746 = vperm.xlu0 %2745, %v2635
        %v2747 = vpop.permute.xlu0 %2746
        %2748 = vset.pattern.permute.xlu0 0
        %2749 = vperm.xlu0 %2748, %v2636
        %v2750 = vpop.permute.xlu0 %2749
        %2751 = vset.pattern.permute.xlu0 0
        %2752 = vperm.xlu0 %2751, %v2637
        %v2753 = vpop.permute.xlu0 %2752
        %2754 = vset.pattern.permute.xlu0 0
        %2755 = vperm.xlu0 %2754, %v2638
        %v2756 = vpop.permute.xlu0 %2755
        %2757 = vset.pattern.permute.xlu0 0
        %2758 = vperm.xlu0 %2757, %v2639
        %v2759 = vpop.permute.xlu0 %2758
        %2760 = vset.pattern.permute.xlu0 0
        %2761 = vperm.xlu0 %2760, %v2640
        %v2762 = vpop.permute.xlu0 %2761
        %2763 = vset.pattern.permute.xlu0 0
        %2764 = vperm.xlu0 %2763, %v2641
        %v2765 = vpop.permute.xlu0 %2764
        %2766 = vset.pattern.permute.xlu0 0
        %2767 = vperm.xlu0 %2766, %v2642
        %v2768 = vpop.permute.xlu0 %2767
        %2769 = vset.pattern.permute.xlu0 0
        %2770 = vperm.xlu0 %2769, %v2643
        %v2771 = vpop.permute.xlu0 %2770
        %v2772 = vlaneseq
        %v2773 = vshrl.u32 %v2772, 7
        %v2774 = vsub.s32 %v1900, %v2773
        %v2775 = vrot.slane %v2678, %v2774
        %v2776 = vlaneseq
        %v2777 = vshrl.u32 %v2776, 7
        %v2778 = vsub.s32 %v1900, %v2777
        %v2779 = vrot.slane %v2681, %v2778
        %v2780 = vlaneseq
        %v2781 = vshrl.u32 %v2780, 7
        %v2782 = vsub.s32 %v1900, %v2781
        %v2783 = vrot.slane %v2684, %v2782
        %v2784 = vlaneseq
        %v2785 = vshrl.u32 %v2784, 7
        %v2786 = vsub.s32 %v1900, %v2785
        %v2787 = vrot.slane %v2687, %v2786
        %v2788 = vlaneseq
        %v2789 = vshrl.u32 %v2788, 7
        %v2790 = vsub.s32 %v1900, %v2789
        %v2791 = vrot.slane %v2690, %v2790
        %v2792 = vlaneseq
        %v2793 = vshrl.u32 %v2792, 7
        %v2794 = vsub.s32 %v1900, %v2793
        %v2795 = vrot.slane %v2693, %v2794
        %v2796 = vlaneseq
        %v2797 = vshrl.u32 %v2796, 7
        %v2798 = vsub.s32 %v1900, %v2797
        %v2799 = vrot.slane %v2696, %v2798
        %v2800 = vlaneseq
        %v2801 = vshrl.u32 %v2800, 7
        %v2802 = vsub.s32 %v1900, %v2801
        %v2803 = vrot.slane %v2699, %v2802
        %v2804 = vlaneseq
        %v2805 = vshrl.u32 %v2804, 7
        %v2806 = vsub.s32 %v1900, %v2805
        %v2807 = vrot.slane %v2702, %v2806
        %v2808 = vlaneseq
        %v2809 = vshrl.u32 %v2808, 7
        %v2810 = vsub.s32 %v1900, %v2809
        %v2811 = vrot.slane %v2705, %v2810
        %v2812 = vlaneseq
        %v2813 = vshrl.u32 %v2812, 7
        %v2814 = vsub.s32 %v1900, %v2813
        %v2815 = vrot.slane %v2708, %v2814
        %v2816 = vlaneseq
        %v2817 = vshrl.u32 %v2816, 7
        %v2818 = vsub.s32 %v1900, %v2817
        %v2819 = vrot.slane %v2711, %v2818
        %v2820 = vlaneseq
        %v2821 = vshrl.u32 %v2820, 7
        %v2822 = vsub.s32 %v1900, %v2821
        %v2823 = vrot.slane %v2714, %v2822
        %v2824 = vlaneseq
        %v2825 = vshrl.u32 %v2824, 7
        %v2826 = vsub.s32 %v1900, %v2825
        %v2827 = vrot.slane %v2717, %v2826
        %v2828 = vlaneseq
        %v2829 = vshrl.u32 %v2828, 7
        %v2830 = vsub.s32 %v1900, %v2829
        %v2831 = vrot.slane %v2720, %v2830
        %v2832 = vlaneseq
        %v2833 = vshrl.u32 %v2832, 7
        %v2834 = vsub.s32 %v1900, %v2833
        %v2835 = vrot.slane %v2723, %v2834
        %v2836 = vlaneseq
        %v2837 = vshrl.u32 %v2836, 7
        %v2838 = vsub.s32 %v1900, %v2837
        %v2839 = vrot.slane %v2726, %v2838
        %v2840 = vlaneseq
        %v2841 = vshrl.u32 %v2840, 7
        %v2842 = vsub.s32 %v1900, %v2841
        %v2843 = vrot.slane %v2729, %v2842
        %v2844 = vlaneseq
        %v2845 = vshrl.u32 %v2844, 7
        %v2846 = vsub.s32 %v1900, %v2845
        %v2847 = vrot.slane %v2732, %v2846
        %v2848 = vlaneseq
        %v2849 = vshrl.u32 %v2848, 7
        %v2850 = vsub.s32 %v1900, %v2849
        %v2851 = vrot.slane %v2735, %v2850
        %v2852 = vlaneseq
        %v2853 = vshrl.u32 %v2852, 7
        %v2854 = vsub.s32 %v1900, %v2853
        %v2855 = vrot.slane %v2738, %v2854
        %v2856 = vlaneseq
        %v2857 = vshrl.u32 %v2856, 7
        %v2858 = vsub.s32 %v1900, %v2857
        %v2859 = vrot.slane %v2741, %v2858
        %v2860 = vlaneseq
        %v2861 = vshrl.u32 %v2860, 7
        %v2862 = vsub.s32 %v1900, %v2861
        %v2863 = vrot.slane %v2744, %v2862
        %v2864 = vlaneseq
        %v2865 = vshrl.u32 %v2864, 7
        %v2866 = vsub.s32 %v1900, %v2865
        %v2867 = vrot.slane %v2747, %v2866
        %v2868 = vlaneseq
        %v2869 = vshrl.u32 %v2868, 7
        %v2870 = vsub.s32 %v1900, %v2869
        %v2871 = vrot.slane %v2750, %v2870
        %v2872 = vlaneseq
        %v2873 = vshrl.u32 %v2872, 7
        %v2874 = vsub.s32 %v1900, %v2873
        %v2875 = vrot.slane %v2753, %v2874
        %v2876 = vlaneseq
        %v2877 = vshrl.u32 %v2876, 7
        %v2878 = vsub.s32 %v1900, %v2877
        %v2879 = vrot.slane %v2756, %v2878
        %v2880 = vlaneseq
        %v2881 = vshrl.u32 %v2880, 7
        %v2882 = vsub.s32 %v1900, %v2881
        %v2883 = vrot.slane %v2759, %v2882
        %v2884 = vlaneseq
        %v2885 = vshrl.u32 %v2884, 7
        %v2886 = vsub.s32 %v1900, %v2885
        %v2887 = vrot.slane %v2762, %v2886
        %v2888 = vlaneseq
        %v2889 = vshrl.u32 %v2888, 7
        %v2890 = vsub.s32 %v1900, %v2889
        %v2891 = vrot.slane %v2765, %v2890
        %v2892 = vlaneseq
        %v2893 = vshrl.u32 %v2892, 7
        %v2894 = vsub.s32 %v1900, %v2893
        %v2895 = vrot.slane %v2768, %v2894
        %v2896 = vlaneseq
        %v2897 = vshrl.u32 %v2896, 7
        %v2898 = vsub.s32 %v1900, %v2897
        %v2899 = vrot.slane %v2771, %v2898
        %v2900 = vsel %vm1917, %v2779, %v2775
        %v2901 = vsel %vm1919, %v2783, %v2900
        %v2902 = vsel %vm1921, %v2787, %v2901
        %v2903 = vsel %vm1917, %v2795, %v2791
        %v2904 = vsel %vm1919, %v2799, %v2903
        %v2905 = vsel %vm1921, %v2803, %v2904
        %v2906 = vsel %vm1917, %v2811, %v2807
        %v2907 = vsel %vm1919, %v2815, %v2906
        %v2908 = vsel %vm1921, %v2819, %v2907
        %v2909 = vsel %vm1917, %v2827, %v2823
        %v2910 = vsel %vm1919, %v2831, %v2909
        %v2911 = vsel %vm1921, %v2835, %v2910
        %v2912 = vsel %vm1917, %v2843, %v2839
        %v2913 = vsel %vm1919, %v2847, %v2912
        %v2914 = vsel %vm1921, %v2851, %v2913
        %v2915 = vsel %vm1917, %v2859, %v2855
        %v2916 = vsel %vm1919, %v2863, %v2915
        %v2917 = vsel %vm1921, %v2867, %v2916
        %v2918 = vsel %vm1917, %v2875, %v2871
        %v2919 = vsel %vm1919, %v2879, %v2918
        %v2920 = vsel %vm1921, %v2883, %v2919
        %v2921 = vsel %vm1917, %v2891, %v2887
        %v2922 = vsel %vm1919, %v2895, %v2921
        %v2923 = vsel %vm1921, %v2899, %v2922
        %vm2932 = vcmask 27648
        %v2933 = vsel %vm2932, %v2902, 0.0
        %2934 = vadd.xlane.f32.xlu0 %v2933
        %v2935 = vpop.xlane.xlu0 %2934
        %v2936 = vsel %vm2932, %v2905, 0.0
        %2937 = vadd.xlane.f32.xlu0 %v2936
        %v2938 = vpop.xlane.xlu0 %2937
        %v2939 = vsel %vm2932, %v2908, 0.0
        %2940 = vadd.xlane.f32.xlu0 %v2939
        %v2941 = vpop.xlane.xlu0 %2940
        %v2942 = vsel %vm2932, %v2911, 0.0
        %2943 = vadd.xlane.f32.xlu0 %v2942
        %v2944 = vpop.xlane.xlu0 %2943
        %v2945 = vsel %vm2932, %v2914, 0.0
        %2946 = vadd.xlane.f32.xlu0 %v2945
        %v2947 = vpop.xlane.xlu0 %2946
        %v2948 = vsel %vm2932, %v2917, 0.0
        %2949 = vadd.xlane.f32.xlu0 %v2948
        %v2950 = vpop.xlane.xlu0 %2949
        %v2951 = vsel %vm2932, %v2920, 0.0
        %2952 = vadd.xlane.f32.xlu0 %v2951
        %v2953 = vpop.xlane.xlu0 %2952
        %v2954 = vsel %vm2932, %v2923, 0.0
        %2955 = vadd.xlane.f32.xlu0 %v2954
        %v2956 = vpop.xlane.xlu0 %2955
        %vm2957 = vcmp.lt.f32.partialorder %v2935, 2.0
        %vm2958 = vcmp.lt.f32.partialorder %v2938, 2.0
        %vm2959 = vcmp.lt.f32.partialorder %v2941, 2.0
        %vm2960 = vcmp.lt.f32.partialorder %v2944, 2.0
        %vm2961 = vcmp.lt.f32.partialorder %v2947, 2.0
        %vm2962 = vcmp.lt.f32.partialorder %v2950, 2.0
        %vm2963 = vcmp.lt.f32.partialorder %v2953, 2.0
        %vm2964 = vcmp.lt.f32.partialorder %v2956, 2.0
        %v2965 = vsel %vm2957, 1, 0
        %v2966 = vsel %vm2958, 1, 0
        %v2967 = vsel %vm2959, 1, 0
        %v2968 = vsel %vm2960, 1, 0
        %v2969 = vsel %vm2961, 1, 0
        %v2970 = vsel %vm2962, 1, 0
        %v2971 = vsel %vm2963, 1, 0
        %v2972 = vsel %vm2964, 1, 0
        %v2973 = vcvt.s32.f32 %v2965
        %v2974 = vcvt.s32.f32 %v2966
        %v2975 = vcvt.s32.f32 %v2967
        %v2976 = vcvt.s32.f32 %v2968
        %v2977 = vcvt.s32.f32 %v2969
        %v2978 = vcvt.s32.f32 %v2970
        %v2979 = vcvt.s32.f32 %v2971
        %v2980 = vcvt.s32.f32 %v2972
        %v2981 = vmul.f32 %v2013, %v2973
        %v2982 = vmul.f32 %v2014, %v2974
        %v2983 = vmul.f32 %v2015, %v2975
        %v2984 = vmul.f32 %v2016, %v2976
        %v2985 = vmul.f32 %v2017, %v2977
        %v2986 = vmul.f32 %v2018, %v2978
        %v2987 = vmul.f32 %v2019, %v2979
        %v2988 = vmul.f32 %v2020, %v2980
        %v2989 = vcombine.low %v2981, %v2983
        %v2991 = vunpack.c.l.s4 1983009808
        %v2992 = vunpack.c.0.s8 %v2991
        %v2993 = vlaneseq
        %v2994 = vshrl.u32 %v2993, 7
        %v2995 = vsub.s32 %v2992, %v2994
        %v2996 = vrot.slane %v2989, %v2995
        %v2997 = vcombine.low %v2982, %v2984
        %v2999 = vunpack.c.l.s4 1983009808
        %v3000 = vunpack.c.0.s8 %v2999
        %v3001 = vlaneseq
        %v3002 = vshrl.u32 %v3001, 7
        %v3003 = vsub.s32 %v3000, %v3002
        %v3004 = vrot.slane %v2997, %v3003
        %v3005 = vcombine.low %v2985, %v2987
        %v3007 = vunpack.c.l.s4 1983009808
        %v3008 = vunpack.c.0.s8 %v3007
        %v3009 = vlaneseq
        %v3010 = vshrl.u32 %v3009, 7
        %v3011 = vsub.s32 %v3008, %v3010
        %v3012 = vrot.slane %v3005, %v3011
        %v3013 = vcombine.low %v2986, %v2988
        %v3015 = vunpack.c.l.s4 1983009808
        %v3016 = vunpack.c.0.s8 %v3015
        %v3017 = vlaneseq
        %v3018 = vshrl.u32 %v3017, 7
        %v3019 = vsub.s32 %v3016, %v3018
        %v3020 = vrot.slane %v3013, %v3019
        %v3021 = vcombine.low %v2996, %v3004
        %v3022 = vcombine.high %v2996, %v3004
        %v3024 = vunpack.c.l.s4 1934713408
        %v3025 = vunpack.c.0.s8 %v3024
        %v3026 = vlaneseq
        %v3027 = vshrl.u32 %v3026, 7
        %v3028 = vsub.s32 %v3025, %v3027
        %v3029 = vrot.slane %v3021, %v3028
        %v3031 = vunpack.c.l.s4 1934713408
        %v3032 = vunpack.c.0.s8 %v3031
        %v3033 = vlaneseq
        %v3034 = vshrl.u32 %v3033, 7
        %v3035 = vsub.s32 %v3032, %v3034
        %v3036 = vrot.slane %v3022, %v3035
        %v3037 = vcombine.low %v3012, %v3020
        %v3038 = vcombine.high %v3012, %v3020
        %v3040 = vunpack.c.l.s4 1934713408
        %v3041 = vunpack.c.0.s8 %v3040
        %v3042 = vlaneseq
        %v3043 = vshrl.u32 %v3042, 7
        %v3044 = vsub.s32 %v3041, %v3043
        %v3045 = vrot.slane %v3037, %v3044
        %v3047 = vunpack.c.l.s4 1934713408
        %v3048 = vunpack.c.0.s8 %v3047
        %v3049 = vlaneseq
        %v3050 = vshrl.u32 %v3049, 7
        %v3051 = vsub.s32 %v3048, %v3050
        %v3052 = vrot.slane %v3038, %v3051
        %v3053 = vcombine.low %v3029, %v3045
        %v3054 = vcombine.high %v3029, %v3045
        %v3055 = vcombine.low %v3036, %v3052
        %v3056 = vcombine.high %v3036, %v3052
        %3058 = vrot.lane.b32.xlu0 %v3054, 32
        %v3059 = vpop.permute.xlu0 %3058
        %3062 = vrot.lane.b32.xlu0 %v3055, 64
        %v3063 = vpop.permute.xlu0 %3062
        %3066 = vrot.lane.b32.xlu0 %v3056, 96
        %v3067 = vpop.permute.xlu0 %3066
        %v3069 = vsel %vm1177, %v3053, %v3059
        %v3070 = vsel %vm2102, %v3069, %v3063
        %v3071 = vsel %vm2104, %v3070, %v3067
        %v3072 = vpack.c.bf16 %v3071, %v3071
        %v3073 = vld [vmem:[#allocation12] sm:$0xf]
        %v3074 = vld [vmem:[#allocation12 + $0x4] sm:$0xf]
        %v3075 = vld [vmem:[#allocation12 + $0x8] sm:$0xf]
        %v3076 = vld [vmem:[#allocation12 + $0xc] sm:$0xf]
        %v3077 = vld [vmem:[#allocation12 + $0x10] sm:$0xf]
        %v3078 = vld [vmem:[#allocation12 + $0x14] sm:$0xf]
        %v3079 = vld [vmem:[#allocation12 + $0x18] sm:$0xf]
        %v3080 = vld [vmem:[#allocation12 + $0x1c] sm:$0xf]
        %v3081 = vld [vmem:[#allocation12 + $0x20] sm:$0xf]
        %v3082 = vld [vmem:[#allocation12 + $0x24] sm:$0xf]
        %v3083 = vld [vmem:[#allocation12 + $0x28] sm:$0xf]
        %v3084 = vld [vmem:[#allocation12 + $0x2c] sm:$0xf]
        %v3085 = vld [vmem:[#allocation12 + $0x30] sm:$0xf]
        %v3086 = vld [vmem:[#allocation12 + $0x34] sm:$0xf]
        %v3087 = vld [vmem:[#allocation12 + $0x38] sm:$0xf]
        %v3088 = vld [vmem:[#allocation12 + $0x3c] sm:$0xf]
        %v3089 = vld [vmem:[%s8] sm:$0x1]
        %v3091 = vlaneseq
        %v3092 = vshrl.u32 %v3091, 7
        %v3093 = vsub.s32 0, %v3092
        %v3094 = vrot.slane %v3089, %v3093
        %v3112 = vunpack.c.l.b16 %v3073
        %v3113 = vunpack.c.l.b16 %v3074
        %v3114 = vunpack.c.l.b16 %v3075
        %v3115 = vunpack.c.l.b16 %v3076
        %v3116 = vunpack.c.l.b16 %v3077
        %v3117 = vunpack.c.l.b16 %v3078
        %v3118 = vunpack.c.l.b16 %v3079
        %v3119 = vunpack.c.l.b16 %v3080
        %v3120 = vunpack.c.l.b16 %v3081
        %v3121 = vunpack.c.l.b16 %v3082
        %v3122 = vunpack.c.l.b16 %v3083
        %v3123 = vunpack.c.l.b16 %v3084
        %v3124 = vunpack.c.l.b16 %v3085
        %v3125 = vunpack.c.l.b16 %v3086
        %v3126 = vunpack.c.l.b16 %v3087
        %v3127 = vunpack.c.l.b16 %v3088
        %v3128 = vpack.c.b16 %v3113, %v3112
        %v3129 = vpack.c.b16 %v3115, %v3114
        %v3130 = vpack.c.b16 %v3117, %v3116
        %v3131 = vpack.c.b16 %v3119, %v3118
        %v3132 = vpack.c.b16 %v3121, %v3120
        %v3133 = vpack.c.b16 %v3123, %v3122
        %v3134 = vpack.c.b16 %v3125, %v3124
        %v3135 = vpack.c.b16 %v3127, %v3126
        %3144 = vmatprep.subr.bf16.mxu0 0
        %3145 = vmatpush1.bf16.msra.mxu0 %v3128
        %3146 = vmatprep.subr.bf16.mxu0 0
        %3147 = vmatpush1.bf16.msra.mxu0 %v3129
        %3148 = vmatprep.subr.bf16.mxu0 0
        %3149 = vmatpush1.bf16.msra.mxu0 %v3130
        %3150 = vmatprep.subr.bf16.mxu0 0
        %3151 = vmatpush1.bf16.msra.mxu0 %v3131
        %3152 = vmatprep.subr.bf16.mxu0 0
        %3153 = vmatpush1.bf16.msra.mxu0 %v3132
        %3154 = vmatprep.subr.bf16.mxu0 0
        %3155 = vmatpush1.bf16.msra.mxu0 %v3133
        %3156 = vmatprep.subr.bf16.mxu0 0
        %3157 = vmatpush1.bf16.msra.mxu0 %v3134
        %3158 = vmatprep.subr.bf16.mxu0 0
        %3159 = vmatpush1.bf16.msra.mxu0 %v3135
        %3160 = vmatprep.subr.bf16.mxu0 0
        %3161 = vmatpush1.bf16.msra.mxu0 0
        %3162 = vmatprep.subr.bf16.mxu0 0
        %3163 = vmatpush1.bf16.msra.mxu0 0
        %3164 = vmatprep.subr.bf16.mxu0 0
        %3165 = vmatpush1.bf16.msra.mxu0 0
        %3166 = vmatprep.subr.bf16.mxu0 0
        %3167 = vmatpush1.bf16.msra.mxu0 0
        %3168 = vmatprep.subr.bf16.mxu0 0
        %3169 = vmatpush1.bf16.msra.mxu0 0
        %3170 = vmatprep.subr.bf16.mxu0 0
        %3171 = vmatpush1.bf16.msra.mxu0 0
        %3172 = vmatprep.subr.bf16.mxu0 0
        %3173 = vmatpush1.bf16.msra.mxu0 0
        %3174 = vmatprep.subr.bf16.mxu0 0
        %3175 = vmatpush1.bf16.msra.mxu0 0
        %3176 = vmatprep.mubr.bf16.mxu0 0
        %3177 = vmatmul.mubr.bf16.gmra.mrb[0].mxu0 %v3072
        %v3178 = vpop.f32.mrb[0].mxu0
        %v3179 = vadd.f32 %v3094, %v3178
        %v3180 = vpop.f32.mrb[0].mxu0
        %v3181 = vpop.f32.mrb[0].mxu0
        %v3182 = vpop.f32.mrb[0].mxu0
        %3183 = vdwg.mxu0
        %3184 = vst [vmem:[%s452] sm:$0xff] %v3179
        %s3185 = sand.u32 %s249, 1
        %s3186 = scalar_lea.sflag [#allocation6], %s3185
        %s3187 = sand.u32 %s249, 1
        %s3188 = smul.addr %s3187, 8
        %s3189 = scalar_lea.vmem [#allocation13], %s3188
        %s3190 = sand.u32 %s277, 1
        %s3191 = scalar_lea.sflag [#allocation15], %s3190
        %s3192 = sand.u32 %s277, 1
        %s3193 = smul.addr %s3192, 8
        %s3194 = scalar_lea.vmem [#allocation14], %s3193
        // Predicated region
        $region81: #{tpu_custom_call.1} parent=55 // pred_check
          %p3195 = pneg %p259
        $region82: #{tpu_custom_call.1} parent=55 // pred_check_branch
          %3197 = sbr.rel (%p3195) target = $region84
        $region83: #{tpu_custom_call.1} parent=55 // pred_region
          %s3199 = ssub.s32 128, 128
          %3200 = vsyncadd %s3186, %s3199
          %s3201 = sadd.s32 %s38, %s37
          %s3202 = smul.addr %s3201, 128
          %s3203 = scalar_lea.hbm %s9, %s3202
          %s3205 = sshll.u32 %s3189, 4
          %s3206 = int_to_ptr.vmem [resolvable:$true] %s3205
          %3208 = dma.vmem_to_hbm [thread:$0]  %s3206, 128, %s3203, %s3186
        $region84: #{tpu_custom_call.1} parent=55 // pred_fallthru
          _
        // Predicated region
        $region85: #{tpu_custom_call.1} parent=55 // pred_check
          %p3209 = pneg %p287
        $region86: #{tpu_custom_call.1} parent=55 // pred_check_branch
          %3211 = sbr.rel (%p3209) target = $region88
        $region87: #{tpu_custom_call.1} parent=55 // pred_region
          %s3213 = ssub.s32 128, 128
          %3214 = vsyncadd %s3191, %s3213
          %s3215 = sadd.s32 %s38, %s37
          %s3216 = smul.addr %s3215, 128
          %s3217 = scalar_lea.hbm %s10, %s3216
          %s3219 = sshll.u32 %s3194, 4
          %s3220 = int_to_ptr.vmem [resolvable:$true] %s3219
          %3222 = dma.vmem_to_hbm [thread:$0]  %s3220, 128, %s3217, %s3191
        $region88: #{tpu_custom_call.1} parent=55 // pred_fallthru
          _
      $region56: #{tpu_custom_call.1} parent=5 // pred_fallthru
        _
      %p3223 = scmp.le.s32.totalorder 2, %s28
      // Predicated region
      $region89: #{tpu_custom_call.1} parent=5 // pred_check
        %p3224 = pneg %p3223
      $region90: #{tpu_custom_call.1} parent=5 // pred_check_branch
        %3226 = sbr.rel (%p3224) target = $region92
      $region91: #{tpu_custom_call.1} parent=5 // pred_region
        %s3227 = ssub.s32 %s28, 2
        // Predicated region
        $region93: #{tpu_custom_call.1} parent=91 // pred_check
          %p3228 = pneg %p265
        $region94: #{tpu_custom_call.1} parent=91 // pred_check_branch
          %3230 = sbr.rel (%p3228) target = $region96
        $region95: #{tpu_custom_call.1} parent=91 // pred_region
          %s3231 = sand.u32 %s250, 1
          %s3232 = scalar_lea.sflag [#allocation6], %s3231
          %s3233 = sand.u32 %s250, 1
          %s3234 = smul.addr %s3233, 8
          %s3235 = scalar_lea.vmem [#allocation13], %s3234
          %3236 = dma.done %s3232, 128
        $region96: #{tpu_custom_call.1} parent=91 // pred_fallthru
          _
        // Predicated region
        $region97: #{tpu_custom_call.1} parent=91 // pred_check
          %p3237 = pneg %p293
        $region98: #{tpu_custom_call.1} parent=91 // pred_check_branch
          %3239 = sbr.rel (%p3237) target = $region100
        $region99: #{tpu_custom_call.1} parent=91 // pred_region
          %s3240 = sand.u32 %s278, 1
          %s3241 = scalar_lea.sflag [#allocation15], %s3240
          %s3242 = sand.u32 %s278, 1
          %s3243 = smul.addr %s3242, 8
          %s3244 = scalar_lea.vmem [#allocation14], %s3243
          %3245 = dma.done %s3241, 128
        $region100: #{tpu_custom_call.1} parent=91 // pred_fallthru
          _
      $region92: #{tpu_custom_call.1} parent=5 // pred_fallthru
        _
    $region6: #{tpu_custom_call.1} parent=1 // loop_footer
      %s32 = sadd.s32 1, %s28
    $region7: #{tpu_custom_call.1} parent=1 // loop_footer_branch
      %27 = sbr.rel target = $region3
    $region8: #{tpu_custom_call.1} parent=1 // loop_exit
      _
    %3246 = vsyncpa [#allocation5], 1
    %s3247 = scalar_lea.sflag [#allocation5], 1
    %3248 = vsyncpa %s3247, 1
    %3249 = vsyncpa [#allocation8], 1
    %3250 = vsyncpa [#allocation11], 1
    %3251 = vsyncpa [#allocation6], 1
    %s3252 = scalar_lea.sflag [#allocation6], 1
    %3253 = vsyncpa %s3252, 1
    %3254 = vsyncpa [#allocation15], 1
    %s3255 = scalar_lea.sflag [#allocation15], 1
    %3256 = vsyncpa %s3255, 1

</llo_original>
